<compile_context>
chip_gen: v7x
topology: tpu7x:2x2x1
jax: 0.10.0
libtpu: 0.0.40
codegen_flags: <defaults>
</compile_context>

<pallas_src>
import functools

import jax
import jax.numpy as jnp
from jax.experimental import pallas as pl
from jax.experimental.pallas import tpu as pltpu


# --------------------------------------------------------------------------------------
# Fused kernel: encoder -> quant_conv -> VQ -> (post_quant_conv ∘ decoder)
# --------------------------------------------------------------------------------------
def _vqgan_fused_kernel(
    x_ref,        # (T, C_in)  input rows (channels-last)
    wenc_ref,     # (C_in, D)  encoder weight
    benc_ref,     # (1, D)     encoder bias
    wqc_ref,      # (D, D)     quant_conv weight (1x1 Conv1d)
    bqc_ref,      # (1, D)     quant_conv bias
    embt_ref,     # (D, K)     codebook, transposed
    embsq_ref,    # (1, K)     per-code squared norms
    embdec_ref,   # (K, C_in)  codebook pre-projected through post_quant_conv∘decoder
    bfold_ref,    # (1, C_in)  folded bias (b_pq @ w_dec + b_dec)
    dec_ref,      # (T, C_in)  decoded output
    idx_ref,      # (T, 1)     codebook indices (int32)
    err_ref,      # (T, 1)     per-row ||z_q - z||^2
):
    # ---- encoder (per-position linear + ReLU) + quant_conv (1x1 Conv1d) -------------
    x = x_ref[...].astype(jnp.float32)
    h = jnp.dot(x, wenc_ref[...], preferred_element_type=jnp.float32) + benc_ref[...]
    h = jnp.maximum(h, 0.0)
    z = jnp.dot(h, wqc_ref[...], preferred_element_type=jnp.float32) + bqc_ref[...]   # (T, D)

    # ---- vector quantisation: L2 nearest codebook entry ------------------------------
    z_sq = jnp.sum(z * z, axis=-1, keepdims=True)                                      # (T, 1)
    # d_ij = ||z_i||^2 + ||e_j||^2 - 2 z_i . e_j
    d = z_sq + embsq_ref[...] - 2.0 * jnp.dot(
        z, embt_ref[...], preferred_element_type=jnp.float32)                          # (T, K)

    K = d.shape[-1]
    min_d = jnp.min(d, axis=-1, keepdims=True)                                         # (T, 1)
    iota = jax.lax.broadcasted_iota(jnp.int32, d.shape, 1)                             # (T, K)
    # first-occurrence argmin (torch.argmin semantics)
    idx = jnp.min(jnp.where(d <= min_d, iota, K), axis=-1, keepdims=True)              # (T, 1)
    onehot = (iota == idx).astype(jnp.float32)                                         # (T, K)

    # ---- decode: one-hot gather through the folded (post_quant_conv ∘ decoder) -------
    dec = jnp.dot(onehot, embdec_ref[...], preferred_element_type=jnp.float32) + bfold_ref[...]

    dec_ref[...] = dec
    idx_ref[...] = idx
    # min_d already equals ||z - e_idx||^2; clamp against fp cancellation.
    err_ref[...] = jnp.maximum(min_d, 0.0)


# --------------------------------------------------------------------------------------
# Wrapper
# --------------------------------------------------------------------------------------
@functools.partial(jax.jit, static_argnames=("tile_rows", "beta"))
def vqgan_forward(imgs, params, *, tile_rows=512, beta=0.25):
    """imgs: (B, C_in, L) float32 — same NCL layout torch.nn.Conv1d expects."""
    B, C_in, L = imgs.shape
    N = B * L
    D = params["w_qc"].shape[0]
    K = params["emb"].shape[0]

    # channels-last rows for the kernel (positions on sublanes, channels on lanes)
    x = jnp.transpose(imgs, (0, 2, 1)).reshape(N, C_in)

    # pad the row dimension to a multiple of tile_rows (padded rows are sliced off below)
    num_tiles = -(-N // tile_rows)
    n_pad = num_tiles * tile_rows
    if n_pad != N:
        x = jnp.pad(x, ((0, n_pad - N), (0, 0)))

    # ---- one-time algebraic folding (outside the grid loop) --------------------------
    # post_quant_conv and the (linear) decoder have no nonlinearity between them:
    #   decoder(post_quant(zq)) = zq @ (w_pq @ w_dec) + (b_pq @ w_dec + b_dec)
    # and zq = onehot @ emb, so the decode path collapses to onehot @ (emb @ w_fold).
    w_fold = params["w_pq"] @ params["w_dec"]                         # (D, C_in)
    b_fold = params["b_pq"] @ params["w_dec"] + params["b_dec"]       # (1, C_in)
    emb = params["emb"]                                               # (K, D)
    emb_t = emb.T                                                     # (D, K)
    emb_sq = jnp.sum(emb * emb, axis=-1, keepdims=True).T             # (1, K)
    emb_dec = emb @ w_fold                                            # (K, C_in)

    grid = (num_tiles,)
    const = lambda i: (0, 0)

    dec, idx, err = pl.pallas_call(
        _vqgan_fused_kernel,
        out_shape=(
            jax.ShapeDtypeStruct((n_pad, C_in), jnp.float32),
            jax.ShapeDtypeStruct((n_pad, 1), jnp.int32),
            jax.ShapeDtypeStruct((n_pad, 1), jnp.float32),
        ),
        grid=grid,
        in_specs=[
            pl.BlockSpec((tile_rows, C_in), lambda i: (i, 0)),
            pl.BlockSpec((C_in, D), const),
            pl.BlockSpec((1, D), const),
            pl.BlockSpec((D, D), const),
            pl.BlockSpec((1, D), const),
            pl.BlockSpec((D, K), const),
            pl.BlockSpec((1, K), const),
            pl.BlockSpec((K, C_in), const),
            pl.BlockSpec((1, C_in), const),
        ],
        out_specs=(
            pl.BlockSpec((tile_rows, C_in), lambda i: (i, 0)),
            pl.BlockSpec((tile_rows, 1), lambda i: (i, 0)),
            pl.BlockSpec((tile_rows, 1), lambda i: (i, 0)),
        ),
        compiler_params=pltpu.CompilerParams(dimension_semantics=("parallel",)),
    )(x, params["w_enc"], params["b_enc"], params["w_qc"], params["b_qc"],
      emb_t, emb_sq, emb_dec, b_fold)

    # drop padded rows
    dec = dec[:N]
    codebook_indices = idx[:N, 0]
    err = err[:N, 0]

    # codebook loss: mean((zq.detach()-z)^2) + beta*mean((zq-z.detach())^2)
    # forward value == (1+beta) * mean((zq - z)^2)
    # TODO(synk): straight-through gradient (z + stop_gradient(zq - z)) if used for training.
    q_loss = (1.0 + beta) * jnp.sum(err) / (N * D)

    decoded_images = dec.reshape(B, L, C_in).transpose(0, 2, 1)   # back to NCL
    return decoded_images, codebook_indices, q_loss


# --------------------------------------------------------------------------------------
# Deterministic parameter construction (synthetic init — no checkpoint loading)
# --------------------------------------------------------------------------------------
def make_params(key, *, c_in, latent_dim, num_codebook_vectors):
    ks = jax.random.split(key, 6)
    D, K = latent_dim, num_codebook_vectors
    # Conv1d(k=1) weight (out, in, 1) is equivalent to an (in, out) matmul weight.
    return {
        "w_enc": 0.05 * jax.random.normal(ks[0], (c_in, D), jnp.float32),
        "b_enc": jnp.zeros((1, D), jnp.float32),
        "w_qc": 0.05 * jax.random.normal(ks[1], (D, D), jnp.float32),
        "b_qc": 0.01 * jax.random.normal(ks[2], (1, D), jnp.float32),
        "emb": jax.random.uniform(ks[3], (K, D), jnp.float32, -1.0 / K, 1.0 / K),
        "w_pq": 0.05 * jax.random.normal(ks[4], (D, D), jnp.float32),
        "b_pq": jnp.zeros((1, D), jnp.float32),
        "w_dec": 0.05 * jax.random.normal(ks[5], (D, c_in), jnp.float32),
        "b_dec": jnp.zeros((1, c_in), jnp.float32),
    }


# --------------------------------------------------------------------------------------
# Pure-JAX reference (for a loose sanity check)
# --------------------------------------------------------------------------------------
def _reference_forward(imgs, params, *, beta=0.25):
    B, C_in, L = imgs.shape
    x = jnp.transpose(imgs, (0, 2, 1)).reshape(B * L, C_in)
    h = jnp.maximum(x @ params["w_enc"] + params["b_enc"], 0.0)
    z = h @ params["w_qc"] + params["b_qc"]
    e = params["emb"]
    d = (jnp.sum(z * z, -1, keepdims=True) + jnp.sum(e * e, -1)[None, :]
         - 2.0 * z @ e.T)
    idx = jnp.argmin(d, axis=-1)
    zq = e[idx]
    q_loss = (1.0 + beta) * jnp.mean((zq - z) ** 2)
    dec = (zq @ params["w_pq"] + params["b_pq"]) @ params["w_dec"] + params["b_dec"]
    return dec.reshape(B, L, C_in).transpose(0, 2, 1), idx, q_loss


if __name__ == "__main__":
    B, C_in, L = 2, 4, 320         # small NCL shapes consistent with the Conv1d forward
    D, K = 32, 256                 # latent_dim, num_codebook_vectors
    key = jax.random.PRNGKey(0)
    k_img, k_par = jax.random.split(key)

    imgs = jax.random.normal(k_img, (B, C_in, L), jnp.float32)
    params = make_params(k_par, c_in=C_in, latent_dim=D, num_codebook_vectors=K)

    decoded, indices, q_loss = vqgan_forward(imgs, params, tile_rows=512, beta=0.25)
    jax.block_until_ready((decoded, indices, q_loss))

    assert decoded.shape == (B, C_in, L)
    assert indices.shape == (B * L,)
    assert q_loss.shape == ()
    assert bool(jnp.all(jnp.isfinite(decoded)))

    # loose sanity check against a plain-JAX reference (tolerant to MXU accumulation order)
    ref_dec, _, ref_loss = _reference_forward(imgs, params, beta=0.25)
    assert bool(jnp.allclose(decoded, ref_dec, rtol=1e-2, atol=2e-3))
    assert bool(jnp.allclose(q_loss, ref_loss, rtol=1e-2, atol=1e-4))

    print("KERNEL_OK")
</pallas_src>

<mosaic_0001>
module attributes {stable_mosaic.version = 11 : i64} {
  func.func @_vqgan_fused_kernel(%arg0: i32, %arg1: memref<512x4xf32, #tpu.memory_space<vmem>>, %arg2: memref<4x32xf32, #tpu.memory_space<vmem>>, %arg3: memref<1x32xf32, #tpu.memory_space<vmem>>, %arg4: memref<32x32xf32, #tpu.memory_space<vmem>>, %arg5: memref<1x32xf32, #tpu.memory_space<vmem>>, %arg6: memref<32x256xf32, #tpu.memory_space<vmem>>, %arg7: memref<1x256xf32, #tpu.memory_space<vmem>>, %arg8: memref<256x4xf32, #tpu.memory_space<vmem>>, %arg9: memref<1x4xf32, #tpu.memory_space<vmem>>, %arg10: memref<512x4xf32, #tpu.memory_space<vmem>>, %arg11: memref<512x1xi32, #tpu.memory_space<vmem>>, %arg12: memref<512x1xf32, #tpu.memory_space<vmem>>) attributes {dimension_semantics = [#tpu.dimension_semantics<parallel>], iteration_bounds = array<i64: 2>, scalar_prefetch = 0 : i64, scratch_operands = 0 : i64, tpu.core_type = #tpu.core_type<tc>, window_params = [{transform_indices = @transform_0, window_bounds = array<i64: 512, 4>}, {pipeline_mode = #tpu.pipeline_mode<synchronous>, transform_indices = @transform_1, window_bounds = array<i64: 4, 32>}, {pipeline_mode = #tpu.pipeline_mode<synchronous>, transform_indices = @transform_2, window_bounds = array<i64: 1, 32>}, {pipeline_mode = #tpu.pipeline_mode<synchronous>, transform_indices = @transform_3, window_bounds = array<i64: 32, 32>}, {pipeline_mode = #tpu.pipeline_mode<synchronous>, transform_indices = @transform_4, window_bounds = array<i64: 1, 32>}, {pipeline_mode = #tpu.pipeline_mode<synchronous>, transform_indices = @transform_5, window_bounds = array<i64: 32, 256>}, {pipeline_mode = #tpu.pipeline_mode<synchronous>, transform_indices = @transform_6, window_bounds = array<i64: 1, 256>}, {pipeline_mode = #tpu.pipeline_mode<synchronous>, transform_indices = @transform_7, window_bounds = array<i64: 256, 4>}, {pipeline_mode = #tpu.pipeline_mode<synchronous>, transform_indices = @transform_8, window_bounds = array<i64: 1, 4>}, {transform_indices = @transform_9, window_bounds = array<i64: 512, 4>}, {transform_indices = @transform_10, window_bounds = array<i64: 512, 1>}, {transform_indices = @transform_11, window_bounds = array<i64: 512, 1>}]} {
    %c0 = arith.constant 0 : index
    %c0_0 = arith.constant 0 : index
    %0 = vector.load %arg1[%c0, %c0_0] : memref<512x4xf32, #tpu.memory_space<vmem>>, vector<512x4xf32>
    %c0_1 = arith.constant 0 : index
    %c0_2 = arith.constant 0 : index
    %1 = vector.load %arg2[%c0_1, %c0_2] : memref<4x32xf32, #tpu.memory_space<vmem>>, vector<4x32xf32>
    %cst = arith.constant dense<0.000000e+00> : vector<512x32xf32>
    %2 = tpu.matmul %0, %1, %cst {dimension_numbers = #tpu.dot_dimension_numbers<[1], [0], [0], [1], [0, 0, 1, 1], [], []>} : vector<512x4xf32>, vector<4x32xf32>, vector<512x32xf32> -> vector<512x32xf32>
    %c0_3 = arith.constant 0 : index
    %c0_4 = arith.constant 0 : index
    %3 = vector.load %arg3[%c0_3, %c0_4] : memref<1x32xf32, #tpu.memory_space<vmem>>, vector<1x32xf32>
    %4 = vector.broadcast %3 : vector<1x32xf32> to vector<512x32xf32>
    %5 = arith.addf %2, %4 : vector<512x32xf32>
    %cst_5 = arith.constant 0.000000e+00 : f32
    %6 = vector.broadcast %cst_5 : f32 to vector<512x32xf32>
    %7 = arith.maximumf %5, %6 : vector<512x32xf32>
    %c0_6 = arith.constant 0 : index
    %c0_7 = arith.constant 0 : index
    %8 = vector.load %arg4[%c0_6, %c0_7] : memref<32x32xf32, #tpu.memory_space<vmem>>, vector<32x32xf32>
    %cst_8 = arith.constant dense<0.000000e+00> : vector<512x32xf32>
    %9 = tpu.matmul %7, %8, %cst_8 {dimension_numbers = #tpu.dot_dimension_numbers<[1], [0], [0], [1], [0, 0, 1, 1], [], []>} : vector<512x32xf32>, vector<32x32xf32>, vector<512x32xf32> -> vector<512x32xf32>
    %c0_9 = arith.constant 0 : index
    %c0_10 = arith.constant 0 : index
    %10 = vector.load %arg5[%c0_9, %c0_10] : memref<1x32xf32, #tpu.memory_space<vmem>>, vector<1x32xf32>
    %11 = vector.broadcast %10 : vector<1x32xf32> to vector<512x32xf32>
    %12 = arith.addf %9, %11 : vector<512x32xf32>
    %13 = arith.mulf %12, %12 : vector<512x32xf32>
    %cst_11 = arith.constant dense<0.000000e+00> : vector<512xf32>
    %14 = vector.multi_reduction <add>, %13, %cst_11 [1] : vector<512x32xf32> to vector<512xf32>
    %15 = vector.shape_cast %14 : vector<512xf32> to vector<512x1xf32>
    %c0_12 = arith.constant 0 : index
    %c0_13 = arith.constant 0 : index
    %16 = vector.load %arg7[%c0_12, %c0_13] : memref<1x256xf32, #tpu.memory_space<vmem>>, vector<1x256xf32>
    %17 = vector.broadcast %15 : vector<512x1xf32> to vector<512x256xf32>
    %18 = vector.broadcast %16 : vector<1x256xf32> to vector<512x256xf32>
    %19 = arith.addf %17, %18 : vector<512x256xf32>
    %c0_14 = arith.constant 0 : index
    %c0_15 = arith.constant 0 : index
    %20 = vector.load %arg6[%c0_14, %c0_15] : memref<32x256xf32, #tpu.memory_space<vmem>>, vector<32x256xf32>
    %cst_16 = arith.constant dense<0.000000e+00> : vector<512x256xf32>
    %21 = tpu.matmul %12, %20, %cst_16 {dimension_numbers = #tpu.dot_dimension_numbers<[1], [0], [0], [1], [0, 0, 1, 1], [], []>} : vector<512x32xf32>, vector<32x256xf32>, vector<512x256xf32> -> vector<512x256xf32>
    %cst_17 = arith.constant 2.000000e+00 : f32
    %22 = vector.broadcast %cst_17 : f32 to vector<512x256xf32>
    %23 = arith.mulf %22, %21 : vector<512x256xf32>
    %24 = arith.subf %19, %23 : vector<512x256xf32>
    %cst_18 = arith.constant dense<0x7F800000> : vector<512xf32>
    %25 = vector.multi_reduction <minimumf>, %24, %cst_18 [1] : vector<512x256xf32> to vector<512xf32>
    %26 = vector.shape_cast %25 : vector<512xf32> to vector<512x1xf32>
    %27 = tpu.iota {dimensions = array<i32: 1>} : vector<512x256xi32>
    %28 = vector.broadcast %26 : vector<512x1xf32> to vector<512x256xf32>
    %29 = arith.cmpf ole, %24, %28 : vector<512x256xf32>
    %c256_i32 = arith.constant 256 : i32
    %30 = vector.broadcast %c256_i32 : i32 to vector<512x256xi32>
    %31 = arith.select %29, %27, %30 : vector<512x256xi1>, vector<512x256xi32>
    %cst_19 = arith.constant dense<2147483647> : vector<512xi32>
    %32 = vector.multi_reduction <minsi>, %31, %cst_19 [1] : vector<512x256xi32> to vector<512xi32>
    %33 = vector.shape_cast %32 : vector<512xi32> to vector<512x1xi32>
    %34 = vector.broadcast %33 : vector<512x1xi32> to vector<512x256xi32>
    %35 = arith.cmpi eq, %27, %34 : vector<512x256xi32>
    %36 = arith.extui %35 : vector<512x256xi1> to vector<512x256xi32>
    %37 = arith.sitofp %36 : vector<512x256xi32> to vector<512x256xf32>
    %c0_20 = arith.constant 0 : index
    %c0_21 = arith.constant 0 : index
    %38 = vector.load %arg8[%c0_20, %c0_21] : memref<256x4xf32, #tpu.memory_space<vmem>>, vector<256x4xf32>
    %cst_22 = arith.constant dense<0.000000e+00> : vector<512x4xf32>
    %39 = tpu.matmul %37, %38, %cst_22 {dimension_numbers = #tpu.dot_dimension_numbers<[1], [0], [0], [1], [0, 0, 1, 1], [], []>} : vector<512x256xf32>, vector<256x4xf32>, vector<512x4xf32> -> vector<512x4xf32>
    %c0_23 = arith.constant 0 : index
    %c0_24 = arith.constant 0 : index
    %40 = vector.load %arg9[%c0_23, %c0_24] : memref<1x4xf32, #tpu.memory_space<vmem>>, vector<1x4xf32>
    %41 = vector.broadcast %40 : vector<1x4xf32> to vector<512x4xf32>
    %42 = arith.addf %39, %41 : vector<512x4xf32>
    %c0_25 = arith.constant 0 : index
    %c0_26 = arith.constant 0 : index
    %43 = vector.load %arg10[%c0_25, %c0_26] : memref<512x4xf32, #tpu.memory_space<vmem>>, vector<512x4xf32>
    tpu.vector_store %arg10[%c0_25, %c0_26], %42 {strides = array<i32>} : memref<512x4xf32, #tpu.memory_space<vmem>>, vector<512x4xf32>,
    %c0_27 = arith.constant 0 : index
    %c0_28 = arith.constant 0 : index
    %44 = vector.load %arg11[%c0_27, %c0_28] : memref<512x1xi32, #tpu.memory_space<vmem>>, vector<512x1xi32>
    tpu.vector_store %arg11[%c0_27, %c0_28], %33 {strides = array<i32>} : memref<512x1xi32, #tpu.memory_space<vmem>>, vector<512x1xi32>,
    %cst_29 = arith.constant 0.000000e+00 : f32
    %45 = vector.broadcast %cst_29 : f32 to vector<512x1xf32>
    %46 = arith.maximumf %26, %45 : vector<512x1xf32>
    %c0_30 = arith.constant 0 : index
    %c0_31 = arith.constant 0 : index
    %47 = vector.load %arg12[%c0_30, %c0_31] : memref<512x1xf32, #tpu.memory_space<vmem>>, vector<512x1xf32>
    tpu.vector_store %arg12[%c0_30, %c0_31], %46 {strides = array<i32>} : memref<512x1xf32, #tpu.memory_space<vmem>>, vector<512x1xf32>,
    return
  }
  func.func @transform_0(%arg0: i32) -> (i32, i32) {
    %c0_i32 = arith.constant 0 : i32
    %c0_i32_0 = arith.constant 0 : i32
    return %arg0, %c0_i32 : i32, i32
  }
  func.func @transform_1(%arg0: i32) -> (i32, i32) {
    %c0_i32 = arith.constant 0 : i32
    %c0_i32_0 = arith.constant 0 : i32
    %c0_i32_1 = arith.constant 0 : i32
    return %c0_i32, %c0_i32_0 : i32, i32
  }
  func.func @transform_2(%arg0: i32) -> (i32, i32) {
    %c0_i32 = arith.constant 0 : i32
    %c0_i32_0 = arith.constant 0 : i32
    %c0_i32_1 = arith.constant 0 : i32
    return %c0_i32, %c0_i32_0 : i32, i32
  }
  func.func @transform_3(%arg0: i32) -> (i32, i32) {
    %c0_i32 = arith.constant 0 : i32
    %c0_i32_0 = arith.constant 0 : i32
    %c0_i32_1 = arith.constant 0 : i32
    return %c0_i32, %c0_i32_0 : i32, i32
  }
  func.func @transform_4(%arg0: i32) -> (i32, i32) {
    %c0_i32 = arith.constant 0 : i32
    %c0_i32_0 = arith.constant 0 : i32
    %c0_i32_1 = arith.constant 0 : i32
    return %c0_i32, %c0_i32_0 : i32, i32
  }
  func.func @transform_5(%arg0: i32) -> (i32, i32) {
    %c0_i32 = arith.constant 0 : i32
    %c0_i32_0 = arith.constant 0 : i32
    %c0_i32_1 = arith.constant 0 : i32
    return %c0_i32, %c0_i32_0 : i32, i32
  }
  func.func @transform_6(%arg0: i32) -> (i32, i32) {
    %c0_i32 = arith.constant 0 : i32
    %c0_i32_0 = arith.constant 0 : i32
    %c0_i32_1 = arith.constant 0 : i32
    return %c0_i32, %c0_i32_0 : i32, i32
  }
  func.func @transform_7(%arg0: i32) -> (i32, i32) {
    %c0_i32 = arith.constant 0 : i32
    %c0_i32_0 = arith.constant 0 : i32
    %c0_i32_1 = arith.constant 0 : i32
    return %c0_i32, %c0_i32_0 : i32, i32
  }
  func.func @transform_8(%arg0: i32) -> (i32, i32) {
    %c0_i32 = arith.constant 0 : i32
    %c0_i32_0 = arith.constant 0 : i32
    %c0_i32_1 = arith.constant 0 : i32
    return %c0_i32, %c0_i32_0 : i32, i32
  }
  func.func @transform_9(%arg0: i32) -> (i32, i32) {
    %c0_i32 = arith.constant 0 : i32
    %c0_i32_0 = arith.constant 0 : i32
    return %arg0, %c0_i32 : i32, i32
  }
  func.func @transform_10(%arg0: i32) -> (i32, i32) {
    %c0_i32 = arith.constant 0 : i32
    %c0_i32_0 = arith.constant 0 : i32
    return %arg0, %c0_i32 : i32, i32
  }
  func.func @transform_11(%arg0: i32) -> (i32, i32) {
    %c0_i32 = arith.constant 0 : i32
    %c0_i32_0 = arith.constant 0 : i32
    return %arg0, %c0_i32 : i32, i32
  }
}

</mosaic_0001>

<llo_original>
// kernel: vqgan_forward.1
$region0: #{vqgan_forward.1}
  #allocation0 [shape = 'u32[]', space=smem, size = 0x4, offset = 0x4, fixed_abs, tag = 'smem constant byte address 0x4 - core index']
  #allocation1 [shape = 'u32[144,128]{1,0:T(1,128)}', space=vmem, size = 0x12000, scoped, tag = 'internal scratch']
  %s0 = inlined_call_operand.vmem [shape: f32[1024,4], index: 0, kind: input, shape index: {}]
  %s1 = inlined_call_operand.vmem [shape: f32[4,32], index: 1, kind: input, shape index: {}]
  %s2 = inlined_call_operand.vmem [shape: f32[1,32], index: 2, kind: input, shape index: {}]
  %s3 = inlined_call_operand.vmem [shape: f32[32,32], index: 3, kind: input, shape index: {}]
  %s4 = inlined_call_operand.vmem [shape: f32[1,32], index: 4, kind: input, shape index: {}]
  %s5 = inlined_call_operand.vmem [shape: f32[32,256], index: 5, kind: input, shape index: {}]
  %s6 = inlined_call_operand.vmem [shape: f32[1,256], index: 6, kind: input, shape index: {}]
  %s7 = inlined_call_operand.vmem [shape: f32[256,4], index: 7, kind: input, shape index: {}]
  %s8 = inlined_call_operand.vmem [shape: f32[1,4], index: 8, kind: input, shape index: {}]
  %s9 = inlined_call_operand.vmem [shape: f32[1024,4], index: 9, kind: output, shape index: {0}]
  %s10 = inlined_call_operand.vmem [shape: s32[1024,1], index: 10, kind: output, shape index: {1}]
  %s11 = inlined_call_operand.vmem [shape: f32[1024,1], index: 11, kind: output, shape index: {2}]
  %12 = xla_tuple %s9, %s10, %s11
  %s13 = sld [smem:[#allocation0]]
  $region85: #{vqgan_forward.1} parent=0
    _
  %s15 = ssub.s32 1, %s13
  %s16 = scalar_select 0, %s15, %s13
  loop: start=0, step=1, limit=4
  $region2: #{vqgan_forward.1} parent=0 // loop_pre_header
    _
  $region3: #{vqgan_forward.1} parent=0 // loop_header
    %s18 = sphi 0, %s22
    %p19 = scmp.ge.s32.totalorder %s18, 4
    %s28 = sphi 0, %s30
    %s31 = sphi 0, %s28
    %s32 = sphi 0, %s31
    %s48 = sphi 0, %s32
    %s52 = sphi 0, %s52
    %s54 = sphi 0, %s52
    %s55 = sphi 0, %s54
    %s69 = sphi 0, %s55
    %s73 = sphi 0, %s73
    %s75 = sphi 0, %s73
    %s76 = sphi 0, %s75
    %s90 = sphi 0, %s76
    %s94 = sphi 0, %s94
    %s96 = sphi 0, %s94
    %s97 = sphi 0, %s96
    %s111 = sphi 0, %s97
    %s115 = sphi 0, %s115
    %s117 = sphi 0, %s115
    %s118 = sphi 0, %s117
    %s132 = sphi 0, %s118
    %s136 = sphi 0, %s136
    %s138 = sphi 0, %s136
    %s139 = sphi 0, %s138
    %s153 = sphi 0, %s139
    %s157 = sphi 0, %s157
    %s159 = sphi 0, %s157
    %s160 = sphi 0, %s159
    %s174 = sphi 0, %s160
    %s178 = sphi 0, %s178
    %s180 = sphi 0, %s178
    %s181 = sphi 0, %s180
    %s195 = sphi 0, %s181
    %s199 = sphi 0, %s199
    %s201 = sphi 0, %s199
    %s202 = sphi 0, %s201
    %s216 = sphi 0, %s202
    %s222 = sphi 0, %s224
    %s225 = sphi 0, %s222
    %s226 = sphi 0, %s225
    %s242 = sphi 0, %s226
    %s248 = sphi 0, %s250
    %s251 = sphi 0, %s248
    %s252 = sphi 0, %s251
    %s268 = sphi 0, %s252
    %s274 = sphi 0, %s276
    %s277 = sphi 0, %s274
    %s278 = sphi 0, %s277
    %s294 = sphi 0, %s278
  $region4: #{vqgan_forward.1} parent=0 // loop_header_branch
    %21 = sbr.rel (%p19) target = $region8
  $region5: #{vqgan_forward.1} parent=0 // loop_body
    %s23 = ssub.s32 %s18, 1
    %s24 = ssub.s32 %s18, 2
    %s25 = sadd.s32 %s18, 1
    %s26 = ssub.s32 %s18, %s25
    %p27 = scmp.eq.s32.totalorder %s26, 0
    %s29 = sadd.s32 %s28, 1
    %s30 = scalar_select %p27, %s28, %s29
    %p33 = pneg %p27
    %p34 = scmp.eq.s32.totalorder %s18, 1
    %p35 = por %p33, %p34
    %p36 = scmp.ne.s32.totalorder %s28, %s31
    %p37 = scmp.eq.s32.totalorder %s18, 0
    %p38 = por %p36, %p37
    %p39 = scmp.ne.s32.totalorder %s28, %s31
    %p40 = scmp.eq.s32.totalorder %s23, 1
    %p41 = por %p39, %p40
    %p42 = scmp.ne.s32.totalorder %s31, %s32
    %p43 = scmp.eq.s32.totalorder %s23, 0
    %p44 = por %p42, %p43
    %p45 = scmp.ne.s32.totalorder %s31, %s32
    %p46 = scmp.eq.s32.totalorder %s24, 1
    %p47 = por %p45, %p46
    %p49 = scmp.ne.s32.totalorder %s32, %s48
    %p50 = scmp.eq.s32.totalorder %s24, 0
    %p51 = por %p49, %p50
    %s53 = sadd.s32 %s52, 1
    %p56 = scmp.eq.s32.totalorder %s18, 1
    %p57 = scmp.ne.s32.totalorder %s52, %s54
    %p58 = scmp.eq.s32.totalorder %s18, 0
    %p59 = por %p57, %p58
    %p60 = scmp.ne.s32.totalorder %s52, %s54
    %p61 = scmp.eq.s32.totalorder %s23, 1
    %p62 = por %p60, %p61
    %p63 = scmp.ne.s32.totalorder %s54, %s55
    %p64 = scmp.eq.s32.totalorder %s23, 0
    %p65 = por %p63, %p64
    %p66 = scmp.ne.s32.totalorder %s54, %s55
    %p67 = scmp.eq.s32.totalorder %s24, 1
    %p68 = por %p66, %p67
    %p70 = scmp.ne.s32.totalorder %s55, %s69
    %p71 = scmp.eq.s32.totalorder %s24, 0
    %p72 = por %p70, %p71
    %s74 = sadd.s32 %s73, 1
    %p77 = scmp.eq.s32.totalorder %s18, 1
    %p78 = scmp.ne.s32.totalorder %s73, %s75
    %p79 = scmp.eq.s32.totalorder %s18, 0
    %p80 = por %p78, %p79
    %p81 = scmp.ne.s32.totalorder %s73, %s75
    %p82 = scmp.eq.s32.totalorder %s23, 1
    %p83 = por %p81, %p82
    %p84 = scmp.ne.s32.totalorder %s75, %s76
    %p85 = scmp.eq.s32.totalorder %s23, 0
    %p86 = por %p84, %p85
    %p87 = scmp.ne.s32.totalorder %s75, %s76
    %p88 = scmp.eq.s32.totalorder %s24, 1
    %p89 = por %p87, %p88
    %p91 = scmp.ne.s32.totalorder %s76, %s90
    %p92 = scmp.eq.s32.totalorder %s24, 0
    %p93 = por %p91, %p92
    %s95 = sadd.s32 %s94, 1
    %p98 = scmp.eq.s32.totalorder %s18, 1
    %p99 = scmp.ne.s32.totalorder %s94, %s96
    %p100 = scmp.eq.s32.totalorder %s18, 0
    %p101 = por %p99, %p100
    %p102 = scmp.ne.s32.totalorder %s94, %s96
    %p103 = scmp.eq.s32.totalorder %s23, 1
    %p104 = por %p102, %p103
    %p105 = scmp.ne.s32.totalorder %s96, %s97
    %p106 = scmp.eq.s32.totalorder %s23, 0
    %p107 = por %p105, %p106
    %p108 = scmp.ne.s32.totalorder %s96, %s97
    %p109 = scmp.eq.s32.totalorder %s24, 1
    %p110 = por %p108, %p109
    %p112 = scmp.ne.s32.totalorder %s97, %s111
    %p113 = scmp.eq.s32.totalorder %s24, 0
    %p114 = por %p112, %p113
    %s116 = sadd.s32 %s115, 1
    %p119 = scmp.eq.s32.totalorder %s18, 1
    %p120 = scmp.ne.s32.totalorder %s115, %s117
    %p121 = scmp.eq.s32.totalorder %s18, 0
    %p122 = por %p120, %p121
    %p123 = scmp.ne.s32.totalorder %s115, %s117
    %p124 = scmp.eq.s32.totalorder %s23, 1
    %p125 = por %p123, %p124
    %p126 = scmp.ne.s32.totalorder %s117, %s118
    %p127 = scmp.eq.s32.totalorder %s23, 0
    %p128 = por %p126, %p127
    %p129 = scmp.ne.s32.totalorder %s117, %s118
    %p130 = scmp.eq.s32.totalorder %s24, 1
    %p131 = por %p129, %p130
    %p133 = scmp.ne.s32.totalorder %s118, %s132
    %p134 = scmp.eq.s32.totalorder %s24, 0
    %p135 = por %p133, %p134
    %s137 = sadd.s32 %s136, 1
    %p140 = scmp.eq.s32.totalorder %s18, 1
    %p141 = scmp.ne.s32.totalorder %s136, %s138
    %p142 = scmp.eq.s32.totalorder %s18, 0
    %p143 = por %p141, %p142
    %p144 = scmp.ne.s32.totalorder %s136, %s138
    %p145 = scmp.eq.s32.totalorder %s23, 1
    %p146 = por %p144, %p145
    %p147 = scmp.ne.s32.totalorder %s138, %s139
    %p148 = scmp.eq.s32.totalorder %s23, 0
    %p149 = por %p147, %p148
    %p150 = scmp.ne.s32.totalorder %s138, %s139
    %p151 = scmp.eq.s32.totalorder %s24, 1
    %p152 = por %p150, %p151
    %p154 = scmp.ne.s32.totalorder %s139, %s153
    %p155 = scmp.eq.s32.totalorder %s24, 0
    %p156 = por %p154, %p155
    %s158 = sadd.s32 %s157, 1
    %p161 = scmp.eq.s32.totalorder %s18, 1
    %p162 = scmp.ne.s32.totalorder %s157, %s159
    %p163 = scmp.eq.s32.totalorder %s18, 0
    %p164 = por %p162, %p163
    %p165 = scmp.ne.s32.totalorder %s157, %s159
    %p166 = scmp.eq.s32.totalorder %s23, 1
    %p167 = por %p165, %p166
    %p168 = scmp.ne.s32.totalorder %s159, %s160
    %p169 = scmp.eq.s32.totalorder %s23, 0
    %p170 = por %p168, %p169
    %p171 = scmp.ne.s32.totalorder %s159, %s160
    %p172 = scmp.eq.s32.totalorder %s24, 1
    %p173 = por %p171, %p172
    %p175 = scmp.ne.s32.totalorder %s160, %s174
    %p176 = scmp.eq.s32.totalorder %s24, 0
    %p177 = por %p175, %p176
    %s179 = sadd.s32 %s178, 1
    %p182 = scmp.eq.s32.totalorder %s18, 1
    %p183 = scmp.ne.s32.totalorder %s178, %s180
    %p184 = scmp.eq.s32.totalorder %s18, 0
    %p185 = por %p183, %p184
    %p186 = scmp.ne.s32.totalorder %s178, %s180
    %p187 = scmp.eq.s32.totalorder %s23, 1
    %p188 = por %p186, %p187
    %p189 = scmp.ne.s32.totalorder %s180, %s181
    %p190 = scmp.eq.s32.totalorder %s23, 0
    %p191 = por %p189, %p190
    %p192 = scmp.ne.s32.totalorder %s180, %s181
    %p193 = scmp.eq.s32.totalorder %s24, 1
    %p194 = por %p192, %p193
    %p196 = scmp.ne.s32.totalorder %s181, %s195
    %p197 = scmp.eq.s32.totalorder %s24, 0
    %p198 = por %p196, %p197
    %s200 = sadd.s32 %s199, 1
    %p203 = scmp.eq.s32.totalorder %s18, 1
    %p204 = scmp.ne.s32.totalorder %s199, %s201
    %p205 = scmp.eq.s32.totalorder %s18, 0
    %p206 = por %p204, %p205
    %p207 = scmp.ne.s32.totalorder %s199, %s201
    %p208 = scmp.eq.s32.totalorder %s23, 1
    %p209 = por %p207, %p208
    %p210 = scmp.ne.s32.totalorder %s201, %s202
    %p211 = scmp.eq.s32.totalorder %s23, 0
    %p212 = por %p210, %p211
    %p213 = scmp.ne.s32.totalorder %s201, %s202
    %p214 = scmp.eq.s32.totalorder %s24, 1
    %p215 = por %p213, %p214
    %p217 = scmp.ne.s32.totalorder %s202, %s216
    %p218 = scmp.eq.s32.totalorder %s24, 0
    %p219 = por %p217, %p218
    %s220 = ssub.s32 %s18, %s25
    %p221 = scmp.eq.s32.totalorder %s220, 0
    %s223 = sadd.s32 %s222, 1
    %s224 = scalar_select %p221, %s222, %s223
    %p227 = pneg %p221
    %p228 = scmp.eq.s32.totalorder %s18, 1
    %p229 = por %p227, %p228
    %p230 = scmp.ne.s32.totalorder %s222, %s225
    %p231 = scmp.eq.s32.totalorder %s18, 0
    %p232 = por %p230, %p231
    %p233 = scmp.ne.s32.totalorder %s222, %s225
    %p234 = scmp.eq.s32.totalorder %s23, 1
    %p235 = por %p233, %p234
    %p236 = scmp.ne.s32.totalorder %s225, %s226
    %p237 = scmp.eq.s32.totalorder %s23, 0
    %p238 = por %p236, %p237
    %p239 = scmp.ne.s32.totalorder %s225, %s226
    %p240 = scmp.eq.s32.totalorder %s24, 1
    %p241 = por %p239, %p240
    %p243 = scmp.ne.s32.totalorder %s226, %s242
    %p244 = scmp.eq.s32.totalorder %s24, 0
    %p245 = por %p243, %p244
    %s246 = ssub.s32 %s18, %s25
    %p247 = scmp.eq.s32.totalorder %s246, 0
    %s249 = sadd.s32 %s248, 1
    %s250 = scalar_select %p247, %s248, %s249
    %p253 = pneg %p247
    %p254 = scmp.eq.s32.totalorder %s18, 1
    %p255 = por %p253, %p254
    %p256 = scmp.ne.s32.totalorder %s248, %s251
    %p257 = scmp.eq.s32.totalorder %s18, 0
    %p258 = por %p256, %p257
    %p259 = scmp.ne.s32.totalorder %s248, %s251
    %p260 = scmp.eq.s32.totalorder %s23, 1
    %p261 = por %p259, %p260
    %p262 = scmp.ne.s32.totalorder %s251, %s252
    %p263 = scmp.eq.s32.totalorder %s23, 0
    %p264 = por %p262, %p263
    %p265 = scmp.ne.s32.totalorder %s251, %s252
    %p266 = scmp.eq.s32.totalorder %s24, 1
    %p267 = por %p265, %p266
    %p269 = scmp.ne.s32.totalorder %s252, %s268
    %p270 = scmp.eq.s32.totalorder %s24, 0
    %p271 = por %p269, %p270
    %s272 = ssub.s32 %s18, %s25
    %p273 = scmp.eq.s32.totalorder %s272, 0
    %s275 = sadd.s32 %s274, 1
    %s276 = scalar_select %p273, %s274, %s275
    %p279 = pneg %p273
    %p280 = scmp.eq.s32.totalorder %s18, 1
    %p281 = por %p279, %p280
    %p282 = scmp.ne.s32.totalorder %s274, %s277
    %p283 = scmp.eq.s32.totalorder %s18, 0
    %p284 = por %p282, %p283
    %p285 = scmp.ne.s32.totalorder %s274, %s277
    %p286 = scmp.eq.s32.totalorder %s23, 1
    %p287 = por %p285, %p286
    %p288 = scmp.ne.s32.totalorder %s277, %s278
    %p289 = scmp.eq.s32.totalorder %s23, 0
    %p290 = por %p288, %p289
    %p291 = scmp.ne.s32.totalorder %s277, %s278
    %p292 = scmp.eq.s32.totalorder %s24, 1
    %p293 = por %p291, %p292
    %p295 = scmp.ne.s32.totalorder %s278, %s294
    %p296 = scmp.eq.s32.totalorder %s24, 0
    %p297 = por %p295, %p296
    %p298 = scmp.le.s32.totalorder 1, %s18
    %p299 = scmp.lt.s32.totalorder %s18, 3
    %p300 = pnand %p298, %p299
    %p301 = pneg %p300
    // Predicated region
    $region9: #{vqgan_forward.1} parent=5 // pred_check
      _
    $region10: #{vqgan_forward.1} parent=5 // pred_check_branch
      %303 = sbr.rel (%p300) target = $region12
    $region11: #{vqgan_forward.1} parent=5 // pred_region
      %s304 = ssub.s32 %s18, 1
      // Predicated region
      $region13: #{vqgan_forward.1} parent=11 // pred_check
        %p305 = pneg %p65
      $region14: #{vqgan_forward.1} parent=11 // pred_check_branch
        %307 = sbr.rel (%p305) target = $region16
      $region15: #{vqgan_forward.1} parent=11 // pred_region
        _
      $region16: #{vqgan_forward.1} parent=11 // pred_fallthru
        _
      // Predicated region
      $region17: #{vqgan_forward.1} parent=11 // pred_check
        %p308 = pneg %p86
      $region18: #{vqgan_forward.1} parent=11 // pred_check_branch
        %310 = sbr.rel (%p308) target = $region20
      $region19: #{vqgan_forward.1} parent=11 // pred_region
        _
      $region20: #{vqgan_forward.1} parent=11 // pred_fallthru
        _
      // Predicated region
      $region21: #{vqgan_forward.1} parent=11 // pred_check
        %p311 = pneg %p107
      $region22: #{vqgan_forward.1} parent=11 // pred_check_branch
        %313 = sbr.rel (%p311) target = $region24
      $region23: #{vqgan_forward.1} parent=11 // pred_region
        _
      $region24: #{vqgan_forward.1} parent=11 // pred_fallthru
        _
      // Predicated region
      $region25: #{vqgan_forward.1} parent=11 // pred_check
        %p314 = pneg %p128
      $region26: #{vqgan_forward.1} parent=11 // pred_check_branch
        %316 = sbr.rel (%p314) target = $region28
      $region27: #{vqgan_forward.1} parent=11 // pred_region
        _
      $region28: #{vqgan_forward.1} parent=11 // pred_fallthru
        _
      // Predicated region
      $region29: #{vqgan_forward.1} parent=11 // pred_check
        %p317 = pneg %p149
      $region30: #{vqgan_forward.1} parent=11 // pred_check_branch
        %319 = sbr.rel (%p317) target = $region32
      $region31: #{vqgan_forward.1} parent=11 // pred_region
        _
      $region32: #{vqgan_forward.1} parent=11 // pred_fallthru
        _
      // Predicated region
      $region33: #{vqgan_forward.1} parent=11 // pred_check
        %p320 = pneg %p170
      $region34: #{vqgan_forward.1} parent=11 // pred_check_branch
        %322 = sbr.rel (%p320) target = $region36
      $region35: #{vqgan_forward.1} parent=11 // pred_region
        _
      $region36: #{vqgan_forward.1} parent=11 // pred_fallthru
        _
      // Predicated region
      $region37: #{vqgan_forward.1} parent=11 // pred_check
        %p323 = pneg %p191
      $region38: #{vqgan_forward.1} parent=11 // pred_check_branch
        %325 = sbr.rel (%p323) target = $region40
      $region39: #{vqgan_forward.1} parent=11 // pred_region
        _
      $region40: #{vqgan_forward.1} parent=11 // pred_fallthru
        _
      // Predicated region
      $region41: #{vqgan_forward.1} parent=11 // pred_check
        %p326 = pneg %p212
      $region42: #{vqgan_forward.1} parent=11 // pred_check_branch
        %328 = sbr.rel (%p326) target = $region44
      $region43: #{vqgan_forward.1} parent=11 // pred_region
        _
      $region44: #{vqgan_forward.1} parent=11 // pred_fallthru
        _
    $region12: #{vqgan_forward.1} parent=5 // pred_fallthru
      _
    %p329 = scmp.lt.s32.totalorder %s18, 2
    // Predicated region
    $region45: #{vqgan_forward.1} parent=5 // pred_check
      %p330 = pneg %p329
    $region46: #{vqgan_forward.1} parent=5 // pred_check_branch
      %332 = sbr.rel (%p330) target = $region48
    $region47: #{vqgan_forward.1} parent=5 // pred_region
      // Predicated region
      $region49: #{vqgan_forward.1} parent=47 // pred_check
        %p333 = pneg %p38
      $region50: #{vqgan_forward.1} parent=47 // pred_check_branch
        %335 = sbr.rel (%p333) target = $region52
      $region51: #{vqgan_forward.1} parent=47 // pred_region
        %s336 = smul.u32 64, %s18
        %p337 = scmp.lt.s32.totalorder %s336, 127
        %s338 = scalar_select %p337, %s336, 127
        %s339 = smul.addr %s338, 8
        %s340 = scalar_lea.vmem %s0, %s339
        %s341 = smul.u32 64, %s18
      $region52: #{vqgan_forward.1} parent=47 // pred_fallthru
        _
    $region48: #{vqgan_forward.1} parent=5 // pred_fallthru
      _
    %p342 = scmp.le.s32.totalorder 1, %s18
    %p343 = scmp.lt.s32.totalorder %s18, 3
    %p344 = pnand %p342, %p343
    %p345 = pneg %p344
    // Predicated region
    $region53: #{vqgan_forward.1} parent=5 // pred_check
      _
    $region54: #{vqgan_forward.1} parent=5 // pred_check_branch
      %347 = sbr.rel (%p344) target = $region56
    $region55: #{vqgan_forward.1} parent=5 // pred_region
      %s348 = ssub.s32 %s18, 1
      %s349 = smul.u32 64, %s23
      %p350 = scmp.lt.s32.totalorder %s349, 127
      %s351 = scalar_select %p350, %s349, 127
      %s352 = smul.addr %s351, 8
      %s353 = scalar_lea.vmem %s0, %s352
      %p354 = pneg %p44
      %p355 = pneg %p41
      %p356 = pneg %p65
      %p357 = pneg %p62
      %p358 = pneg %p86
      %p359 = pneg %p83
      %p360 = pneg %p107
      %p361 = pneg %p104
      %p362 = pneg %p128
      %p363 = pneg %p125
      %p364 = pneg %p149
      %p365 = pneg %p146
      %p366 = pneg %p170
      %p367 = pneg %p167
      %p368 = pneg %p191
      %p369 = pneg %p188
      %p370 = pneg %p212
      %p371 = pneg %p209
      %p372 = pneg %p238
      %p373 = pneg %p235
      %s374 = smul.u32 64, %s23
      %p375 = scmp.lt.s32.totalorder %s374, 127
      %s376 = scalar_select %p375, %s374, 127
      %s377 = smul.addr %s376, 8
      %s378 = scalar_lea.vmem %s9, %s377
      %p379 = pneg %p264
      %p380 = pneg %p261
      %s381 = smul.u32 64, %s23
      %p382 = scmp.lt.s32.totalorder %s381, 127
      %s383 = scalar_select %p382, %s381, 127
      %s384 = smul.addr %s383, 8
      %s385 = scalar_lea.vmem %s10, %s384
      %p386 = pneg %p290
      %p387 = pneg %p287
      %s388 = smul.u32 64, %s23
      %p389 = scmp.lt.s32.totalorder %s388, 127
      %s390 = scalar_select %p389, %s388, 127
      %s391 = smul.addr %s390, 8
      %s392 = scalar_lea.vmem %s11, %s391
      %s393 = smul.u32 64, %s23
      %p394 = scmp.lt.s32.totalorder %s393, 127
      %s395 = scalar_select %p394, %s393, 127
      %s396 = smul.addr %s395, 8
      %s397 = scalar_lea.vmem %s0, %s396
      %s398 = smul.u32 64, %s23
      %s399 = smul.u32 64, %s23
      %p400 = scmp.lt.s32.totalorder %s399, 127
      %s401 = scalar_select %p400, %s399, 127
      %s402 = smul.addr %s401, 8
      %s403 = scalar_lea.vmem %s9, %s402
      %s404 = smul.u32 64, %s23
      %s405 = smul.u32 64, %s23
      %p406 = scmp.lt.s32.totalorder %s405, 127
      %s407 = scalar_select %p406, %s405, 127
      %s408 = smul.addr %s407, 8
      %s409 = scalar_lea.vmem %s10, %s408
      %s410 = smul.u32 64, %s23
      %s411 = smul.u32 64, %s23
      %p412 = scmp.lt.s32.totalorder %s411, 127
      %s413 = scalar_select %p412, %s411, 127
      %s414 = smul.addr %s413, 8
      %s415 = scalar_lea.vmem %s11, %s414
      %s416 = smul.u32 64, %s23
      %v417 = vld [vmem:[%s397] sm:$0xff]
      %v418 = vld [vmem:[%s397 + $0x8] sm:$0xff]
      %v419 = vld [vmem:[%s397 + $0x10] sm:$0xff]
      %v420 = vld [vmem:[%s397 + $0x18] sm:$0xff]
      %v421 = vld [vmem:[%s397 + $0x20] sm:$0xff]
      %v422 = vld [vmem:[%s397 + $0x28] sm:$0xff]
      %v423 = vld [vmem:[%s397 + $0x30] sm:$0xff]
      %v424 = vld [vmem:[%s397 + $0x38] sm:$0xff]
      %v425 = vld [vmem:[%s397 + $0x40] sm:$0xff]
      %v426 = vld [vmem:[%s397 + $0x48] sm:$0xff]
      %v427 = vld [vmem:[%s397 + $0x50] sm:$0xff]
      %v428 = vld [vmem:[%s397 + $0x58] sm:$0xff]
      %v429 = vld [vmem:[%s397 + $0x60] sm:$0xff]
      %v430 = vld [vmem:[%s397 + $0x68] sm:$0xff]
      %v431 = vld [vmem:[%s397 + $0x70] sm:$0xff]
      %v432 = vld [vmem:[%s397 + $0x78] sm:$0xff]
      %v433 = vld [vmem:[%s397 + $0x80] sm:$0xff]
      %v434 = vld [vmem:[%s397 + $0x88] sm:$0xff]
      %v435 = vld [vmem:[%s397 + $0x90] sm:$0xff]
      %v436 = vld [vmem:[%s397 + $0x98] sm:$0xff]
      %v437 = vld [vmem:[%s397 + $0xa0] sm:$0xff]
      %v438 = vld [vmem:[%s397 + $0xa8] sm:$0xff]
      %v439 = vld [vmem:[%s397 + $0xb0] sm:$0xff]
      %v440 = vld [vmem:[%s397 + $0xb8] sm:$0xff]
      %v441 = vld [vmem:[%s397 + $0xc0] sm:$0xff]
      %v442 = vld [vmem:[%s397 + $0xc8] sm:$0xff]
      %v443 = vld [vmem:[%s397 + $0xd0] sm:$0xff]
      %v444 = vld [vmem:[%s397 + $0xd8] sm:$0xff]
      %v445 = vld [vmem:[%s397 + $0xe0] sm:$0xff]
      %v446 = vld [vmem:[%s397 + $0xe8] sm:$0xff]
      %v447 = vld [vmem:[%s397 + $0xf0] sm:$0xff]
      %v448 = vld [vmem:[%s397 + $0xf8] sm:$0xff]
      %v449 = vld [vmem:[%s397 + $0x100] sm:$0xff]
      %v450 = vld [vmem:[%s397 + $0x108] sm:$0xff]
      %v451 = vld [vmem:[%s397 + $0x110] sm:$0xff]
      %v452 = vld [vmem:[%s397 + $0x118] sm:$0xff]
      %v453 = vld [vmem:[%s397 + $0x120] sm:$0xff]
      %v454 = vld [vmem:[%s397 + $0x128] sm:$0xff]
      %v455 = vld [vmem:[%s397 + $0x130] sm:$0xff]
      %v456 = vld [vmem:[%s397 + $0x138] sm:$0xff]
      %v457 = vld [vmem:[%s397 + $0x140] sm:$0xff]
      %v458 = vld [vmem:[%s397 + $0x148] sm:$0xff]
      %v459 = vld [vmem:[%s397 + $0x150] sm:$0xff]
      %v460 = vld [vmem:[%s397 + $0x158] sm:$0xff]
      %v461 = vld [vmem:[%s397 + $0x160] sm:$0xff]
      %v462 = vld [vmem:[%s397 + $0x168] sm:$0xff]
      %v463 = vld [vmem:[%s397 + $0x170] sm:$0xff]
      %v464 = vld [vmem:[%s397 + $0x178] sm:$0xff]
      %v465 = vld [vmem:[%s397 + $0x180] sm:$0xff]
      %v466 = vld [vmem:[%s397 + $0x188] sm:$0xff]
      %v467 = vld [vmem:[%s397 + $0x190] sm:$0xff]
      %v468 = vld [vmem:[%s397 + $0x198] sm:$0xff]
      %v469 = vld [vmem:[%s397 + $0x1a0] sm:$0xff]
      %v470 = vld [vmem:[%s397 + $0x1a8] sm:$0xff]
      %v471 = vld [vmem:[%s397 + $0x1b0] sm:$0xff]
      %v472 = vld [vmem:[%s397 + $0x1b8] sm:$0xff]
      %v473 = vld [vmem:[%s397 + $0x1c0] sm:$0xff]
      %v474 = vld [vmem:[%s397 + $0x1c8] sm:$0xff]
      %v475 = vld [vmem:[%s397 + $0x1d0] sm:$0xff]
      %v476 = vld [vmem:[%s397 + $0x1d8] sm:$0xff]
      %v477 = vld [vmem:[%s397 + $0x1e0] sm:$0xff]
      %v478 = vld [vmem:[%s397 + $0x1e8] sm:$0xff]
      %v479 = vld [vmem:[%s397 + $0x1f0] sm:$0xff]
      %v480 = vld [vmem:[%s397 + $0x1f8] sm:$0xff]
      %v481 = vld [vmem:[%s1] sm:$0xf]
      %v482 = vld [vmem:[%s2] sm:$0x1]
      %v484 = vlaneseq
      %v485 = vshrl.u32 %v484, 7
      %v486 = vsub.s32 0, %v485
      %v487 = vrot.slane %v482, %v486
      %vm489 = vcmask 31744
      %v491 = vsel %vm489, %v417, 0
      %v494 = vsel %vm489, %v418, 0
      %v497 = vsel %vm489, %v419, 0
      %v500 = vsel %vm489, %v420, 0
      %v503 = vsel %vm489, %v421, 0
      %v506 = vsel %vm489, %v422, 0
      %v509 = vsel %vm489, %v423, 0
      %v512 = vsel %vm489, %v424, 0
      %v515 = vsel %vm489, %v425, 0
      %v518 = vsel %vm489, %v426, 0
      %v521 = vsel %vm489, %v427, 0
      %v524 = vsel %vm489, %v428, 0
      %v527 = vsel %vm489, %v429, 0
      %v530 = vsel %vm489, %v430, 0
      %v533 = vsel %vm489, %v431, 0
      %v536 = vsel %vm489, %v432, 0
      %v539 = vsel %vm489, %v433, 0
      %v542 = vsel %vm489, %v434, 0
      %v545 = vsel %vm489, %v435, 0
      %v548 = vsel %vm489, %v436, 0
      %v551 = vsel %vm489, %v437, 0
      %v554 = vsel %vm489, %v438, 0
      %v557 = vsel %vm489, %v439, 0
      %v560 = vsel %vm489, %v440, 0
      %v563 = vsel %vm489, %v441, 0
      %v566 = vsel %vm489, %v442, 0
      %v569 = vsel %vm489, %v443, 0
      %v572 = vsel %vm489, %v444, 0
      %v575 = vsel %vm489, %v445, 0
      %v578 = vsel %vm489, %v446, 0
      %v581 = vsel %vm489, %v447, 0
      %v584 = vsel %vm489, %v448, 0
      %v587 = vsel %vm489, %v449, 0
      %v590 = vsel %vm489, %v450, 0
      %v593 = vsel %vm489, %v451, 0
      %v596 = vsel %vm489, %v452, 0
      %v599 = vsel %vm489, %v453, 0
      %v602 = vsel %vm489, %v454, 0
      %v605 = vsel %vm489, %v455, 0
      %v608 = vsel %vm489, %v456, 0
      %v611 = vsel %vm489, %v457, 0
      %v614 = vsel %vm489, %v458, 0
      %v617 = vsel %vm489, %v459, 0
      %v620 = vsel %vm489, %v460, 0
      %v623 = vsel %vm489, %v461, 0
      %v626 = vsel %vm489, %v462, 0
      %v629 = vsel %vm489, %v463, 0
      %v632 = vsel %vm489, %v464, 0
      %v635 = vsel %vm489, %v465, 0
      %v638 = vsel %vm489, %v466, 0
      %v641 = vsel %vm489, %v467, 0
      %v644 = vsel %vm489, %v468, 0
      %v647 = vsel %vm489, %v469, 0
      %v650 = vsel %vm489, %v470, 0
      %v653 = vsel %vm489, %v471, 0
      %v656 = vsel %vm489, %v472, 0
      %v659 = vsel %vm489, %v473, 0
      %v662 = vsel %vm489, %v474, 0
      %v665 = vsel %vm489, %v475, 0
      %v668 = vsel %vm489, %v476, 0
      %v671 = vsel %vm489, %v477, 0
      %v674 = vsel %vm489, %v478, 0
      %v677 = vsel %vm489, %v479, 0
      %v680 = vsel %vm489, %v480, 0
      %vm682 = vcmask 1043456
      %v684 = vsel %vm682, %v481, 0
      %686 = vmatprep.subr.mxu0 0.0
      %687 = vmatpush1.msra.mxu0 %v684
      %688 = vmatprep.subr.mxu0 0.0
      %689 = vmatpush1.msra.mxu0 0.0
      %690 = vmatprep.subr.mxu0 0.0
      %691 = vmatpush1.msra.mxu0 0.0
      %692 = vmatprep.subr.mxu0 0.0
      %693 = vmatpush1.msra.mxu0 0.0
      %694 = vmatprep.subr.mxu0 0.0
      %695 = vmatpush1.msra.mxu0 0.0
      %696 = vmatprep.subr.mxu0 0.0
      %697 = vmatpush1.msra.mxu0 0.0
      %698 = vmatprep.subr.mxu0 0.0
      %699 = vmatpush1.msra.mxu0 0.0
      %700 = vmatprep.subr.mxu0 0.0
      %701 = vmatpush1.msra.mxu0 0.0
      %702 = vmatprep.subr.mxu0 0.0
      %703 = vmatpush1.msra.mxu0 0.0
      %704 = vmatprep.subr.mxu0 0.0
      %705 = vmatpush1.msra.mxu0 0.0
      %706 = vmatprep.subr.mxu0 0.0
      %707 = vmatpush1.msra.mxu0 0.0
      %708 = vmatprep.subr.mxu0 0.0
      %709 = vmatpush1.msra.mxu0 0.0
      %710 = vmatprep.subr.mxu0 0.0
      %711 = vmatpush1.msra.mxu0 0.0
      %712 = vmatprep.subr.mxu0 0.0
      %713 = vmatpush1.msra.mxu0 0.0
      %714 = vmatprep.subr.mxu0 0.0
      %715 = vmatpush1.msra.mxu0 0.0
      %716 = vmatprep.subr.mxu0 0.0
      %717 = vmatpush1.msra.mxu0 0.0
      %718 = vmatprep.subr.mxu0 0.0
      %719 = vmatpush1.msra.mxu0 0.0
      %720 = vmatprep.subr.mxu0 0.0
      %721 = vmatpush1.msra.mxu0 0.0
      %722 = vmatprep.subr.mxu0 0.0
      %723 = vmatpush1.msra.mxu0 0.0
      %724 = vmatprep.subr.mxu0 0.0
      %725 = vmatpush1.msra.mxu0 0.0
      %726 = vmatprep.subr.mxu0 0.0
      %727 = vmatpush1.msra.mxu0 0.0
      %728 = vmatprep.subr.mxu0 0.0
      %729 = vmatpush1.msra.mxu0 0.0
      %730 = vmatprep.subr.mxu0 0.0
      %731 = vmatpush1.msra.mxu0 0.0
      %732 = vmatprep.subr.mxu0 0.0
      %733 = vmatpush1.msra.mxu0 0.0
      %734 = vmatprep.subr.mxu0 0.0
      %735 = vmatpush1.msra.mxu0 0.0
      %736 = vmatprep.subr.mxu0 0.0
      %737 = vmatpush1.msra.mxu0 0.0
      %738 = vmatprep.subr.mxu0 0.0
      %739 = vmatpush1.msra.mxu0 0.0
      %740 = vmatprep.subr.mxu0 0.0
      %741 = vmatpush1.msra.mxu0 0.0
      %742 = vmatprep.subr.mxu0 0.0
      %743 = vmatpush1.msra.mxu0 0.0
      %744 = vmatprep.subr.mxu0 0.0
      %745 = vmatpush1.msra.mxu0 0.0
      %746 = vmatprep.subr.mxu0 0.0
      %747 = vmatpush1.msra.mxu0 0.0
      %748 = vmatprep.subr.mxu0 0.0
      %749 = vmatpush1.msra.mxu0 0.0
      %750 = vmatprep.mubr.f32.mxu0 0.0
      %751 = vmatmul.mubr.f32.gmra.mrb[0].mxu0 %v491
      %v752 = vpop.f32.mrb[0].mxu0
      %v753 = vadd.f32 %v487, %v752
      %v754 = vpop.f32.mrb[0].mxu0
      %755 = vmatprep.mubr.f32.mxu0 0.0
      %756 = vmatmul.mubr.f32.gmra.mrb[0].mxu0 %v494
      %v757 = vpop.f32.mrb[0].mxu0
      %v758 = vadd.f32 %v487, %v757
      %v759 = vpop.f32.mrb[0].mxu0
      %760 = vmatprep.mubr.f32.mxu0 0.0
      %761 = vmatmul.mubr.f32.gmra.mrb[0].mxu0 %v497
      %v762 = vpop.f32.mrb[0].mxu0
      %v763 = vadd.f32 %v487, %v762
      %v764 = vpop.f32.mrb[0].mxu0
      %765 = vmatprep.mubr.f32.mxu0 0.0
      %766 = vmatmul.mubr.f32.gmra.mrb[0].mxu0 %v500
      %v767 = vpop.f32.mrb[0].mxu0
      %v768 = vadd.f32 %v487, %v767
      %v769 = vpop.f32.mrb[0].mxu0
      %770 = vmatprep.mubr.f32.mxu0 0.0
      %771 = vmatmul.mubr.f32.gmra.mrb[0].mxu0 %v503
      %v772 = vpop.f32.mrb[0].mxu0
      %v773 = vadd.f32 %v487, %v772
      %v774 = vpop.f32.mrb[0].mxu0
      %775 = vmatprep.mubr.f32.mxu0 0.0
      %776 = vmatmul.mubr.f32.gmra.mrb[0].mxu0 %v506
      %v777 = vpop.f32.mrb[0].mxu0
      %v778 = vadd.f32 %v487, %v777
      %v779 = vpop.f32.mrb[0].mxu0
      %780 = vmatprep.mubr.f32.mxu0 0.0
      %781 = vmatmul.mubr.f32.gmra.mrb[0].mxu0 %v509
      %v782 = vpop.f32.mrb[0].mxu0
      %v783 = vadd.f32 %v487, %v782
      %v784 = vpop.f32.mrb[0].mxu0
      %785 = vmatprep.mubr.f32.mxu0 0.0
      %786 = vmatmul.mubr.f32.gmra.mrb[0].mxu0 %v512
      %v787 = vpop.f32.mrb[0].mxu0
      %v788 = vadd.f32 %v487, %v787
      %v789 = vpop.f32.mrb[0].mxu0
      %790 = vmatprep.mubr.f32.mxu0 0.0
      %791 = vmatmul.mubr.f32.gmra.mrb[0].mxu0 %v515
      %v792 = vpop.f32.mrb[0].mxu0
      %v793 = vadd.f32 %v487, %v792
      %v794 = vpop.f32.mrb[0].mxu0
      %795 = vmatprep.mubr.f32.mxu0 0.0
      %796 = vmatmul.mubr.f32.gmra.mrb[0].mxu0 %v518
      %v797 = vpop.f32.mrb[0].mxu0
      %v798 = vadd.f32 %v487, %v797
      %v799 = vpop.f32.mrb[0].mxu0
      %800 = vmatprep.mubr.f32.mxu0 0.0
      %801 = vmatmul.mubr.f32.gmra.mrb[0].mxu0 %v521
      %v802 = vpop.f32.mrb[0].mxu0
      %v803 = vadd.f32 %v487, %v802
      %v804 = vpop.f32.mrb[0].mxu0
      %805 = vmatprep.mubr.f32.mxu0 0.0
      %806 = vmatmul.mubr.f32.gmra.mrb[0].mxu0 %v524
      %v807 = vpop.f32.mrb[0].mxu0
      %v808 = vadd.f32 %v487, %v807
      %v809 = vpop.f32.mrb[0].mxu0
      %810 = vmatprep.mubr.f32.mxu0 0.0
      %811 = vmatmul.mubr.f32.gmra.mrb[0].mxu0 %v527
      %v812 = vpop.f32.mrb[0].mxu0
      %v813 = vadd.f32 %v487, %v812
      %v814 = vpop.f32.mrb[0].mxu0
      %815 = vmatprep.mubr.f32.mxu0 0.0
      %816 = vmatmul.mubr.f32.gmra.mrb[0].mxu0 %v530
      %v817 = vpop.f32.mrb[0].mxu0
      %v818 = vadd.f32 %v487, %v817
      %v819 = vpop.f32.mrb[0].mxu0
      %820 = vmatprep.mubr.f32.mxu0 0.0
      %821 = vmatmul.mubr.f32.gmra.mrb[0].mxu0 %v533
      %v822 = vpop.f32.mrb[0].mxu0
      %v823 = vadd.f32 %v487, %v822
      %v824 = vpop.f32.mrb[0].mxu0
      %825 = vmatprep.mubr.f32.mxu0 0.0
      %826 = vmatmul.mubr.f32.gmra.mrb[0].mxu0 %v536
      %v827 = vpop.f32.mrb[0].mxu0
      %v828 = vadd.f32 %v487, %v827
      %v829 = vpop.f32.mrb[0].mxu0
      %830 = vmatprep.mubr.f32.mxu0 0.0
      %831 = vmatmul.mubr.f32.gmra.mrb[0].mxu0 %v539
      %v832 = vpop.f32.mrb[0].mxu0
      %v833 = vadd.f32 %v487, %v832
      %v834 = vpop.f32.mrb[0].mxu0
      %835 = vmatprep.mubr.f32.mxu0 0.0
      %836 = vmatmul.mubr.f32.gmra.mrb[0].mxu0 %v542
      %v837 = vpop.f32.mrb[0].mxu0
      %v838 = vadd.f32 %v487, %v837
      %v839 = vpop.f32.mrb[0].mxu0
      %840 = vmatprep.mubr.f32.mxu0 0.0
      %841 = vmatmul.mubr.f32.gmra.mrb[0].mxu0 %v545
      %v842 = vpop.f32.mrb[0].mxu0
      %v843 = vadd.f32 %v487, %v842
      %v844 = vpop.f32.mrb[0].mxu0
      %845 = vmatprep.mubr.f32.mxu0 0.0
      %846 = vmatmul.mubr.f32.gmra.mrb[0].mxu0 %v548
      %v847 = vpop.f32.mrb[0].mxu0
      %v848 = vadd.f32 %v487, %v847
      %v849 = vpop.f32.mrb[0].mxu0
      %850 = vmatprep.mubr.f32.mxu0 0.0
      %851 = vmatmul.mubr.f32.gmra.mrb[0].mxu0 %v551
      %v852 = vpop.f32.mrb[0].mxu0
      %v853 = vadd.f32 %v487, %v852
      %v854 = vpop.f32.mrb[0].mxu0
      %855 = vmatprep.mubr.f32.mxu0 0.0
      %856 = vmatmul.mubr.f32.gmra.mrb[0].mxu0 %v554
      %v857 = vpop.f32.mrb[0].mxu0
      %v858 = vadd.f32 %v487, %v857
      %v859 = vpop.f32.mrb[0].mxu0
      %860 = vmatprep.mubr.f32.mxu0 0.0
      %861 = vmatmul.mubr.f32.gmra.mrb[0].mxu0 %v557
      %v862 = vpop.f32.mrb[0].mxu0
      %v863 = vadd.f32 %v487, %v862
      %v864 = vpop.f32.mrb[0].mxu0
      %865 = vmatprep.mubr.f32.mxu0 0.0
      %866 = vmatmul.mubr.f32.gmra.mrb[0].mxu0 %v560
      %v867 = vpop.f32.mrb[0].mxu0
      %v868 = vadd.f32 %v487, %v867
      %v869 = vpop.f32.mrb[0].mxu0
      %870 = vmatprep.mubr.f32.mxu0 0.0
      %871 = vmatmul.mubr.f32.gmra.mrb[0].mxu0 %v563
      %v872 = vpop.f32.mrb[0].mxu0
      %v873 = vadd.f32 %v487, %v872
      %v874 = vpop.f32.mrb[0].mxu0
      %875 = vmatprep.mubr.f32.mxu0 0.0
      %876 = vmatmul.mubr.f32.gmra.mrb[0].mxu0 %v566
      %v877 = vpop.f32.mrb[0].mxu0
      %v878 = vadd.f32 %v487, %v877
      %v879 = vpop.f32.mrb[0].mxu0
      %880 = vmatprep.mubr.f32.mxu0 0.0
      %881 = vmatmul.mubr.f32.gmra.mrb[0].mxu0 %v569
      %v882 = vpop.f32.mrb[0].mxu0
      %v883 = vadd.f32 %v487, %v882
      %v884 = vpop.f32.mrb[0].mxu0
      %885 = vmatprep.mubr.f32.mxu0 0.0
      %886 = vmatmul.mubr.f32.gmra.mrb[0].mxu0 %v572
      %v887 = vpop.f32.mrb[0].mxu0
      %v888 = vadd.f32 %v487, %v887
      %v889 = vpop.f32.mrb[0].mxu0
      %890 = vmatprep.mubr.f32.mxu0 0.0
      %891 = vmatmul.mubr.f32.gmra.mrb[0].mxu0 %v575
      %v892 = vpop.f32.mrb[0].mxu0
      %v893 = vadd.f32 %v487, %v892
      %v894 = vpop.f32.mrb[0].mxu0
      %895 = vmatprep.mubr.f32.mxu0 0.0
      %896 = vmatmul.mubr.f32.gmra.mrb[0].mxu0 %v578
      %v897 = vpop.f32.mrb[0].mxu0
      %v898 = vadd.f32 %v487, %v897
      %v899 = vpop.f32.mrb[0].mxu0
      %900 = vmatprep.mubr.f32.mxu0 0.0
      %901 = vmatmul.mubr.f32.gmra.mrb[0].mxu0 %v581
      %v902 = vpop.f32.mrb[0].mxu0
      %v903 = vadd.f32 %v487, %v902
      %v904 = vpop.f32.mrb[0].mxu0
      %905 = vmatprep.mubr.f32.mxu0 0.0
      %906 = vmatmul.mubr.f32.gmra.mrb[0].mxu0 %v584
      %v907 = vpop.f32.mrb[0].mxu0
      %v908 = vadd.f32 %v487, %v907
      %v909 = vpop.f32.mrb[0].mxu0
      %910 = vmatprep.mubr.f32.mxu0 0.0
      %911 = vmatmul.mubr.f32.gmra.mrb[0].mxu0 %v587
      %v912 = vpop.f32.mrb[0].mxu0
      %v913 = vadd.f32 %v487, %v912
      %v914 = vpop.f32.mrb[0].mxu0
      %915 = vmatprep.mubr.f32.mxu0 0.0
      %916 = vmatmul.mubr.f32.gmra.mrb[0].mxu0 %v590
      %v917 = vpop.f32.mrb[0].mxu0
      %v918 = vadd.f32 %v487, %v917
      %v919 = vpop.f32.mrb[0].mxu0
      %920 = vmatprep.mubr.f32.mxu0 0.0
      %921 = vmatmul.mubr.f32.gmra.mrb[0].mxu0 %v593
      %v922 = vpop.f32.mrb[0].mxu0
      %v923 = vadd.f32 %v487, %v922
      %v924 = vpop.f32.mrb[0].mxu0
      %925 = vmatprep.mubr.f32.mxu0 0.0
      %926 = vmatmul.mubr.f32.gmra.mrb[0].mxu0 %v596
      %v927 = vpop.f32.mrb[0].mxu0
      %v928 = vadd.f32 %v487, %v927
      %v929 = vpop.f32.mrb[0].mxu0
      %930 = vmatprep.mubr.f32.mxu0 0.0
      %931 = vmatmul.mubr.f32.gmra.mrb[0].mxu0 %v599
      %v932 = vpop.f32.mrb[0].mxu0
      %v933 = vadd.f32 %v487, %v932
      %v934 = vpop.f32.mrb[0].mxu0
      %935 = vmatprep.mubr.f32.mxu0 0.0
      %936 = vmatmul.mubr.f32.gmra.mrb[0].mxu0 %v602
      %v937 = vpop.f32.mrb[0].mxu0
      %v938 = vadd.f32 %v487, %v937
      %v939 = vpop.f32.mrb[0].mxu0
      %940 = vmatprep.mubr.f32.mxu0 0.0
      %941 = vmatmul.mubr.f32.gmra.mrb[0].mxu0 %v605
      %v942 = vpop.f32.mrb[0].mxu0
      %v943 = vadd.f32 %v487, %v942
      %v944 = vpop.f32.mrb[0].mxu0
      %945 = vmatprep.mubr.f32.mxu0 0.0
      %946 = vmatmul.mubr.f32.gmra.mrb[0].mxu0 %v608
      %v947 = vpop.f32.mrb[0].mxu0
      %v948 = vadd.f32 %v487, %v947
      %v949 = vpop.f32.mrb[0].mxu0
      %950 = vmatprep.mubr.f32.mxu0 0.0
      %951 = vmatmul.mubr.f32.gmra.mrb[0].mxu0 %v611
      %v952 = vpop.f32.mrb[0].mxu0
      %v953 = vadd.f32 %v487, %v952
      %v954 = vpop.f32.mrb[0].mxu0
      %955 = vmatprep.mubr.f32.mxu0 0.0
      %956 = vmatmul.mubr.f32.gmra.mrb[0].mxu0 %v614
      %v957 = vpop.f32.mrb[0].mxu0
      %v958 = vadd.f32 %v487, %v957
      %v959 = vpop.f32.mrb[0].mxu0
      %960 = vmatprep.mubr.f32.mxu0 0.0
      %961 = vmatmul.mubr.f32.gmra.mrb[0].mxu0 %v617
      %v962 = vpop.f32.mrb[0].mxu0
      %v963 = vadd.f32 %v487, %v962
      %v964 = vpop.f32.mrb[0].mxu0
      %965 = vmatprep.mubr.f32.mxu0 0.0
      %966 = vmatmul.mubr.f32.gmra.mrb[0].mxu0 %v620
      %v967 = vpop.f32.mrb[0].mxu0
      %v968 = vadd.f32 %v487, %v967
      %v969 = vpop.f32.mrb[0].mxu0
      %970 = vmatprep.mubr.f32.mxu0 0.0
      %971 = vmatmul.mubr.f32.gmra.mrb[0].mxu0 %v623
      %v972 = vpop.f32.mrb[0].mxu0
      %v973 = vadd.f32 %v487, %v972
      %v974 = vpop.f32.mrb[0].mxu0
      %975 = vmatprep.mubr.f32.mxu0 0.0
      %976 = vmatmul.mubr.f32.gmra.mrb[0].mxu0 %v626
      %v977 = vpop.f32.mrb[0].mxu0
      %v978 = vadd.f32 %v487, %v977
      %v979 = vpop.f32.mrb[0].mxu0
      %980 = vmatprep.mubr.f32.mxu0 0.0
      %981 = vmatmul.mubr.f32.gmra.mrb[0].mxu0 %v629
      %v982 = vpop.f32.mrb[0].mxu0
      %v983 = vadd.f32 %v487, %v982
      %v984 = vpop.f32.mrb[0].mxu0
      %985 = vmatprep.mubr.f32.mxu0 0.0
      %986 = vmatmul.mubr.f32.gmra.mrb[0].mxu0 %v632
      %v987 = vpop.f32.mrb[0].mxu0
      %v988 = vadd.f32 %v487, %v987
      %v989 = vpop.f32.mrb[0].mxu0
      %990 = vmatprep.mubr.f32.mxu0 0.0
      %991 = vmatmul.mubr.f32.gmra.mrb[0].mxu0 %v635
      %v992 = vpop.f32.mrb[0].mxu0
      %v993 = vadd.f32 %v487, %v992
      %v994 = vpop.f32.mrb[0].mxu0
      %995 = vmatprep.mubr.f32.mxu0 0.0
      %996 = vmatmul.mubr.f32.gmra.mrb[0].mxu0 %v638
      %v997 = vpop.f32.mrb[0].mxu0
      %v998 = vadd.f32 %v487, %v997
      %v999 = vpop.f32.mrb[0].mxu0
      %1000 = vmatprep.mubr.f32.mxu0 0.0
      %1001 = vmatmul.mubr.f32.gmra.mrb[0].mxu0 %v641
      %v1002 = vpop.f32.mrb[0].mxu0
      %v1003 = vadd.f32 %v487, %v1002
      %v1004 = vpop.f32.mrb[0].mxu0
      %1005 = vmatprep.mubr.f32.mxu0 0.0
      %1006 = vmatmul.mubr.f32.gmra.mrb[0].mxu0 %v644
      %v1007 = vpop.f32.mrb[0].mxu0
      %v1008 = vadd.f32 %v487, %v1007
      %v1009 = vpop.f32.mrb[0].mxu0
      %1010 = vmatprep.mubr.f32.mxu0 0.0
      %1011 = vmatmul.mubr.f32.gmra.mrb[0].mxu0 %v647
      %v1012 = vpop.f32.mrb[0].mxu0
      %v1013 = vadd.f32 %v487, %v1012
      %v1014 = vpop.f32.mrb[0].mxu0
      %1015 = vmatprep.mubr.f32.mxu0 0.0
      %1016 = vmatmul.mubr.f32.gmra.mrb[0].mxu0 %v650
      %v1017 = vpop.f32.mrb[0].mxu0
      %v1018 = vadd.f32 %v487, %v1017
      %v1019 = vpop.f32.mrb[0].mxu0
      %1020 = vmatprep.mubr.f32.mxu0 0.0
      %1021 = vmatmul.mubr.f32.gmra.mrb[0].mxu0 %v653
      %v1022 = vpop.f32.mrb[0].mxu0
      %v1023 = vadd.f32 %v487, %v1022
      %v1024 = vpop.f32.mrb[0].mxu0
      %1025 = vmatprep.mubr.f32.mxu0 0.0
      %1026 = vmatmul.mubr.f32.gmra.mrb[0].mxu0 %v656
      %v1027 = vpop.f32.mrb[0].mxu0
      %v1028 = vadd.f32 %v487, %v1027
      %v1029 = vpop.f32.mrb[0].mxu0
      %1030 = vmatprep.mubr.f32.mxu0 0.0
      %1031 = vmatmul.mubr.f32.gmra.mrb[0].mxu0 %v659
      %v1032 = vpop.f32.mrb[0].mxu0
      %v1033 = vadd.f32 %v487, %v1032
      %v1034 = vpop.f32.mrb[0].mxu0
      %1035 = vmatprep.mubr.f32.mxu0 0.0
      %1036 = vmatmul.mubr.f32.gmra.mrb[0].mxu0 %v662
      %v1037 = vpop.f32.mrb[0].mxu0
      %v1038 = vadd.f32 %v487, %v1037
      %v1039 = vpop.f32.mrb[0].mxu0
      %1040 = vmatprep.mubr.f32.mxu0 0.0
      %1041 = vmatmul.mubr.f32.gmra.mrb[0].mxu0 %v665
      %v1042 = vpop.f32.mrb[0].mxu0
      %v1043 = vadd.f32 %v487, %v1042
      %v1044 = vpop.f32.mrb[0].mxu0
      %1045 = vmatprep.mubr.f32.mxu0 0.0
      %1046 = vmatmul.mubr.f32.gmra.mrb[0].mxu0 %v668
      %v1047 = vpop.f32.mrb[0].mxu0
      %v1048 = vadd.f32 %v487, %v1047
      %v1049 = vpop.f32.mrb[0].mxu0
      %1050 = vmatprep.mubr.f32.mxu0 0.0
      %1051 = vmatmul.mubr.f32.gmra.mrb[0].mxu0 %v671
      %v1052 = vpop.f32.mrb[0].mxu0
      %v1053 = vadd.f32 %v487, %v1052
      %v1054 = vpop.f32.mrb[0].mxu0
      %1055 = vmatprep.mubr.f32.mxu0 0.0
      %1056 = vmatmul.mubr.f32.gmra.mrb[0].mxu0 %v674
      %v1057 = vpop.f32.mrb[0].mxu0
      %v1058 = vadd.f32 %v487, %v1057
      %v1059 = vpop.f32.mrb[0].mxu0
      %1060 = vmatprep.mubr.f32.mxu0 0.0
      %1061 = vmatmul.mubr.f32.gmra.mrb[0].mxu0 %v677
      %v1062 = vpop.f32.mrb[0].mxu0
      %v1063 = vadd.f32 %v487, %v1062
      %v1064 = vpop.f32.mrb[0].mxu0
      %1065 = vmatprep.mubr.f32.mxu0 0.0
      %1066 = vmatmul.mubr.f32.gmra.mrb[0].mxu0 %v680
      %v1067 = vpop.f32.mrb[0].mxu0
      %v1068 = vadd.f32 %v487, %v1067
      %v1069 = vpop.f32.mrb[0].mxu0
      %1070 = vdwg.mxu0
      %v1071 = vmax.f32 %v753, 0.0
      %v1072 = vmax.f32 %v758, 0.0
      %v1073 = vmax.f32 %v763, 0.0
      %v1074 = vmax.f32 %v768, 0.0
      %v1075 = vmax.f32 %v773, 0.0
      %v1076 = vmax.f32 %v778, 0.0
      %v1077 = vmax.f32 %v783, 0.0
      %v1078 = vmax.f32 %v788, 0.0
      %v1079 = vmax.f32 %v793, 0.0
      %v1080 = vmax.f32 %v798, 0.0
      %v1081 = vmax.f32 %v803, 0.0
      %v1082 = vmax.f32 %v808, 0.0
      %v1083 = vmax.f32 %v813, 0.0
      %v1084 = vmax.f32 %v818, 0.0
      %v1085 = vmax.f32 %v823, 0.0
      %v1086 = vmax.f32 %v828, 0.0
      %v1087 = vmax.f32 %v833, 0.0
      %v1088 = vmax.f32 %v838, 0.0
      %v1089 = vmax.f32 %v843, 0.0
      %v1090 = vmax.f32 %v848, 0.0
      %v1091 = vmax.f32 %v853, 0.0
      %v1092 = vmax.f32 %v858, 0.0
      %v1093 = vmax.f32 %v863, 0.0
      %v1094 = vmax.f32 %v868, 0.0
      %v1095 = vmax.f32 %v873, 0.0
      %v1096 = vmax.f32 %v878, 0.0
      %v1097 = vmax.f32 %v883, 0.0
      %v1098 = vmax.f32 %v888, 0.0
      %v1099 = vmax.f32 %v893, 0.0
      %v1100 = vmax.f32 %v898, 0.0
      %v1101 = vmax.f32 %v903, 0.0
      %v1102 = vmax.f32 %v908, 0.0
      %v1103 = vmax.f32 %v913, 0.0
      %v1104 = vmax.f32 %v918, 0.0
      %v1105 = vmax.f32 %v923, 0.0
      %v1106 = vmax.f32 %v928, 0.0
      %v1107 = vmax.f32 %v933, 0.0
      %v1108 = vmax.f32 %v938, 0.0
      %v1109 = vmax.f32 %v943, 0.0
      %v1110 = vmax.f32 %v948, 0.0
      %v1111 = vmax.f32 %v953, 0.0
      %v1112 = vmax.f32 %v958, 0.0
      %v1113 = vmax.f32 %v963, 0.0
      %v1114 = vmax.f32 %v968, 0.0
      %v1115 = vmax.f32 %v973, 0.0
      %v1116 = vmax.f32 %v978, 0.0
      %v1117 = vmax.f32 %v983, 0.0
      %v1118 = vmax.f32 %v988, 0.0
      %v1119 = vmax.f32 %v993, 0.0
      %v1120 = vmax.f32 %v998, 0.0
      %v1121 = vmax.f32 %v1003, 0.0
      %v1122 = vmax.f32 %v1008, 0.0
      %v1123 = vmax.f32 %v1013, 0.0
      %v1124 = vmax.f32 %v1018, 0.0
      %v1125 = vmax.f32 %v1023, 0.0
      %v1126 = vmax.f32 %v1028, 0.0
      %v1127 = vmax.f32 %v1033, 0.0
      %v1128 = vmax.f32 %v1038, 0.0
      %v1129 = vmax.f32 %v1043, 0.0
      %v1130 = vmax.f32 %v1048, 0.0
      %v1131 = vmax.f32 %v1053, 0.0
      %v1132 = vmax.f32 %v1058, 0.0
      %v1133 = vmax.f32 %v1063, 0.0
      %v1134 = vmax.f32 %v1068, 0.0
      %v1135 = vld [vmem:[%s3] sm:$0xff]
      %v1136 = vld [vmem:[%s3 + $0x8] sm:$0xff]
      %v1137 = vld [vmem:[%s3 + $0x10] sm:$0xff]
      %v1138 = vld [vmem:[%s3 + $0x18] sm:$0xff]
      %v1139 = vld [vmem:[%s4] sm:$0x1]
      %v1141 = vlaneseq
      %v1142 = vshrl.u32 %v1141, 7
      %v1143 = vsub.s32 0, %v1142
      %v1144 = vrot.slane %v1139, %v1143
      %vm1146 = vcmask 261120
      %v1148 = vsel %vm1146, %v1071, 0
      %v1151 = vsel %vm1146, %v1072, 0
      %v1154 = vsel %vm1146, %v1073, 0
      %v1157 = vsel %vm1146, %v1074, 0
      %v1160 = vsel %vm1146, %v1075, 0
      %v1163 = vsel %vm1146, %v1076, 0
      %v1166 = vsel %vm1146, %v1077, 0
      %v1169 = vsel %vm1146, %v1078, 0
      %v1172 = vsel %vm1146, %v1079, 0
      %v1175 = vsel %vm1146, %v1080, 0
      %v1178 = vsel %vm1146, %v1081, 0
      %v1181 = vsel %vm1146, %v1082, 0
      %v1184 = vsel %vm1146, %v1083, 0
      %v1187 = vsel %vm1146, %v1084, 0
      %v1190 = vsel %vm1146, %v1085, 0
      %v1193 = vsel %vm1146, %v1086, 0
      %v1196 = vsel %vm1146, %v1087, 0
      %v1199 = vsel %vm1146, %v1088, 0
      %v1202 = vsel %vm1146, %v1089, 0
      %v1205 = vsel %vm1146, %v1090, 0
      %v1208 = vsel %vm1146, %v1091, 0
      %v1211 = vsel %vm1146, %v1092, 0
      %v1214 = vsel %vm1146, %v1093, 0
      %v1217 = vsel %vm1146, %v1094, 0
      %v1220 = vsel %vm1146, %v1095, 0
      %v1223 = vsel %vm1146, %v1096, 0
      %v1226 = vsel %vm1146, %v1097, 0
      %v1229 = vsel %vm1146, %v1098, 0
      %v1232 = vsel %vm1146, %v1099, 0
      %v1235 = vsel %vm1146, %v1100, 0
      %v1238 = vsel %vm1146, %v1101, 0
      %v1241 = vsel %vm1146, %v1102, 0
      %v1244 = vsel %vm1146, %v1103, 0
      %v1247 = vsel %vm1146, %v1104, 0
      %v1250 = vsel %vm1146, %v1105, 0
      %v1253 = vsel %vm1146, %v1106, 0
      %v1256 = vsel %vm1146, %v1107, 0
      %v1259 = vsel %vm1146, %v1108, 0
      %v1262 = vsel %vm1146, %v1109, 0
      %v1265 = vsel %vm1146, %v1110, 0
      %v1268 = vsel %vm1146, %v1111, 0
      %v1271 = vsel %vm1146, %v1112, 0
      %v1274 = vsel %vm1146, %v1113, 0
      %v1277 = vsel %vm1146, %v1114, 0
      %v1280 = vsel %vm1146, %v1115, 0
      %v1283 = vsel %vm1146, %v1116, 0
      %v1286 = vsel %vm1146, %v1117, 0
      %v1289 = vsel %vm1146, %v1118, 0
      %v1292 = vsel %vm1146, %v1119, 0
      %v1295 = vsel %vm1146, %v1120, 0
      %v1298 = vsel %vm1146, %v1121, 0
      %v1301 = vsel %vm1146, %v1122, 0
      %v1304 = vsel %vm1146, %v1123, 0
      %v1307 = vsel %vm1146, %v1124, 0
      %v1310 = vsel %vm1146, %v1125, 0
      %v1313 = vsel %vm1146, %v1126, 0
      %v1316 = vsel %vm1146, %v1127, 0
      %v1319 = vsel %vm1146, %v1128, 0
      %v1322 = vsel %vm1146, %v1129, 0
      %v1325 = vsel %vm1146, %v1130, 0
      %v1328 = vsel %vm1146, %v1131, 0
      %v1331 = vsel %vm1146, %v1132, 0
      %v1334 = vsel %vm1146, %v1133, 0
      %v1337 = vsel %vm1146, %v1134, 0
      %1339 = vmatprep.subr.mxu0 0.0
      %1340 = vmatpush1.msra.mxu0 %v1135
      %1341 = vmatprep.subr.mxu0 0.0
      %1342 = vmatpush1.msra.mxu0 %v1136
      %1343 = vmatprep.subr.mxu0 0.0
      %1344 = vmatpush1.msra.mxu0 %v1137
      %1345 = vmatprep.subr.mxu0 0.0
      %1346 = vmatpush1.msra.mxu0 %v1138
      %1347 = vmatprep.subr.mxu0 0.0
      %1348 = vmatpush1.msra.mxu0 0.0
      %1349 = vmatprep.subr.mxu0 0.0
      %1350 = vmatpush1.msra.mxu0 0.0
      %1351 = vmatprep.subr.mxu0 0.0
      %1352 = vmatpush1.msra.mxu0 0.0
      %1353 = vmatprep.subr.mxu0 0.0
      %1354 = vmatpush1.msra.mxu0 0.0
      %1355 = vmatprep.subr.mxu0 0.0
      %1356 = vmatpush1.msra.mxu0 0.0
      %1357 = vmatprep.subr.mxu0 0.0
      %1358 = vmatpush1.msra.mxu0 0.0
      %1359 = vmatprep.subr.mxu0 0.0
      %1360 = vmatpush1.msra.mxu0 0.0
      %1361 = vmatprep.subr.mxu0 0.0
      %1362 = vmatpush1.msra.mxu0 0.0
      %1363 = vmatprep.subr.mxu0 0.0
      %1364 = vmatpush1.msra.mxu0 0.0
      %1365 = vmatprep.subr.mxu0 0.0
      %1366 = vmatpush1.msra.mxu0 0.0
      %1367 = vmatprep.subr.mxu0 0.0
      %1368 = vmatpush1.msra.mxu0 0.0
      %1369 = vmatprep.subr.mxu0 0.0
      %1370 = vmatpush1.msra.mxu0 0.0
      %1371 = vmatprep.subr.mxu0 0.0
      %1372 = vmatpush1.msra.mxu0 0.0
      %1373 = vmatprep.subr.mxu0 0.0
      %1374 = vmatpush1.msra.mxu0 0.0
      %1375 = vmatprep.subr.mxu0 0.0
      %1376 = vmatpush1.msra.mxu0 0.0
      %1377 = vmatprep.subr.mxu0 0.0
      %1378 = vmatpush1.msra.mxu0 0.0
      %1379 = vmatprep.subr.mxu0 0.0
      %1380 = vmatpush1.msra.mxu0 0.0
      %1381 = vmatprep.subr.mxu0 0.0
      %1382 = vmatpush1.msra.mxu0 0.0
      %1383 = vmatprep.subr.mxu0 0.0
      %1384 = vmatpush1.msra.mxu0 0.0
      %1385 = vmatprep.subr.mxu0 0.0
      %1386 = vmatpush1.msra.mxu0 0.0
      %1387 = vmatprep.subr.mxu0 0.0
      %1388 = vmatpush1.msra.mxu0 0.0
      %1389 = vmatprep.subr.mxu0 0.0
      %1390 = vmatpush1.msra.mxu0 0.0
      %1391 = vmatprep.subr.mxu0 0.0
      %1392 = vmatpush1.msra.mxu0 0.0
      %1393 = vmatprep.subr.mxu0 0.0
      %1394 = vmatpush1.msra.mxu0 0.0
      %1395 = vmatprep.subr.mxu0 0.0
      %1396 = vmatpush1.msra.mxu0 0.0
      %1397 = vmatprep.subr.mxu0 0.0
      %1398 = vmatpush1.msra.mxu0 0.0
      %1399 = vmatprep.subr.mxu0 0.0
      %1400 = vmatpush1.msra.mxu0 0.0
      %1401 = vmatprep.subr.mxu0 0.0
      %1402 = vmatpush1.msra.mxu0 0.0
      %1403 = vmatprep.mubr.f32.mxu0 0.0
      %1404 = vmatmul.mubr.f32.gmra.mrb[0].mxu0 %v1148
      %v1405 = vpop.f32.mrb[0].mxu0
      %v1406 = vadd.f32 %v1144, %v1405
      %v1407 = vpop.f32.mrb[0].mxu0
      %1408 = vmatprep.mubr.f32.mxu0 0.0
      %1409 = vmatmul.mubr.f32.gmra.mrb[0].mxu0 %v1151
      %v1410 = vpop.f32.mrb[0].mxu0
      %v1411 = vadd.f32 %v1144, %v1410
      %v1412 = vpop.f32.mrb[0].mxu0
      %1413 = vmatprep.mubr.f32.mxu0 0.0
      %1414 = vmatmul.mubr.f32.gmra.mrb[0].mxu0 %v1154
      %v1415 = vpop.f32.mrb[0].mxu0
      %v1416 = vadd.f32 %v1144, %v1415
      %v1417 = vpop.f32.mrb[0].mxu0
      %1418 = vmatprep.mubr.f32.mxu0 0.0
      %1419 = vmatmul.mubr.f32.gmra.mrb[0].mxu0 %v1157
      %v1420 = vpop.f32.mrb[0].mxu0
      %v1421 = vadd.f32 %v1144, %v1420
      %v1422 = vpop.f32.mrb[0].mxu0
      %1423 = vmatprep.mubr.f32.mxu0 0.0
      %1424 = vmatmul.mubr.f32.gmra.mrb[0].mxu0 %v1160
      %v1425 = vpop.f32.mrb[0].mxu0
      %v1426 = vadd.f32 %v1144, %v1425
      %v1427 = vpop.f32.mrb[0].mxu0
      %1428 = vmatprep.mubr.f32.mxu0 0.0
      %1429 = vmatmul.mubr.f32.gmra.mrb[0].mxu0 %v1163
      %v1430 = vpop.f32.mrb[0].mxu0
      %v1431 = vadd.f32 %v1144, %v1430
      %v1432 = vpop.f32.mrb[0].mxu0
      %1433 = vmatprep.mubr.f32.mxu0 0.0
      %1434 = vmatmul.mubr.f32.gmra.mrb[0].mxu0 %v1166
      %v1435 = vpop.f32.mrb[0].mxu0
      %v1436 = vadd.f32 %v1144, %v1435
      %v1437 = vpop.f32.mrb[0].mxu0
      %1438 = vmatprep.mubr.f32.mxu0 0.0
      %1439 = vmatmul.mubr.f32.gmra.mrb[0].mxu0 %v1169
      %v1440 = vpop.f32.mrb[0].mxu0
      %v1441 = vadd.f32 %v1144, %v1440
      %v1442 = vpop.f32.mrb[0].mxu0
      %1443 = vmatprep.mubr.f32.mxu0 0.0
      %1444 = vmatmul.mubr.f32.gmra.mrb[0].mxu0 %v1172
      %v1445 = vpop.f32.mrb[0].mxu0
      %v1446 = vadd.f32 %v1144, %v1445
      %v1447 = vpop.f32.mrb[0].mxu0
      %1448 = vmatprep.mubr.f32.mxu0 0.0
      %1449 = vmatmul.mubr.f32.gmra.mrb[0].mxu0 %v1175
      %v1450 = vpop.f32.mrb[0].mxu0
      %v1451 = vadd.f32 %v1144, %v1450
      %v1452 = vpop.f32.mrb[0].mxu0
      %1453 = vmatprep.mubr.f32.mxu0 0.0
      %1454 = vmatmul.mubr.f32.gmra.mrb[0].mxu0 %v1178
      %v1455 = vpop.f32.mrb[0].mxu0
      %v1456 = vadd.f32 %v1144, %v1455
      %v1457 = vpop.f32.mrb[0].mxu0
      %1458 = vmatprep.mubr.f32.mxu0 0.0
      %1459 = vmatmul.mubr.f32.gmra.mrb[0].mxu0 %v1181
      %v1460 = vpop.f32.mrb[0].mxu0
      %v1461 = vadd.f32 %v1144, %v1460
      %v1462 = vpop.f32.mrb[0].mxu0
      %1463 = vmatprep.mubr.f32.mxu0 0.0
      %1464 = vmatmul.mubr.f32.gmra.mrb[0].mxu0 %v1184
      %v1465 = vpop.f32.mrb[0].mxu0
      %v1466 = vadd.f32 %v1144, %v1465
      %v1467 = vpop.f32.mrb[0].mxu0
      %1468 = vmatprep.mubr.f32.mxu0 0.0
      %1469 = vmatmul.mubr.f32.gmra.mrb[0].mxu0 %v1187
      %v1470 = vpop.f32.mrb[0].mxu0
      %v1471 = vadd.f32 %v1144, %v1470
      %v1472 = vpop.f32.mrb[0].mxu0
      %1473 = vmatprep.mubr.f32.mxu0 0.0
      %1474 = vmatmul.mubr.f32.gmra.mrb[0].mxu0 %v1190
      %v1475 = vpop.f32.mrb[0].mxu0
      %v1476 = vadd.f32 %v1144, %v1475
      %v1477 = vpop.f32.mrb[0].mxu0
      %1478 = vmatprep.mubr.f32.mxu0 0.0
      %1479 = vmatmul.mubr.f32.gmra.mrb[0].mxu0 %v1193
      %v1480 = vpop.f32.mrb[0].mxu0
      %v1481 = vadd.f32 %v1144, %v1480
      %v1482 = vpop.f32.mrb[0].mxu0
      %1483 = vmatprep.mubr.f32.mxu0 0.0
      %1484 = vmatmul.mubr.f32.gmra.mrb[0].mxu0 %v1196
      %v1485 = vpop.f32.mrb[0].mxu0
      %v1486 = vadd.f32 %v1144, %v1485
      %v1487 = vpop.f32.mrb[0].mxu0
      %1488 = vmatprep.mubr.f32.mxu0 0.0
      %1489 = vmatmul.mubr.f32.gmra.mrb[0].mxu0 %v1199
      %v1490 = vpop.f32.mrb[0].mxu0
      %v1491 = vadd.f32 %v1144, %v1490
      %v1492 = vpop.f32.mrb[0].mxu0
      %1493 = vmatprep.mubr.f32.mxu0 0.0
      %1494 = vmatmul.mubr.f32.gmra.mrb[0].mxu0 %v1202
      %v1495 = vpop.f32.mrb[0].mxu0
      %v1496 = vadd.f32 %v1144, %v1495
      %v1497 = vpop.f32.mrb[0].mxu0
      %1498 = vmatprep.mubr.f32.mxu0 0.0
      %1499 = vmatmul.mubr.f32.gmra.mrb[0].mxu0 %v1205
      %v1500 = vpop.f32.mrb[0].mxu0
      %v1501 = vadd.f32 %v1144, %v1500
      %v1502 = vpop.f32.mrb[0].mxu0
      %1503 = vmatprep.mubr.f32.mxu0 0.0
      %1504 = vmatmul.mubr.f32.gmra.mrb[0].mxu0 %v1208
      %v1505 = vpop.f32.mrb[0].mxu0
      %v1506 = vadd.f32 %v1144, %v1505
      %v1507 = vpop.f32.mrb[0].mxu0
      %1508 = vmatprep.mubr.f32.mxu0 0.0
      %1509 = vmatmul.mubr.f32.gmra.mrb[0].mxu0 %v1211
      %v1510 = vpop.f32.mrb[0].mxu0
      %v1511 = vadd.f32 %v1144, %v1510
      %v1512 = vpop.f32.mrb[0].mxu0
      %1513 = vmatprep.mubr.f32.mxu0 0.0
      %1514 = vmatmul.mubr.f32.gmra.mrb[0].mxu0 %v1214
      %v1515 = vpop.f32.mrb[0].mxu0
      %v1516 = vadd.f32 %v1144, %v1515
      %v1517 = vpop.f32.mrb[0].mxu0
      %1518 = vmatprep.mubr.f32.mxu0 0.0
      %1519 = vmatmul.mubr.f32.gmra.mrb[0].mxu0 %v1217
      %v1520 = vpop.f32.mrb[0].mxu0
      %v1521 = vadd.f32 %v1144, %v1520
      %v1522 = vpop.f32.mrb[0].mxu0
      %1523 = vmatprep.mubr.f32.mxu0 0.0
      %1524 = vmatmul.mubr.f32.gmra.mrb[0].mxu0 %v1220
      %v1525 = vpop.f32.mrb[0].mxu0
      %v1526 = vadd.f32 %v1144, %v1525
      %v1527 = vpop.f32.mrb[0].mxu0
      %1528 = vmatprep.mubr.f32.mxu0 0.0
      %1529 = vmatmul.mubr.f32.gmra.mrb[0].mxu0 %v1223
      %v1530 = vpop.f32.mrb[0].mxu0
      %v1531 = vadd.f32 %v1144, %v1530
      %v1532 = vpop.f32.mrb[0].mxu0
      %1533 = vmatprep.mubr.f32.mxu0 0.0
      %1534 = vmatmul.mubr.f32.gmra.mrb[0].mxu0 %v1226
      %v1535 = vpop.f32.mrb[0].mxu0
      %v1536 = vadd.f32 %v1144, %v1535
      %v1537 = vpop.f32.mrb[0].mxu0
      %1538 = vmatprep.mubr.f32.mxu0 0.0
      %1539 = vmatmul.mubr.f32.gmra.mrb[0].mxu0 %v1229
      %v1540 = vpop.f32.mrb[0].mxu0
      %v1541 = vadd.f32 %v1144, %v1540
      %v1542 = vpop.f32.mrb[0].mxu0
      %1543 = vmatprep.mubr.f32.mxu0 0.0
      %1544 = vmatmul.mubr.f32.gmra.mrb[0].mxu0 %v1232
      %v1545 = vpop.f32.mrb[0].mxu0
      %v1546 = vadd.f32 %v1144, %v1545
      %v1547 = vpop.f32.mrb[0].mxu0
      %1548 = vmatprep.mubr.f32.mxu0 0.0
      %1549 = vmatmul.mubr.f32.gmra.mrb[0].mxu0 %v1235
      %v1550 = vpop.f32.mrb[0].mxu0
      %v1551 = vadd.f32 %v1144, %v1550
      %v1552 = vpop.f32.mrb[0].mxu0
      %1553 = vmatprep.mubr.f32.mxu0 0.0
      %1554 = vmatmul.mubr.f32.gmra.mrb[0].mxu0 %v1238
      %v1555 = vpop.f32.mrb[0].mxu0
      %v1556 = vadd.f32 %v1144, %v1555
      %v1557 = vpop.f32.mrb[0].mxu0
      %1558 = vmatprep.mubr.f32.mxu0 0.0
      %1559 = vmatmul.mubr.f32.gmra.mrb[0].mxu0 %v1241
      %v1560 = vpop.f32.mrb[0].mxu0
      %v1561 = vadd.f32 %v1144, %v1560
      %v1562 = vpop.f32.mrb[0].mxu0
      %1563 = vmatprep.mubr.f32.mxu0 0.0
      %1564 = vmatmul.mubr.f32.gmra.mrb[0].mxu0 %v1244
      %v1565 = vpop.f32.mrb[0].mxu0
      %v1566 = vadd.f32 %v1144, %v1565
      %v1567 = vpop.f32.mrb[0].mxu0
      %1568 = vmatprep.mubr.f32.mxu0 0.0
      %1569 = vmatmul.mubr.f32.gmra.mrb[0].mxu0 %v1247
      %v1570 = vpop.f32.mrb[0].mxu0
      %v1571 = vadd.f32 %v1144, %v1570
      %v1572 = vpop.f32.mrb[0].mxu0
      %1573 = vmatprep.mubr.f32.mxu0 0.0
      %1574 = vmatmul.mubr.f32.gmra.mrb[0].mxu0 %v1250
      %v1575 = vpop.f32.mrb[0].mxu0
      %v1576 = vadd.f32 %v1144, %v1575
      %v1577 = vpop.f32.mrb[0].mxu0
      %1578 = vmatprep.mubr.f32.mxu0 0.0
      %1579 = vmatmul.mubr.f32.gmra.mrb[0].mxu0 %v1253
      %v1580 = vpop.f32.mrb[0].mxu0
      %v1581 = vadd.f32 %v1144, %v1580
      %v1582 = vpop.f32.mrb[0].mxu0
      %1583 = vmatprep.mubr.f32.mxu0 0.0
      %1584 = vmatmul.mubr.f32.gmra.mrb[0].mxu0 %v1256
      %v1585 = vpop.f32.mrb[0].mxu0
      %v1586 = vadd.f32 %v1144, %v1585
      %v1587 = vpop.f32.mrb[0].mxu0
      %1588 = vmatprep.mubr.f32.mxu0 0.0
      %1589 = vmatmul.mubr.f32.gmra.mrb[0].mxu0 %v1259
      %v1590 = vpop.f32.mrb[0].mxu0
      %v1591 = vadd.f32 %v1144, %v1590
      %v1592 = vpop.f32.mrb[0].mxu0
      %1593 = vmatprep.mubr.f32.mxu0 0.0
      %1594 = vmatmul.mubr.f32.gmra.mrb[0].mxu0 %v1262
      %v1595 = vpop.f32.mrb[0].mxu0
      %v1596 = vadd.f32 %v1144, %v1595
      %v1597 = vpop.f32.mrb[0].mxu0
      %1598 = vmatprep.mubr.f32.mxu0 0.0
      %1599 = vmatmul.mubr.f32.gmra.mrb[0].mxu0 %v1265
      %v1600 = vpop.f32.mrb[0].mxu0
      %v1601 = vadd.f32 %v1144, %v1600
      %v1602 = vpop.f32.mrb[0].mxu0
      %1603 = vmatprep.mubr.f32.mxu0 0.0
      %1604 = vmatmul.mubr.f32.gmra.mrb[0].mxu0 %v1268
      %v1605 = vpop.f32.mrb[0].mxu0
      %v1606 = vadd.f32 %v1144, %v1605
      %v1607 = vpop.f32.mrb[0].mxu0
      %1608 = vmatprep.mubr.f32.mxu0 0.0
      %1609 = vmatmul.mubr.f32.gmra.mrb[0].mxu0 %v1271
      %v1610 = vpop.f32.mrb[0].mxu0
      %v1611 = vadd.f32 %v1144, %v1610
      %v1612 = vpop.f32.mrb[0].mxu0
      %1613 = vmatprep.mubr.f32.mxu0 0.0
      %1614 = vmatmul.mubr.f32.gmra.mrb[0].mxu0 %v1274
      %v1615 = vpop.f32.mrb[0].mxu0
      %v1616 = vadd.f32 %v1144, %v1615
      %v1617 = vpop.f32.mrb[0].mxu0
      %1618 = vmatprep.mubr.f32.mxu0 0.0
      %1619 = vmatmul.mubr.f32.gmra.mrb[0].mxu0 %v1277
      %v1620 = vpop.f32.mrb[0].mxu0
      %v1621 = vadd.f32 %v1144, %v1620
      %v1622 = vpop.f32.mrb[0].mxu0
      %1623 = vmatprep.mubr.f32.mxu0 0.0
      %1624 = vmatmul.mubr.f32.gmra.mrb[0].mxu0 %v1280
      %v1625 = vpop.f32.mrb[0].mxu0
      %v1626 = vadd.f32 %v1144, %v1625
      %v1627 = vpop.f32.mrb[0].mxu0
      %1628 = vmatprep.mubr.f32.mxu0 0.0
      %1629 = vmatmul.mubr.f32.gmra.mrb[0].mxu0 %v1283
      %v1630 = vpop.f32.mrb[0].mxu0
      %v1631 = vadd.f32 %v1144, %v1630
      %v1632 = vpop.f32.mrb[0].mxu0
      %1633 = vmatprep.mubr.f32.mxu0 0.0
      %1634 = vmatmul.mubr.f32.gmra.mrb[0].mxu0 %v1286
      %v1635 = vpop.f32.mrb[0].mxu0
      %v1636 = vadd.f32 %v1144, %v1635
      %v1637 = vpop.f32.mrb[0].mxu0
      %1638 = vmatprep.mubr.f32.mxu0 0.0
      %1639 = vmatmul.mubr.f32.gmra.mrb[0].mxu0 %v1289
      %v1640 = vpop.f32.mrb[0].mxu0
      %v1641 = vadd.f32 %v1144, %v1640
      %v1642 = vpop.f32.mrb[0].mxu0
      %1643 = vmatprep.mubr.f32.mxu0 0.0
      %1644 = vmatmul.mubr.f32.gmra.mrb[0].mxu0 %v1292
      %v1645 = vpop.f32.mrb[0].mxu0
      %v1646 = vadd.f32 %v1144, %v1645
      %v1647 = vpop.f32.mrb[0].mxu0
      %1648 = vmatprep.mubr.f32.mxu0 0.0
      %1649 = vmatmul.mubr.f32.gmra.mrb[0].mxu0 %v1295
      %v1650 = vpop.f32.mrb[0].mxu0
      %v1651 = vadd.f32 %v1144, %v1650
      %v1652 = vpop.f32.mrb[0].mxu0
      %1653 = vmatprep.mubr.f32.mxu0 0.0
      %1654 = vmatmul.mubr.f32.gmra.mrb[0].mxu0 %v1298
      %v1655 = vpop.f32.mrb[0].mxu0
      %v1656 = vadd.f32 %v1144, %v1655
      %v1657 = vpop.f32.mrb[0].mxu0
      %1658 = vmatprep.mubr.f32.mxu0 0.0
      %1659 = vmatmul.mubr.f32.gmra.mrb[0].mxu0 %v1301
      %v1660 = vpop.f32.mrb[0].mxu0
      %v1661 = vadd.f32 %v1144, %v1660
      %v1662 = vpop.f32.mrb[0].mxu0
      %1663 = vmatprep.mubr.f32.mxu0 0.0
      %1664 = vmatmul.mubr.f32.gmra.mrb[0].mxu0 %v1304
      %v1665 = vpop.f32.mrb[0].mxu0
      %v1666 = vadd.f32 %v1144, %v1665
      %v1667 = vpop.f32.mrb[0].mxu0
      %1668 = vmatprep.mubr.f32.mxu0 0.0
      %1669 = vmatmul.mubr.f32.gmra.mrb[0].mxu0 %v1307
      %v1670 = vpop.f32.mrb[0].mxu0
      %v1671 = vadd.f32 %v1144, %v1670
      %v1672 = vpop.f32.mrb[0].mxu0
      %1673 = vmatprep.mubr.f32.mxu0 0.0
      %1674 = vmatmul.mubr.f32.gmra.mrb[0].mxu0 %v1310
      %v1675 = vpop.f32.mrb[0].mxu0
      %v1676 = vadd.f32 %v1144, %v1675
      %v1677 = vpop.f32.mrb[0].mxu0
      %1678 = vmatprep.mubr.f32.mxu0 0.0
      %1679 = vmatmul.mubr.f32.gmra.mrb[0].mxu0 %v1313
      %v1680 = vpop.f32.mrb[0].mxu0
      %v1681 = vadd.f32 %v1144, %v1680
      %v1682 = vpop.f32.mrb[0].mxu0
      %1683 = vmatprep.mubr.f32.mxu0 0.0
      %1684 = vmatmul.mubr.f32.gmra.mrb[0].mxu0 %v1316
      %v1685 = vpop.f32.mrb[0].mxu0
      %v1686 = vadd.f32 %v1144, %v1685
      %v1687 = vpop.f32.mrb[0].mxu0
      %1688 = vmatprep.mubr.f32.mxu0 0.0
      %1689 = vmatmul.mubr.f32.gmra.mrb[0].mxu0 %v1319
      %v1690 = vpop.f32.mrb[0].mxu0
      %v1691 = vadd.f32 %v1144, %v1690
      %v1692 = vpop.f32.mrb[0].mxu0
      %1693 = vmatprep.mubr.f32.mxu0 0.0
      %1694 = vmatmul.mubr.f32.gmra.mrb[0].mxu0 %v1322
      %v1695 = vpop.f32.mrb[0].mxu0
      %v1696 = vadd.f32 %v1144, %v1695
      %v1697 = vpop.f32.mrb[0].mxu0
      %1698 = vmatprep.mubr.f32.mxu0 0.0
      %1699 = vmatmul.mubr.f32.gmra.mrb[0].mxu0 %v1325
      %v1700 = vpop.f32.mrb[0].mxu0
      %v1701 = vadd.f32 %v1144, %v1700
      %v1702 = vpop.f32.mrb[0].mxu0
      %1703 = vmatprep.mubr.f32.mxu0 0.0
      %1704 = vmatmul.mubr.f32.gmra.mrb[0].mxu0 %v1328
      %v1705 = vpop.f32.mrb[0].mxu0
      %v1706 = vadd.f32 %v1144, %v1705
      %v1707 = vpop.f32.mrb[0].mxu0
      %1708 = vmatprep.mubr.f32.mxu0 0.0
      %1709 = vmatmul.mubr.f32.gmra.mrb[0].mxu0 %v1331
      %v1710 = vpop.f32.mrb[0].mxu0
      %v1711 = vadd.f32 %v1144, %v1710
      %v1712 = vpop.f32.mrb[0].mxu0
      %1713 = vmatprep.mubr.f32.mxu0 0.0
      %1714 = vmatmul.mubr.f32.gmra.mrb[0].mxu0 %v1334
      %v1715 = vpop.f32.mrb[0].mxu0
      %v1716 = vadd.f32 %v1144, %v1715
      %v1717 = vpop.f32.mrb[0].mxu0
      %1718 = vmatprep.mubr.f32.mxu0 0.0
      %1719 = vmatmul.mubr.f32.gmra.mrb[0].mxu0 %v1337
      %v1720 = vpop.f32.mrb[0].mxu0
      %v1721 = vadd.f32 %v1144, %v1720
      %v1722 = vpop.f32.mrb[0].mxu0
      %1723 = vdwg.mxu0
      %v1724 = vmul.f32 %v1406, %v1406
      %v1725 = vmul.f32 %v1411, %v1411
      %v1726 = vmul.f32 %v1416, %v1416
      %v1727 = vmul.f32 %v1421, %v1421
      %v1728 = vmul.f32 %v1426, %v1426
      %v1729 = vmul.f32 %v1431, %v1431
      %v1730 = vmul.f32 %v1436, %v1436
      %v1731 = vmul.f32 %v1441, %v1441
      %v1732 = vmul.f32 %v1446, %v1446
      %v1733 = vmul.f32 %v1451, %v1451
      %v1734 = vmul.f32 %v1456, %v1456
      %v1735 = vmul.f32 %v1461, %v1461
      %v1736 = vmul.f32 %v1466, %v1466
      %v1737 = vmul.f32 %v1471, %v1471
      %v1738 = vmul.f32 %v1476, %v1476
      %v1739 = vmul.f32 %v1481, %v1481
      %v1740 = vmul.f32 %v1486, %v1486
      %v1741 = vmul.f32 %v1491, %v1491
      %v1742 = vmul.f32 %v1496, %v1496
      %v1743 = vmul.f32 %v1501, %v1501
      %v1744 = vmul.f32 %v1506, %v1506
      %v1745 = vmul.f32 %v1511, %v1511
      %v1746 = vmul.f32 %v1516, %v1516
      %v1747 = vmul.f32 %v1521, %v1521
      %v1748 = vmul.f32 %v1526, %v1526
      %v1749 = vmul.f32 %v1531, %v1531
      %v1750 = vmul.f32 %v1536, %v1536
      %v1751 = vmul.f32 %v1541, %v1541
      %v1752 = vmul.f32 %v1546, %v1546
      %v1753 = vmul.f32 %v1551, %v1551
      %v1754 = vmul.f32 %v1556, %v1556
      %v1755 = vmul.f32 %v1561, %v1561
      %v1756 = vmul.f32 %v1566, %v1566
      %v1757 = vmul.f32 %v1571, %v1571
      %v1758 = vmul.f32 %v1576, %v1576
      %v1759 = vmul.f32 %v1581, %v1581
      %v1760 = vmul.f32 %v1586, %v1586
      %v1761 = vmul.f32 %v1591, %v1591
      %v1762 = vmul.f32 %v1596, %v1596
      %v1763 = vmul.f32 %v1601, %v1601
      %v1764 = vmul.f32 %v1606, %v1606
      %v1765 = vmul.f32 %v1611, %v1611
      %v1766 = vmul.f32 %v1616, %v1616
      %v1767 = vmul.f32 %v1621, %v1621
      %v1768 = vmul.f32 %v1626, %v1626
      %v1769 = vmul.f32 %v1631, %v1631
      %v1770 = vmul.f32 %v1636, %v1636
      %v1771 = vmul.f32 %v1641, %v1641
      %v1772 = vmul.f32 %v1646, %v1646
      %v1773 = vmul.f32 %v1651, %v1651
      %v1774 = vmul.f32 %v1656, %v1656
      %v1775 = vmul.f32 %v1661, %v1661
      %v1776 = vmul.f32 %v1666, %v1666
      %v1777 = vmul.f32 %v1671, %v1671
      %v1778 = vmul.f32 %v1676, %v1676
      %v1779 = vmul.f32 %v1681, %v1681
      %v1780 = vmul.f32 %v1686, %v1686
      %v1781 = vmul.f32 %v1691, %v1691
      %v1782 = vmul.f32 %v1696, %v1696
      %v1783 = vmul.f32 %v1701, %v1701
      %v1784 = vmul.f32 %v1706, %v1706
      %v1785 = vmul.f32 %v1711, %v1711
      %v1786 = vmul.f32 %v1716, %v1716
      %v1787 = vmul.f32 %v1721, %v1721
      %v1788 = vsel %vm1146, %v1724, 0.0
      %1789 = vadd.xlane.f32.xlu0 %v1788
      %v1790 = vpop.xlane.xlu0 %1789
      %v1791 = vsel %vm1146, %v1725, 0.0
      %1792 = vadd.xlane.f32.xlu0 %v1791
      %v1793 = vpop.xlane.xlu0 %1792
      %v1794 = vsel %vm1146, %v1726, 0.0
      %1795 = vadd.xlane.f32.xlu0 %v1794
      %v1796 = vpop.xlane.xlu0 %1795
      %v1797 = vsel %vm1146, %v1727, 0.0
      %1798 = vadd.xlane.f32.xlu0 %v1797
      %v1799 = vpop.xlane.xlu0 %1798
      %v1800 = vsel %vm1146, %v1728, 0.0
      %1801 = vadd.xlane.f32.xlu0 %v1800
      %v1802 = vpop.xlane.xlu0 %1801
      %v1803 = vsel %vm1146, %v1729, 0.0
      %1804 = vadd.xlane.f32.xlu0 %v1803
      %v1805 = vpop.xlane.xlu0 %1804
      %v1806 = vsel %vm1146, %v1730, 0.0
      %1807 = vadd.xlane.f32.xlu0 %v1806
      %v1808 = vpop.xlane.xlu0 %1807
      %v1809 = vsel %vm1146, %v1731, 0.0
      %1810 = vadd.xlane.f32.xlu0 %v1809
      %v1811 = vpop.xlane.xlu0 %1810
      %v1812 = vsel %vm1146, %v1732, 0.0
      %1813 = vadd.xlane.f32.xlu0 %v1812
      %v1814 = vpop.xlane.xlu0 %1813
      %v1815 = vsel %vm1146, %v1733, 0.0
      %1816 = vadd.xlane.f32.xlu0 %v1815
      %v1817 = vpop.xlane.xlu0 %1816
      %v1818 = vsel %vm1146, %v1734, 0.0
      %1819 = vadd.xlane.f32.xlu0 %v1818
      %v1820 = vpop.xlane.xlu0 %1819
      %v1821 = vsel %vm1146, %v1735, 0.0
      %1822 = vadd.xlane.f32.xlu0 %v1821
      %v1823 = vpop.xlane.xlu0 %1822
      %v1824 = vsel %vm1146, %v1736, 0.0
      %1825 = vadd.xlane.f32.xlu0 %v1824
      %v1826 = vpop.xlane.xlu0 %1825
      %v1827 = vsel %vm1146, %v1737, 0.0
      %1828 = vadd.xlane.f32.xlu0 %v1827
      %v1829 = vpop.xlane.xlu0 %1828
      %v1830 = vsel %vm1146, %v1738, 0.0
      %1831 = vadd.xlane.f32.xlu0 %v1830
      %v1832 = vpop.xlane.xlu0 %1831
      %v1833 = vsel %vm1146, %v1739, 0.0
      %1834 = vadd.xlane.f32.xlu0 %v1833
      %v1835 = vpop.xlane.xlu0 %1834
      %v1836 = vsel %vm1146, %v1740, 0.0
      %1837 = vadd.xlane.f32.xlu0 %v1836
      %v1838 = vpop.xlane.xlu0 %1837
      %v1839 = vsel %vm1146, %v1741, 0.0
      %1840 = vadd.xlane.f32.xlu0 %v1839
      %v1841 = vpop.xlane.xlu0 %1840
      %v1842 = vsel %vm1146, %v1742, 0.0
      %1843 = vadd.xlane.f32.xlu0 %v1842
      %v1844 = vpop.xlane.xlu0 %1843
      %v1845 = vsel %vm1146, %v1743, 0.0
      %1846 = vadd.xlane.f32.xlu0 %v1845
      %v1847 = vpop.xlane.xlu0 %1846
      %v1848 = vsel %vm1146, %v1744, 0.0
      %1849 = vadd.xlane.f32.xlu0 %v1848
      %v1850 = vpop.xlane.xlu0 %1849
      %v1851 = vsel %vm1146, %v1745, 0.0
      %1852 = vadd.xlane.f32.xlu0 %v1851
      %v1853 = vpop.xlane.xlu0 %1852
      %v1854 = vsel %vm1146, %v1746, 0.0
      %1855 = vadd.xlane.f32.xlu0 %v1854
      %v1856 = vpop.xlane.xlu0 %1855
      %v1857 = vsel %vm1146, %v1747, 0.0
      %1858 = vadd.xlane.f32.xlu0 %v1857
      %v1859 = vpop.xlane.xlu0 %1858
      %v1860 = vsel %vm1146, %v1748, 0.0
      %1861 = vadd.xlane.f32.xlu0 %v1860
      %v1862 = vpop.xlane.xlu0 %1861
      %v1863 = vsel %vm1146, %v1749, 0.0
      %1864 = vadd.xlane.f32.xlu0 %v1863
      %v1865 = vpop.xlane.xlu0 %1864
      %v1866 = vsel %vm1146, %v1750, 0.0
      %1867 = vadd.xlane.f32.xlu0 %v1866
      %v1868 = vpop.xlane.xlu0 %1867
      %v1869 = vsel %vm1146, %v1751, 0.0
      %1870 = vadd.xlane.f32.xlu0 %v1869
      %v1871 = vpop.xlane.xlu0 %1870
      %v1872 = vsel %vm1146, %v1752, 0.0
      %1873 = vadd.xlane.f32.xlu0 %v1872
      %v1874 = vpop.xlane.xlu0 %1873
      %v1875 = vsel %vm1146, %v1753, 0.0
      %1876 = vadd.xlane.f32.xlu0 %v1875
      %v1877 = vpop.xlane.xlu0 %1876
      %v1878 = vsel %vm1146, %v1754, 0.0
      %1879 = vadd.xlane.f32.xlu0 %v1878
      %v1880 = vpop.xlane.xlu0 %1879
      %v1881 = vsel %vm1146, %v1755, 0.0
      %1882 = vadd.xlane.f32.xlu0 %v1881
      %v1883 = vpop.xlane.xlu0 %1882
      %v1884 = vsel %vm1146, %v1756, 0.0
      %1885 = vadd.xlane.f32.xlu0 %v1884
      %v1886 = vpop.xlane.xlu0 %1885
      %v1887 = vsel %vm1146, %v1757, 0.0
      %1888 = vadd.xlane.f32.xlu0 %v1887
      %v1889 = vpop.xlane.xlu0 %1888
      %v1890 = vsel %vm1146, %v1758, 0.0
      %1891 = vadd.xlane.f32.xlu0 %v1890
      %v1892 = vpop.xlane.xlu0 %1891
      %v1893 = vsel %vm1146, %v1759, 0.0
      %1894 = vadd.xlane.f32.xlu0 %v1893
      %v1895 = vpop.xlane.xlu0 %1894
      %v1896 = vsel %vm1146, %v1760, 0.0
      %1897 = vadd.xlane.f32.xlu0 %v1896
      %v1898 = vpop.xlane.xlu0 %1897
      %v1899 = vsel %vm1146, %v1761, 0.0
      %1900 = vadd.xlane.f32.xlu0 %v1899
      %v1901 = vpop.xlane.xlu0 %1900
      %v1902 = vsel %vm1146, %v1762, 0.0
      %1903 = vadd.xlane.f32.xlu0 %v1902
      %v1904 = vpop.xlane.xlu0 %1903
      %v1905 = vsel %vm1146, %v1763, 0.0
      %1906 = vadd.xlane.f32.xlu0 %v1905
      %v1907 = vpop.xlane.xlu0 %1906
      %v1908 = vsel %vm1146, %v1764, 0.0
      %1909 = vadd.xlane.f32.xlu0 %v1908
      %v1910 = vpop.xlane.xlu0 %1909
      %v1911 = vsel %vm1146, %v1765, 0.0
      %1912 = vadd.xlane.f32.xlu0 %v1911
      %v1913 = vpop.xlane.xlu0 %1912
      %v1914 = vsel %vm1146, %v1766, 0.0
      %1915 = vadd.xlane.f32.xlu0 %v1914
      %v1916 = vpop.xlane.xlu0 %1915
      %v1917 = vsel %vm1146, %v1767, 0.0
      %1918 = vadd.xlane.f32.xlu0 %v1917
      %v1919 = vpop.xlane.xlu0 %1918
      %v1920 = vsel %vm1146, %v1768, 0.0
      %1921 = vadd.xlane.f32.xlu0 %v1920
      %v1922 = vpop.xlane.xlu0 %1921
      %v1923 = vsel %vm1146, %v1769, 0.0
      %1924 = vadd.xlane.f32.xlu0 %v1923
      %v1925 = vpop.xlane.xlu0 %1924
      %v1926 = vsel %vm1146, %v1770, 0.0
      %1927 = vadd.xlane.f32.xlu0 %v1926
      %v1928 = vpop.xlane.xlu0 %1927
      %v1929 = vsel %vm1146, %v1771, 0.0
      %1930 = vadd.xlane.f32.xlu0 %v1929
      %v1931 = vpop.xlane.xlu0 %1930
      %v1932 = vsel %vm1146, %v1772, 0.0
      %1933 = vadd.xlane.f32.xlu0 %v1932
      %v1934 = vpop.xlane.xlu0 %1933
      %v1935 = vsel %vm1146, %v1773, 0.0
      %1936 = vadd.xlane.f32.xlu0 %v1935
      %v1937 = vpop.xlane.xlu0 %1936
      %v1938 = vsel %vm1146, %v1774, 0.0
      %1939 = vadd.xlane.f32.xlu0 %v1938
      %v1940 = vpop.xlane.xlu0 %1939
      %v1941 = vsel %vm1146, %v1775, 0.0
      %1942 = vadd.xlane.f32.xlu0 %v1941
      %v1943 = vpop.xlane.xlu0 %1942
      %v1944 = vsel %vm1146, %v1776, 0.0
      %1945 = vadd.xlane.f32.xlu0 %v1944
      %v1946 = vpop.xlane.xlu0 %1945
      %v1947 = vsel %vm1146, %v1777, 0.0
      %1948 = vadd.xlane.f32.xlu0 %v1947
      %v1949 = vpop.xlane.xlu0 %1948
      %v1950 = vsel %vm1146, %v1778, 0.0
      %1951 = vadd.xlane.f32.xlu0 %v1950
      %v1952 = vpop.xlane.xlu0 %1951
      %v1953 = vsel %vm1146, %v1779, 0.0
      %1954 = vadd.xlane.f32.xlu0 %v1953
      %v1955 = vpop.xlane.xlu0 %1954
      %v1956 = vsel %vm1146, %v1780, 0.0
      %1957 = vadd.xlane.f32.xlu0 %v1956
      %v1958 = vpop.xlane.xlu0 %1957
      %v1959 = vsel %vm1146, %v1781, 0.0
      %1960 = vadd.xlane.f32.xlu0 %v1959
      %v1961 = vpop.xlane.xlu0 %1960
      %v1962 = vsel %vm1146, %v1782, 0.0
      %1963 = vadd.xlane.f32.xlu0 %v1962
      %v1964 = vpop.xlane.xlu0 %1963
      %v1965 = vsel %vm1146, %v1783, 0.0
      %1966 = vadd.xlane.f32.xlu0 %v1965
      %v1967 = vpop.xlane.xlu0 %1966
      %v1968 = vsel %vm1146, %v1784, 0.0
      %1969 = vadd.xlane.f32.xlu0 %v1968
      %v1970 = vpop.xlane.xlu0 %1969
      %v1971 = vsel %vm1146, %v1785, 0.0
      %1972 = vadd.xlane.f32.xlu0 %v1971
      %v1973 = vpop.xlane.xlu0 %1972
      %v1974 = vsel %vm1146, %v1786, 0.0
      %1975 = vadd.xlane.f32.xlu0 %v1974
      %v1976 = vpop.xlane.xlu0 %1975
      %v1977 = vsel %vm1146, %v1787, 0.0
      %1978 = vadd.xlane.f32.xlu0 %v1977
      %v1979 = vpop.xlane.xlu0 %1978
      %v1980 = vld [vmem:[%s6] sm:$0x3]
      %v1982 = vlaneseq
      %v1983 = vshrl.u32 %v1982, 7
      %v1984 = vsub.s32 0, %v1983
      %v1985 = vrot.slane %v1980, %v1984
      %v1986 = vlaneseq
      %v1987 = vshrl.u32 %v1986, 7
      %v1988 = vsub.s32 1, %v1987
      %v1989 = vrot.slane %v1980, %v1988
      %v1992 = vadd.f32 %v1790, %v1985
      %v1993 = vadd.f32 %v1790, %v1989
      %v1994 = vadd.f32 %v1793, %v1985
      %v1995 = vadd.f32 %v1793, %v1989
      %v1996 = vadd.f32 %v1796, %v1985
      %v1997 = vadd.f32 %v1796, %v1989
      %v1998 = vadd.f32 %v1799, %v1985
      %v1999 = vadd.f32 %v1799, %v1989
      %v2000 = vadd.f32 %v1802, %v1985
      %v2001 = vadd.f32 %v1802, %v1989
      %v2002 = vadd.f32 %v1805, %v1985
      %v2003 = vadd.f32 %v1805, %v1989
      %v2004 = vadd.f32 %v1808, %v1985
      %v2005 = vadd.f32 %v1808, %v1989
      %v2006 = vadd.f32 %v1811, %v1985
      %v2007 = vadd.f32 %v1811, %v1989
      %v2008 = vadd.f32 %v1814, %v1985
      %v2009 = vadd.f32 %v1814, %v1989
      %v2010 = vadd.f32 %v1817, %v1985
      %v2011 = vadd.f32 %v1817, %v1989
      %v2012 = vadd.f32 %v1820, %v1985
      %v2013 = vadd.f32 %v1820, %v1989
      %v2014 = vadd.f32 %v1823, %v1985
      %v2015 = vadd.f32 %v1823, %v1989
      %v2016 = vadd.f32 %v1826, %v1985
      %v2017 = vadd.f32 %v1826, %v1989
      %v2018 = vadd.f32 %v1829, %v1985
      %v2019 = vadd.f32 %v1829, %v1989
      %v2020 = vadd.f32 %v1832, %v1985
      %v2021 = vadd.f32 %v1832, %v1989
      %v2022 = vadd.f32 %v1835, %v1985
      %v2023 = vadd.f32 %v1835, %v1989
      %v2024 = vadd.f32 %v1838, %v1985
      %v2025 = vadd.f32 %v1838, %v1989
      %v2026 = vadd.f32 %v1841, %v1985
      %v2027 = vadd.f32 %v1841, %v1989
      %v2028 = vadd.f32 %v1844, %v1985
      %v2029 = vadd.f32 %v1844, %v1989
      %v2030 = vadd.f32 %v1847, %v1985
      %v2031 = vadd.f32 %v1847, %v1989
      %v2032 = vadd.f32 %v1850, %v1985
      %v2033 = vadd.f32 %v1850, %v1989
      %v2034 = vadd.f32 %v1853, %v1985
      %v2035 = vadd.f32 %v1853, %v1989
      %v2036 = vadd.f32 %v1856, %v1985
      %v2037 = vadd.f32 %v1856, %v1989
      %v2038 = vadd.f32 %v1859, %v1985
      %v2039 = vadd.f32 %v1859, %v1989
      %v2040 = vadd.f32 %v1862, %v1985
      %v2041 = vadd.f32 %v1862, %v1989
      %v2042 = vadd.f32 %v1865, %v1985
      %v2043 = vadd.f32 %v1865, %v1989
      %v2044 = vadd.f32 %v1868, %v1985
      %v2045 = vadd.f32 %v1868, %v1989
      %v2046 = vadd.f32 %v1871, %v1985
      %v2047 = vadd.f32 %v1871, %v1989
      %v2048 = vadd.f32 %v1874, %v1985
      %v2049 = vadd.f32 %v1874, %v1989
      %v2050 = vadd.f32 %v1877, %v1985
      %v2051 = vadd.f32 %v1877, %v1989
      %v2052 = vadd.f32 %v1880, %v1985
      %v2053 = vadd.f32 %v1880, %v1989
      %v2054 = vadd.f32 %v1883, %v1985
      %v2055 = vadd.f32 %v1883, %v1989
      %v2056 = vadd.f32 %v1886, %v1985
      %v2057 = vadd.f32 %v1886, %v1989
      %v2058 = vadd.f32 %v1889, %v1985
      %v2059 = vadd.f32 %v1889, %v1989
      %v2060 = vadd.f32 %v1892, %v1985
      %v2061 = vadd.f32 %v1892, %v1989
      %v2062 = vadd.f32 %v1895, %v1985
      %v2063 = vadd.f32 %v1895, %v1989
      %v2064 = vadd.f32 %v1898, %v1985
      %v2065 = vadd.f32 %v1898, %v1989
      %v2066 = vadd.f32 %v1901, %v1985
      %v2067 = vadd.f32 %v1901, %v1989
      %v2068 = vadd.f32 %v1904, %v1985
      %v2069 = vadd.f32 %v1904, %v1989
      %v2070 = vadd.f32 %v1907, %v1985
      %v2071 = vadd.f32 %v1907, %v1989
      %v2072 = vadd.f32 %v1910, %v1985
      %v2073 = vadd.f32 %v1910, %v1989
      %v2074 = vadd.f32 %v1913, %v1985
      %v2075 = vadd.f32 %v1913, %v1989
      %v2076 = vadd.f32 %v1916, %v1985
      %v2077 = vadd.f32 %v1916, %v1989
      %v2078 = vadd.f32 %v1919, %v1985
      %v2079 = vadd.f32 %v1919, %v1989
      %v2080 = vadd.f32 %v1922, %v1985
      %v2081 = vadd.f32 %v1922, %v1989
      %v2082 = vadd.f32 %v1925, %v1985
      %v2083 = vadd.f32 %v1925, %v1989
      %v2084 = vadd.f32 %v1928, %v1985
      %v2085 = vadd.f32 %v1928, %v1989
      %v2086 = vadd.f32 %v1931, %v1985
      %v2087 = vadd.f32 %v1931, %v1989
      %v2088 = vadd.f32 %v1934, %v1985
      %v2089 = vadd.f32 %v1934, %v1989
      %v2090 = vadd.f32 %v1937, %v1985
      %v2091 = vadd.f32 %v1937, %v1989
      %v2092 = vadd.f32 %v1940, %v1985
      %v2093 = vadd.f32 %v1940, %v1989
      %v2094 = vadd.f32 %v1943, %v1985
      %v2095 = vadd.f32 %v1943, %v1989
      %v2096 = vadd.f32 %v1946, %v1985
      %v2097 = vadd.f32 %v1946, %v1989
      %v2098 = vadd.f32 %v1949, %v1985
      %v2099 = vadd.f32 %v1949, %v1989
      %v2100 = vadd.f32 %v1952, %v1985
      %v2101 = vadd.f32 %v1952, %v1989
      %v2102 = vadd.f32 %v1955, %v1985
      %v2103 = vadd.f32 %v1955, %v1989
      %v2104 = vadd.f32 %v1958, %v1985
      %v2105 = vadd.f32 %v1958, %v1989
      %v2106 = vadd.f32 %v1961, %v1985
      %v2107 = vadd.f32 %v1961, %v1989
      %v2108 = vadd.f32 %v1964, %v1985
      %v2109 = vadd.f32 %v1964, %v1989
      %v2110 = vadd.f32 %v1967, %v1985
      %v2111 = vadd.f32 %v1967, %v1989
      %v2112 = vadd.f32 %v1970, %v1985
      %v2113 = vadd.f32 %v1970, %v1989
      %v2114 = vadd.f32 %v1973, %v1985
      %v2115 = vadd.f32 %v1973, %v1989
      %v2116 = vadd.f32 %v1976, %v1985
      %v2117 = vadd.f32 %v1976, %v1989
      %v2118 = vadd.f32 %v1979, %v1985
      %v2119 = vadd.f32 %v1979, %v1989
      %v2120 = vld [vmem:[%s5] sm:$0xff]
      %v2121 = vld [vmem:[%s5 + $0x8] sm:$0xff]
      %v2122 = vld [vmem:[%s5 + $0x10] sm:$0xff]
      %v2123 = vld [vmem:[%s5 + $0x18] sm:$0xff]
      %v2124 = vld [vmem:[%s5 + $0x20] sm:$0xff]
      %v2125 = vld [vmem:[%s5 + $0x28] sm:$0xff]
      %v2126 = vld [vmem:[%s5 + $0x30] sm:$0xff]
      %v2127 = vld [vmem:[%s5 + $0x38] sm:$0xff]
      %v2129 = vsel %vm1146, %v1406, 0
      %v2132 = vsel %vm1146, %v1411, 0
      %v2135 = vsel %vm1146, %v1416, 0
      %v2138 = vsel %vm1146, %v1421, 0
      %v2141 = vsel %vm1146, %v1426, 0
      %v2144 = vsel %vm1146, %v1431, 0
      %v2147 = vsel %vm1146, %v1436, 0
      %v2150 = vsel %vm1146, %v1441, 0
      %v2153 = vsel %vm1146, %v1446, 0
      %v2156 = vsel %vm1146, %v1451, 0
      %v2159 = vsel %vm1146, %v1456, 0
      %v2162 = vsel %vm1146, %v1461, 0
      %v2165 = vsel %vm1146, %v1466, 0
      %v2168 = vsel %vm1146, %v1471, 0
      %v2171 = vsel %vm1146, %v1476, 0
      %v2174 = vsel %vm1146, %v1481, 0
      %v2177 = vsel %vm1146, %v1486, 0
      %v2180 = vsel %vm1146, %v1491, 0
      %v2183 = vsel %vm1146, %v1496, 0
      %v2186 = vsel %vm1146, %v1501, 0
      %v2189 = vsel %vm1146, %v1506, 0
      %v2192 = vsel %vm1146, %v1511, 0
      %v2195 = vsel %vm1146, %v1516, 0
      %v2198 = vsel %vm1146, %v1521, 0
      %v2201 = vsel %vm1146, %v1526, 0
      %v2204 = vsel %vm1146, %v1531, 0
      %v2207 = vsel %vm1146, %v1536, 0
      %v2210 = vsel %vm1146, %v1541, 0
      %v2213 = vsel %vm1146, %v1546, 0
      %v2216 = vsel %vm1146, %v1551, 0
      %v2219 = vsel %vm1146, %v1556, 0
      %v2222 = vsel %vm1146, %v1561, 0
      %v2225 = vsel %vm1146, %v1566, 0
      %v2228 = vsel %vm1146, %v1571, 0
      %v2231 = vsel %vm1146, %v1576, 0
      %v2234 = vsel %vm1146, %v1581, 0
      %v2237 = vsel %vm1146, %v1586, 0
      %v2240 = vsel %vm1146, %v1591, 0
      %v2243 = vsel %vm1146, %v1596, 0
      %v2246 = vsel %vm1146, %v1601, 0
      %v2249 = vsel %vm1146, %v1606, 0
      %v2252 = vsel %vm1146, %v1611, 0
      %v2255 = vsel %vm1146, %v1616, 0
      %v2258 = vsel %vm1146, %v1621, 0
      %v2261 = vsel %vm1146, %v1626, 0
      %v2264 = vsel %vm1146, %v1631, 0
      %v2267 = vsel %vm1146, %v1636, 0
      %v2270 = vsel %vm1146, %v1641, 0
      %v2273 = vsel %vm1146, %v1646, 0
      %v2276 = vsel %vm1146, %v1651, 0
      %v2279 = vsel %vm1146, %v1656, 0
      %v2282 = vsel %vm1146, %v1661, 0
      %v2285 = vsel %vm1146, %v1666, 0
      %v2288 = vsel %vm1146, %v1671, 0
      %v2291 = vsel %vm1146, %v1676, 0
      %v2294 = vsel %vm1146, %v1681, 0
      %v2297 = vsel %vm1146, %v1686, 0
      %v2300 = vsel %vm1146, %v1691, 0
      %v2303 = vsel %vm1146, %v1696, 0
      %v2306 = vsel %vm1146, %v1701, 0
      %v2309 = vsel %vm1146, %v1706, 0
      %v2312 = vsel %vm1146, %v1711, 0
      %v2315 = vsel %vm1146, %v1716, 0
      %v2318 = vsel %vm1146, %v1721, 0
      %2320 = vmatprep.subr.mxu0 %v2121
      %2321 = vmatpush1.msra.mxu0 %v2120
      %2322 = vmatprep.subr.mxu0 %v2123
      %2323 = vmatpush1.msra.mxu0 %v2122
      %2324 = vmatprep.subr.mxu0 %v2125
      %2325 = vmatpush1.msra.mxu0 %v2124
      %2326 = vmatprep.subr.mxu0 %v2127
      %2327 = vmatpush1.msra.mxu0 %v2126
      %2328 = vmatprep.subr.mxu0 0.0
      %2329 = vmatpush1.msra.mxu0 0.0
      %2330 = vmatprep.subr.mxu0 0.0
      %2331 = vmatpush1.msra.mxu0 0.0
      %2332 = vmatprep.subr.mxu0 0.0
      %2333 = vmatpush1.msra.mxu0 0.0
      %2334 = vmatprep.subr.mxu0 0.0
      %2335 = vmatpush1.msra.mxu0 0.0
      %2336 = vmatprep.subr.mxu0 0.0
      %2337 = vmatpush1.msra.mxu0 0.0
      %2338 = vmatprep.subr.mxu0 0.0
      %2339 = vmatpush1.msra.mxu0 0.0
      %2340 = vmatprep.subr.mxu0 0.0
      %2341 = vmatpush1.msra.mxu0 0.0
      %2342 = vmatprep.subr.mxu0 0.0
      %2343 = vmatpush1.msra.mxu0 0.0
      %2344 = vmatprep.subr.mxu0 0.0
      %2345 = vmatpush1.msra.mxu0 0.0
      %2346 = vmatprep.subr.mxu0 0.0
      %2347 = vmatpush1.msra.mxu0 0.0
      %2348 = vmatprep.subr.mxu0 0.0
      %2349 = vmatpush1.msra.mxu0 0.0
      %2350 = vmatprep.subr.mxu0 0.0
      %2351 = vmatpush1.msra.mxu0 0.0
      %2352 = vmatprep.subr.mxu0 0.0
      %2353 = vmatpush1.msra.mxu0 0.0
      %2354 = vmatprep.subr.mxu0 0.0
      %2355 = vmatpush1.msra.mxu0 0.0
      %2356 = vmatprep.subr.mxu0 0.0
      %2357 = vmatpush1.msra.mxu0 0.0
      %2358 = vmatprep.subr.mxu0 0.0
      %2359 = vmatpush1.msra.mxu0 0.0
      %2360 = vmatprep.subr.mxu0 0.0
      %2361 = vmatpush1.msra.mxu0 0.0
      %2362 = vmatprep.subr.mxu0 0.0
      %2363 = vmatpush1.msra.mxu0 0.0
      %2364 = vmatprep.subr.mxu0 0.0
      %2365 = vmatpush1.msra.mxu0 0.0
      %2366 = vmatprep.subr.mxu0 0.0
      %2367 = vmatpush1.msra.mxu0 0.0
      %2368 = vmatprep.subr.mxu0 0.0
      %2369 = vmatpush1.msra.mxu0 0.0
      %2370 = vmatprep.subr.mxu0 0.0
      %2371 = vmatpush1.msra.mxu0 0.0
      %2372 = vmatprep.subr.mxu0 0.0
      %2373 = vmatpush1.msra.mxu0 0.0
      %2374 = vmatprep.subr.mxu0 0.0
      %2375 = vmatpush1.msra.mxu0 0.0
      %2376 = vmatprep.subr.mxu0 0.0
      %2377 = vmatpush1.msra.mxu0 0.0
      %2378 = vmatprep.subr.mxu0 0.0
      %2379 = vmatpush1.msra.mxu0 0.0
      %2380 = vmatprep.subr.mxu0 0.0
      %2381 = vmatpush1.msra.mxu0 0.0
      %2382 = vmatprep.subr.mxu0 0.0
      %2383 = vmatpush1.msra.mxu0 0.0
      %2384 = vmatprep.mubr.f32.mxu0 0.0
      %2385 = vmatmul.mubr.f32.gmra.mrb[0].mxu0 %v2129
      %v2386 = vpop.f32.mrb[0].mxu0
      %v2387 = vadd.f32 0.0, %v2386
      %v2388 = vpop.f32.mrb[0].mxu0
      %v2389 = vadd.f32 0.0, %v2388
      %2390 = vmatprep.mubr.f32.mxu0 0.0
      %2391 = vmatmul.mubr.f32.gmra.mrb[0].mxu0 %v2132
      %v2392 = vpop.f32.mrb[0].mxu0
      %v2393 = vadd.f32 0.0, %v2392
      %v2394 = vpop.f32.mrb[0].mxu0
      %v2395 = vadd.f32 0.0, %v2394
      %2396 = vmatprep.mubr.f32.mxu0 0.0
      %2397 = vmatmul.mubr.f32.gmra.mrb[0].mxu0 %v2135
      %v2398 = vpop.f32.mrb[0].mxu0
      %v2399 = vadd.f32 0.0, %v2398
      %v2400 = vpop.f32.mrb[0].mxu0
      %v2401 = vadd.f32 0.0, %v2400
      %2402 = vmatprep.mubr.f32.mxu0 0.0
      %2403 = vmatmul.mubr.f32.gmra.mrb[0].mxu0 %v2138
      %v2404 = vpop.f32.mrb[0].mxu0
      %v2405 = vadd.f32 0.0, %v2404
      %v2406 = vpop.f32.mrb[0].mxu0
      %v2407 = vadd.f32 0.0, %v2406
      %2408 = vmatprep.mubr.f32.mxu0 0.0
      %2409 = vmatmul.mubr.f32.gmra.mrb[0].mxu0 %v2141
      %v2410 = vpop.f32.mrb[0].mxu0
      %v2411 = vadd.f32 0.0, %v2410
      %v2412 = vpop.f32.mrb[0].mxu0
      %v2413 = vadd.f32 0.0, %v2412
      %2414 = vmatprep.mubr.f32.mxu0 0.0
      %2415 = vmatmul.mubr.f32.gmra.mrb[0].mxu0 %v2144
      %v2416 = vpop.f32.mrb[0].mxu0
      %v2417 = vadd.f32 0.0, %v2416
      %v2418 = vpop.f32.mrb[0].mxu0
      %v2419 = vadd.f32 0.0, %v2418
      %2420 = vmatprep.mubr.f32.mxu0 0.0
      %2421 = vmatmul.mubr.f32.gmra.mrb[0].mxu0 %v2147
      %v2422 = vpop.f32.mrb[0].mxu0
      %v2423 = vadd.f32 0.0, %v2422
      %v2424 = vpop.f32.mrb[0].mxu0
      %v2425 = vadd.f32 0.0, %v2424
      %2426 = vmatprep.mubr.f32.mxu0 0.0
      %2427 = vmatmul.mubr.f32.gmra.mrb[0].mxu0 %v2150
      %v2428 = vpop.f32.mrb[0].mxu0
      %v2429 = vadd.f32 0.0, %v2428
      %v2430 = vpop.f32.mrb[0].mxu0
      %v2431 = vadd.f32 0.0, %v2430
      %2432 = vmatprep.mubr.f32.mxu0 0.0
      %2433 = vmatmul.mubr.f32.gmra.mrb[0].mxu0 %v2153
      %v2434 = vpop.f32.mrb[0].mxu0
      %v2435 = vadd.f32 0.0, %v2434
      %v2436 = vpop.f32.mrb[0].mxu0
      %v2437 = vadd.f32 0.0, %v2436
      %2438 = vmatprep.mubr.f32.mxu0 0.0
      %2439 = vmatmul.mubr.f32.gmra.mrb[0].mxu0 %v2156
      %v2440 = vpop.f32.mrb[0].mxu0
      %v2441 = vadd.f32 0.0, %v2440
      %v2442 = vpop.f32.mrb[0].mxu0
      %v2443 = vadd.f32 0.0, %v2442
      %2444 = vmatprep.mubr.f32.mxu0 0.0
      %2445 = vmatmul.mubr.f32.gmra.mrb[0].mxu0 %v2159
      %v2446 = vpop.f32.mrb[0].mxu0
      %v2447 = vadd.f32 0.0, %v2446
      %v2448 = vpop.f32.mrb[0].mxu0
      %v2449 = vadd.f32 0.0, %v2448
      %2450 = vmatprep.mubr.f32.mxu0 0.0
      %2451 = vmatmul.mubr.f32.gmra.mrb[0].mxu0 %v2162
      %v2452 = vpop.f32.mrb[0].mxu0
      %v2453 = vadd.f32 0.0, %v2452
      %v2454 = vpop.f32.mrb[0].mxu0
      %v2455 = vadd.f32 0.0, %v2454
      %2456 = vmatprep.mubr.f32.mxu0 0.0
      %2457 = vmatmul.mubr.f32.gmra.mrb[0].mxu0 %v2165
      %v2458 = vpop.f32.mrb[0].mxu0
      %v2459 = vadd.f32 0.0, %v2458
      %v2460 = vpop.f32.mrb[0].mxu0
      %v2461 = vadd.f32 0.0, %v2460
      %2462 = vmatprep.mubr.f32.mxu0 0.0
      %2463 = vmatmul.mubr.f32.gmra.mrb[0].mxu0 %v2168
      %v2464 = vpop.f32.mrb[0].mxu0
      %v2465 = vadd.f32 0.0, %v2464
      %v2466 = vpop.f32.mrb[0].mxu0
      %v2467 = vadd.f32 0.0, %v2466
      %2468 = vmatprep.mubr.f32.mxu0 0.0
      %2469 = vmatmul.mubr.f32.gmra.mrb[0].mxu0 %v2171
      %v2470 = vpop.f32.mrb[0].mxu0
      %v2471 = vadd.f32 0.0, %v2470
      %v2472 = vpop.f32.mrb[0].mxu0
      %v2473 = vadd.f32 0.0, %v2472
      %2474 = vmatprep.mubr.f32.mxu0 0.0
      %2475 = vmatmul.mubr.f32.gmra.mrb[0].mxu0 %v2174
      %v2476 = vpop.f32.mrb[0].mxu0
      %v2477 = vadd.f32 0.0, %v2476
      %v2478 = vpop.f32.mrb[0].mxu0
      %v2479 = vadd.f32 0.0, %v2478
      %2480 = vmatprep.mubr.f32.mxu0 0.0
      %2481 = vmatmul.mubr.f32.gmra.mrb[0].mxu0 %v2177
      %v2482 = vpop.f32.mrb[0].mxu0
      %v2483 = vadd.f32 0.0, %v2482
      %v2484 = vpop.f32.mrb[0].mxu0
      %v2485 = vadd.f32 0.0, %v2484
      %2486 = vmatprep.mubr.f32.mxu0 0.0
      %2487 = vmatmul.mubr.f32.gmra.mrb[0].mxu0 %v2180
      %v2488 = vpop.f32.mrb[0].mxu0
      %v2489 = vadd.f32 0.0, %v2488
      %v2490 = vpop.f32.mrb[0].mxu0
      %v2491 = vadd.f32 0.0, %v2490
      %2492 = vmatprep.mubr.f32.mxu0 0.0
      %2493 = vmatmul.mubr.f32.gmra.mrb[0].mxu0 %v2183
      %v2494 = vpop.f32.mrb[0].mxu0
      %v2495 = vadd.f32 0.0, %v2494
      %v2496 = vpop.f32.mrb[0].mxu0
      %v2497 = vadd.f32 0.0, %v2496
      %2498 = vmatprep.mubr.f32.mxu0 0.0
      %2499 = vmatmul.mubr.f32.gmra.mrb[0].mxu0 %v2186
      %v2500 = vpop.f32.mrb[0].mxu0
      %v2501 = vadd.f32 0.0, %v2500
      %v2502 = vpop.f32.mrb[0].mxu0
      %v2503 = vadd.f32 0.0, %v2502
      %2504 = vmatprep.mubr.f32.mxu0 0.0
      %2505 = vmatmul.mubr.f32.gmra.mrb[0].mxu0 %v2189
      %v2506 = vpop.f32.mrb[0].mxu0
      %v2507 = vadd.f32 0.0, %v2506
      %v2508 = vpop.f32.mrb[0].mxu0
      %v2509 = vadd.f32 0.0, %v2508
      %2510 = vmatprep.mubr.f32.mxu0 0.0
      %2511 = vmatmul.mubr.f32.gmra.mrb[0].mxu0 %v2192
      %v2512 = vpop.f32.mrb[0].mxu0
      %v2513 = vadd.f32 0.0, %v2512
      %v2514 = vpop.f32.mrb[0].mxu0
      %v2515 = vadd.f32 0.0, %v2514
      %2516 = vmatprep.mubr.f32.mxu0 0.0
      %2517 = vmatmul.mubr.f32.gmra.mrb[0].mxu0 %v2195
      %v2518 = vpop.f32.mrb[0].mxu0
      %v2519 = vadd.f32 0.0, %v2518
      %v2520 = vpop.f32.mrb[0].mxu0
      %v2521 = vadd.f32 0.0, %v2520
      %2522 = vmatprep.mubr.f32.mxu0 0.0
      %2523 = vmatmul.mubr.f32.gmra.mrb[0].mxu0 %v2198
      %v2524 = vpop.f32.mrb[0].mxu0
      %v2525 = vadd.f32 0.0, %v2524
      %v2526 = vpop.f32.mrb[0].mxu0
      %v2527 = vadd.f32 0.0, %v2526
      %2528 = vmatprep.mubr.f32.mxu0 0.0
      %2529 = vmatmul.mubr.f32.gmra.mrb[0].mxu0 %v2201
      %v2530 = vpop.f32.mrb[0].mxu0
      %v2531 = vadd.f32 0.0, %v2530
      %v2532 = vpop.f32.mrb[0].mxu0
      %v2533 = vadd.f32 0.0, %v2532
      %2534 = vmatprep.mubr.f32.mxu0 0.0
      %2535 = vmatmul.mubr.f32.gmra.mrb[0].mxu0 %v2204
      %v2536 = vpop.f32.mrb[0].mxu0
      %v2537 = vadd.f32 0.0, %v2536
      %v2538 = vpop.f32.mrb[0].mxu0
      %v2539 = vadd.f32 0.0, %v2538
      %2540 = vmatprep.mubr.f32.mxu0 0.0
      %2541 = vmatmul.mubr.f32.gmra.mrb[0].mxu0 %v2207
      %v2542 = vpop.f32.mrb[0].mxu0
      %v2543 = vadd.f32 0.0, %v2542
      %v2544 = vpop.f32.mrb[0].mxu0
      %v2545 = vadd.f32 0.0, %v2544
      %2546 = vmatprep.mubr.f32.mxu0 0.0
      %2547 = vmatmul.mubr.f32.gmra.mrb[0].mxu0 %v2210
      %v2548 = vpop.f32.mrb[0].mxu0
      %v2549 = vadd.f32 0.0, %v2548
      %v2550 = vpop.f32.mrb[0].mxu0
      %v2551 = vadd.f32 0.0, %v2550
      %2552 = vmatprep.mubr.f32.mxu0 0.0
      %2553 = vmatmul.mubr.f32.gmra.mrb[0].mxu0 %v2213
      %v2554 = vpop.f32.mrb[0].mxu0
      %v2555 = vadd.f32 0.0, %v2554
      %v2556 = vpop.f32.mrb[0].mxu0
      %v2557 = vadd.f32 0.0, %v2556
      %2558 = vmatprep.mubr.f32.mxu0 0.0
      %2559 = vmatmul.mubr.f32.gmra.mrb[0].mxu0 %v2216
      %v2560 = vpop.f32.mrb[0].mxu0
      %v2561 = vadd.f32 0.0, %v2560
      %v2562 = vpop.f32.mrb[0].mxu0
      %v2563 = vadd.f32 0.0, %v2562
      %2564 = vmatprep.mubr.f32.mxu0 0.0
      %2565 = vmatmul.mubr.f32.gmra.mrb[0].mxu0 %v2219
      %v2566 = vpop.f32.mrb[0].mxu0
      %v2567 = vadd.f32 0.0, %v2566
      %v2568 = vpop.f32.mrb[0].mxu0
      %v2569 = vadd.f32 0.0, %v2568
      %2570 = vmatprep.mubr.f32.mxu0 0.0
      %2571 = vmatmul.mubr.f32.gmra.mrb[0].mxu0 %v2222
      %v2572 = vpop.f32.mrb[0].mxu0
      %v2573 = vadd.f32 0.0, %v2572
      %v2574 = vpop.f32.mrb[0].mxu0
      %v2575 = vadd.f32 0.0, %v2574
      %2576 = vmatprep.mubr.f32.mxu0 0.0
      %2577 = vmatmul.mubr.f32.gmra.mrb[0].mxu0 %v2225
      %v2578 = vpop.f32.mrb[0].mxu0
      %v2579 = vadd.f32 0.0, %v2578
      %v2580 = vpop.f32.mrb[0].mxu0
      %v2581 = vadd.f32 0.0, %v2580
      %2582 = vmatprep.mubr.f32.mxu0 0.0
      %2583 = vmatmul.mubr.f32.gmra.mrb[0].mxu0 %v2228
      %v2584 = vpop.f32.mrb[0].mxu0
      %v2585 = vadd.f32 0.0, %v2584
      %v2586 = vpop.f32.mrb[0].mxu0
      %v2587 = vadd.f32 0.0, %v2586
      %2588 = vmatprep.mubr.f32.mxu0 0.0
      %2589 = vmatmul.mubr.f32.gmra.mrb[0].mxu0 %v2231
      %v2590 = vpop.f32.mrb[0].mxu0
      %v2591 = vadd.f32 0.0, %v2590
      %v2592 = vpop.f32.mrb[0].mxu0
      %v2593 = vadd.f32 0.0, %v2592
      %2594 = vmatprep.mubr.f32.mxu0 0.0
      %2595 = vmatmul.mubr.f32.gmra.mrb[0].mxu0 %v2234
      %v2596 = vpop.f32.mrb[0].mxu0
      %v2597 = vadd.f32 0.0, %v2596
      %v2598 = vpop.f32.mrb[0].mxu0
      %v2599 = vadd.f32 0.0, %v2598
      %2600 = vmatprep.mubr.f32.mxu0 0.0
      %2601 = vmatmul.mubr.f32.gmra.mrb[0].mxu0 %v2237
      %v2602 = vpop.f32.mrb[0].mxu0
      %v2603 = vadd.f32 0.0, %v2602
      %v2604 = vpop.f32.mrb[0].mxu0
      %v2605 = vadd.f32 0.0, %v2604
      %2606 = vmatprep.mubr.f32.mxu0 0.0
      %2607 = vmatmul.mubr.f32.gmra.mrb[0].mxu0 %v2240
      %v2608 = vpop.f32.mrb[0].mxu0
      %v2609 = vadd.f32 0.0, %v2608
      %v2610 = vpop.f32.mrb[0].mxu0
      %v2611 = vadd.f32 0.0, %v2610
      %2612 = vmatprep.mubr.f32.mxu0 0.0
      %2613 = vmatmul.mubr.f32.gmra.mrb[0].mxu0 %v2243
      %v2614 = vpop.f32.mrb[0].mxu0
      %v2615 = vadd.f32 0.0, %v2614
      %v2616 = vpop.f32.mrb[0].mxu0
      %v2617 = vadd.f32 0.0, %v2616
      %2618 = vmatprep.mubr.f32.mxu0 0.0
      %2619 = vmatmul.mubr.f32.gmra.mrb[0].mxu0 %v2246
      %v2620 = vpop.f32.mrb[0].mxu0
      %v2621 = vadd.f32 0.0, %v2620
      %v2622 = vpop.f32.mrb[0].mxu0
      %v2623 = vadd.f32 0.0, %v2622
      %2624 = vmatprep.mubr.f32.mxu0 0.0
      %2625 = vmatmul.mubr.f32.gmra.mrb[0].mxu0 %v2249
      %v2626 = vpop.f32.mrb[0].mxu0
      %v2627 = vadd.f32 0.0, %v2626
      %v2628 = vpop.f32.mrb[0].mxu0
      %v2629 = vadd.f32 0.0, %v2628
      %2630 = vmatprep.mubr.f32.mxu0 0.0
      %2631 = vmatmul.mubr.f32.gmra.mrb[0].mxu0 %v2252
      %v2632 = vpop.f32.mrb[0].mxu0
      %v2633 = vadd.f32 0.0, %v2632
      %v2634 = vpop.f32.mrb[0].mxu0
      %v2635 = vadd.f32 0.0, %v2634
      %2636 = vmatprep.mubr.f32.mxu0 0.0
      %2637 = vmatmul.mubr.f32.gmra.mrb[0].mxu0 %v2255
      %v2638 = vpop.f32.mrb[0].mxu0
      %v2639 = vadd.f32 0.0, %v2638
      %v2640 = vpop.f32.mrb[0].mxu0
      %v2641 = vadd.f32 0.0, %v2640
      %2642 = vmatprep.mubr.f32.mxu0 0.0
      %2643 = vmatmul.mubr.f32.gmra.mrb[0].mxu0 %v2258
      %v2644 = vpop.f32.mrb[0].mxu0
      %v2645 = vadd.f32 0.0, %v2644
      %v2646 = vpop.f32.mrb[0].mxu0
      %v2647 = vadd.f32 0.0, %v2646
      %2648 = vmatprep.mubr.f32.mxu0 0.0
      %2649 = vmatmul.mubr.f32.gmra.mrb[0].mxu0 %v2261
      %v2650 = vpop.f32.mrb[0].mxu0
      %v2651 = vadd.f32 0.0, %v2650
      %v2652 = vpop.f32.mrb[0].mxu0
      %v2653 = vadd.f32 0.0, %v2652
      %2654 = vmatprep.mubr.f32.mxu0 0.0
      %2655 = vmatmul.mubr.f32.gmra.mrb[0].mxu0 %v2264
      %v2656 = vpop.f32.mrb[0].mxu0
      %v2657 = vadd.f32 0.0, %v2656
      %v2658 = vpop.f32.mrb[0].mxu0
      %v2659 = vadd.f32 0.0, %v2658
      %2660 = vmatprep.mubr.f32.mxu0 0.0
      %2661 = vmatmul.mubr.f32.gmra.mrb[0].mxu0 %v2267
      %v2662 = vpop.f32.mrb[0].mxu0
      %v2663 = vadd.f32 0.0, %v2662
      %v2664 = vpop.f32.mrb[0].mxu0
      %v2665 = vadd.f32 0.0, %v2664
      %2666 = vmatprep.mubr.f32.mxu0 0.0
      %2667 = vmatmul.mubr.f32.gmra.mrb[0].mxu0 %v2270
      %v2668 = vpop.f32.mrb[0].mxu0
      %v2669 = vadd.f32 0.0, %v2668
      %v2670 = vpop.f32.mrb[0].mxu0
      %v2671 = vadd.f32 0.0, %v2670
      %2672 = vmatprep.mubr.f32.mxu0 0.0
      %2673 = vmatmul.mubr.f32.gmra.mrb[0].mxu0 %v2273
      %v2674 = vpop.f32.mrb[0].mxu0
      %v2675 = vadd.f32 0.0, %v2674
      %v2676 = vpop.f32.mrb[0].mxu0
      %v2677 = vadd.f32 0.0, %v2676
      %2678 = vmatprep.mubr.f32.mxu0 0.0
      %2679 = vmatmul.mubr.f32.gmra.mrb[0].mxu0 %v2276
      %v2680 = vpop.f32.mrb[0].mxu0
      %v2681 = vadd.f32 0.0, %v2680
      %v2682 = vpop.f32.mrb[0].mxu0
      %v2683 = vadd.f32 0.0, %v2682
      %2684 = vmatprep.mubr.f32.mxu0 0.0
      %2685 = vmatmul.mubr.f32.gmra.mrb[0].mxu0 %v2279
      %v2686 = vpop.f32.mrb[0].mxu0
      %v2687 = vadd.f32 0.0, %v2686
      %v2688 = vpop.f32.mrb[0].mxu0
      %v2689 = vadd.f32 0.0, %v2688
      %2690 = vmatprep.mubr.f32.mxu0 0.0
      %2691 = vmatmul.mubr.f32.gmra.mrb[0].mxu0 %v2282
      %v2692 = vpop.f32.mrb[0].mxu0
      %v2693 = vadd.f32 0.0, %v2692
      %v2694 = vpop.f32.mrb[0].mxu0
      %v2695 = vadd.f32 0.0, %v2694
      %2696 = vmatprep.mubr.f32.mxu0 0.0
      %2697 = vmatmul.mubr.f32.gmra.mrb[0].mxu0 %v2285
      %v2698 = vpop.f32.mrb[0].mxu0
      %v2699 = vadd.f32 0.0, %v2698
      %v2700 = vpop.f32.mrb[0].mxu0
      %v2701 = vadd.f32 0.0, %v2700
      %2702 = vmatprep.mubr.f32.mxu0 0.0
      %2703 = vmatmul.mubr.f32.gmra.mrb[0].mxu0 %v2288
      %v2704 = vpop.f32.mrb[0].mxu0
      %v2705 = vadd.f32 0.0, %v2704
      %v2706 = vpop.f32.mrb[0].mxu0
      %v2707 = vadd.f32 0.0, %v2706
      %2708 = vmatprep.mubr.f32.mxu0 0.0
      %2709 = vmatmul.mubr.f32.gmra.mrb[0].mxu0 %v2291
      %v2710 = vpop.f32.mrb[0].mxu0
      %v2711 = vadd.f32 0.0, %v2710
      %v2712 = vpop.f32.mrb[0].mxu0
      %v2713 = vadd.f32 0.0, %v2712
      %2714 = vmatprep.mubr.f32.mxu0 0.0
      %2715 = vmatmul.mubr.f32.gmra.mrb[0].mxu0 %v2294
      %v2716 = vpop.f32.mrb[0].mxu0
      %v2717 = vadd.f32 0.0, %v2716
      %v2718 = vpop.f32.mrb[0].mxu0
      %v2719 = vadd.f32 0.0, %v2718
      %2720 = vmatprep.mubr.f32.mxu0 0.0
      %2721 = vmatmul.mubr.f32.gmra.mrb[0].mxu0 %v2297
      %v2722 = vpop.f32.mrb[0].mxu0
      %v2723 = vadd.f32 0.0, %v2722
      %v2724 = vpop.f32.mrb[0].mxu0
      %v2725 = vadd.f32 0.0, %v2724
      %2726 = vmatprep.mubr.f32.mxu0 0.0
      %2727 = vmatmul.mubr.f32.gmra.mrb[0].mxu0 %v2300
      %v2728 = vpop.f32.mrb[0].mxu0
      %v2729 = vadd.f32 0.0, %v2728
      %v2730 = vpop.f32.mrb[0].mxu0
      %v2731 = vadd.f32 0.0, %v2730
      %2732 = vmatprep.mubr.f32.mxu0 0.0
      %2733 = vmatmul.mubr.f32.gmra.mrb[0].mxu0 %v2303
      %v2734 = vpop.f32.mrb[0].mxu0
      %v2735 = vadd.f32 0.0, %v2734
      %v2736 = vpop.f32.mrb[0].mxu0
      %v2737 = vadd.f32 0.0, %v2736
      %2738 = vmatprep.mubr.f32.mxu0 0.0
      %2739 = vmatmul.mubr.f32.gmra.mrb[0].mxu0 %v2306
      %v2740 = vpop.f32.mrb[0].mxu0
      %v2741 = vadd.f32 0.0, %v2740
      %v2742 = vpop.f32.mrb[0].mxu0
      %v2743 = vadd.f32 0.0, %v2742
      %2744 = vmatprep.mubr.f32.mxu0 0.0
      %2745 = vmatmul.mubr.f32.gmra.mrb[0].mxu0 %v2309
      %v2746 = vpop.f32.mrb[0].mxu0
      %v2747 = vadd.f32 0.0, %v2746
      %v2748 = vpop.f32.mrb[0].mxu0
      %v2749 = vadd.f32 0.0, %v2748
      %2750 = vmatprep.mubr.f32.mxu0 0.0
      %2751 = vmatmul.mubr.f32.gmra.mrb[0].mxu0 %v2312
      %v2752 = vpop.f32.mrb[0].mxu0
      %v2753 = vadd.f32 0.0, %v2752
      %v2754 = vpop.f32.mrb[0].mxu0
      %v2755 = vadd.f32 0.0, %v2754
      %2756 = vmatprep.mubr.f32.mxu0 0.0
      %2757 = vmatmul.mubr.f32.gmra.mrb[0].mxu0 %v2315
      %v2758 = vpop.f32.mrb[0].mxu0
      %v2759 = vadd.f32 0.0, %v2758
      %v2760 = vpop.f32.mrb[0].mxu0
      %v2761 = vadd.f32 0.0, %v2760
      %2762 = vmatprep.mubr.f32.mxu0 0.0
      %2763 = vmatmul.mubr.f32.gmra.mrb[0].mxu0 %v2318
      %v2764 = vpop.f32.mrb[0].mxu0
      %v2765 = vadd.f32 0.0, %v2764
      %v2766 = vpop.f32.mrb[0].mxu0
      %v2767 = vadd.f32 0.0, %v2766
      %2768 = vdwg.mxu0
      %v2769 = vmul.f32 %v2387, 2.0
      %v2770 = vmul.f32 %v2389, 2.0
      %v2771 = vmul.f32 %v2393, 2.0
      %v2772 = vmul.f32 %v2395, 2.0
      %v2773 = vmul.f32 %v2399, 2.0
      %v2774 = vmul.f32 %v2401, 2.0
      %v2775 = vmul.f32 %v2405, 2.0
      %v2776 = vmul.f32 %v2407, 2.0
      %v2777 = vmul.f32 %v2411, 2.0
      %v2778 = vmul.f32 %v2413, 2.0
      %v2779 = vmul.f32 %v2417, 2.0
      %v2780 = vmul.f32 %v2419, 2.0
      %v2781 = vmul.f32 %v2423, 2.0
      %v2782 = vmul.f32 %v2425, 2.0
      %v2783 = vmul.f32 %v2429, 2.0
      %v2784 = vmul.f32 %v2431, 2.0
      %v2785 = vmul.f32 %v2435, 2.0
      %v2786 = vmul.f32 %v2437, 2.0
      %v2787 = vmul.f32 %v2441, 2.0
      %v2788 = vmul.f32 %v2443, 2.0
      %v2789 = vmul.f32 %v2447, 2.0
      %v2790 = vmul.f32 %v2449, 2.0
      %v2791 = vmul.f32 %v2453, 2.0
      %v2792 = vmul.f32 %v2455, 2.0
      %v2793 = vmul.f32 %v2459, 2.0
      %v2794 = vmul.f32 %v2461, 2.0
      %v2795 = vmul.f32 %v2465, 2.0
      %v2796 = vmul.f32 %v2467, 2.0
      %v2797 = vmul.f32 %v2471, 2.0
      %v2798 = vmul.f32 %v2473, 2.0
      %v2799 = vmul.f32 %v2477, 2.0
      %v2800 = vmul.f32 %v2479, 2.0
      %v2801 = vmul.f32 %v2483, 2.0
      %v2802 = vmul.f32 %v2485, 2.0
      %v2803 = vmul.f32 %v2489, 2.0
      %v2804 = vmul.f32 %v2491, 2.0
      %v2805 = vmul.f32 %v2495, 2.0
      %v2806 = vmul.f32 %v2497, 2.0
      %v2807 = vmul.f32 %v2501, 2.0
      %v2808 = vmul.f32 %v2503, 2.0
      %v2809 = vmul.f32 %v2507, 2.0
      %v2810 = vmul.f32 %v2509, 2.0
      %v2811 = vmul.f32 %v2513, 2.0
      %v2812 = vmul.f32 %v2515, 2.0
      %v2813 = vmul.f32 %v2519, 2.0
      %v2814 = vmul.f32 %v2521, 2.0
      %v2815 = vmul.f32 %v2525, 2.0
      %v2816 = vmul.f32 %v2527, 2.0
      %v2817 = vmul.f32 %v2531, 2.0
      %v2818 = vmul.f32 %v2533, 2.0
      %v2819 = vmul.f32 %v2537, 2.0
      %v2820 = vmul.f32 %v2539, 2.0
      %v2821 = vmul.f32 %v2543, 2.0
      %v2822 = vmul.f32 %v2545, 2.0
      %v2823 = vmul.f32 %v2549, 2.0
      %v2824 = vmul.f32 %v2551, 2.0
      %v2825 = vmul.f32 %v2555, 2.0
      %v2826 = vmul.f32 %v2557, 2.0
      %v2827 = vmul.f32 %v2561, 2.0
      %v2828 = vmul.f32 %v2563, 2.0
      %v2829 = vmul.f32 %v2567, 2.0
      %v2830 = vmul.f32 %v2569, 2.0
      %v2831 = vmul.f32 %v2573, 2.0
      %v2832 = vmul.f32 %v2575, 2.0
      %v2833 = vmul.f32 %v2579, 2.0
      %v2834 = vmul.f32 %v2581, 2.0
      %v2835 = vmul.f32 %v2585, 2.0
      %v2836 = vmul.f32 %v2587, 2.0
      %v2837 = vmul.f32 %v2591, 2.0
      %v2838 = vmul.f32 %v2593, 2.0
      %v2839 = vmul.f32 %v2597, 2.0
      %v2840 = vmul.f32 %v2599, 2.0
      %v2841 = vmul.f32 %v2603, 2.0
      %v2842 = vmul.f32 %v2605, 2.0
      %v2843 = vmul.f32 %v2609, 2.0
      %v2844 = vmul.f32 %v2611, 2.0
      %v2845 = vmul.f32 %v2615, 2.0
      %v2846 = vmul.f32 %v2617, 2.0
      %v2847 = vmul.f32 %v2621, 2.0
      %v2848 = vmul.f32 %v2623, 2.0
      %v2849 = vmul.f32 %v2627, 2.0
      %v2850 = vmul.f32 %v2629, 2.0
      %v2851 = vmul.f32 %v2633, 2.0
      %v2852 = vmul.f32 %v2635, 2.0
      %v2853 = vmul.f32 %v2639, 2.0
      %v2854 = vmul.f32 %v2641, 2.0
      %v2855 = vmul.f32 %v2645, 2.0
      %v2856 = vmul.f32 %v2647, 2.0
      %v2857 = vmul.f32 %v2651, 2.0
      %v2858 = vmul.f32 %v2653, 2.0
      %v2859 = vmul.f32 %v2657, 2.0
      %v2860 = vmul.f32 %v2659, 2.0
      %v2861 = vmul.f32 %v2663, 2.0
      %v2862 = vmul.f32 %v2665, 2.0
      %v2863 = vmul.f32 %v2669, 2.0
      %v2864 = vmul.f32 %v2671, 2.0
      %v2865 = vmul.f32 %v2675, 2.0
      %v2866 = vmul.f32 %v2677, 2.0
      %v2867 = vmul.f32 %v2681, 2.0
      %v2868 = vmul.f32 %v2683, 2.0
      %v2869 = vmul.f32 %v2687, 2.0
      %v2870 = vmul.f32 %v2689, 2.0
      %v2871 = vmul.f32 %v2693, 2.0
      %v2872 = vmul.f32 %v2695, 2.0
      %v2873 = vmul.f32 %v2699, 2.0
      %v2874 = vmul.f32 %v2701, 2.0
      %v2875 = vmul.f32 %v2705, 2.0
      %v2876 = vmul.f32 %v2707, 2.0
      %v2877 = vmul.f32 %v2711, 2.0
      %v2878 = vmul.f32 %v2713, 2.0
      %v2879 = vmul.f32 %v2717, 2.0
      %v2880 = vmul.f32 %v2719, 2.0
      %v2881 = vmul.f32 %v2723, 2.0
      %v2882 = vmul.f32 %v2725, 2.0
      %v2883 = vmul.f32 %v2729, 2.0
      %v2884 = vmul.f32 %v2731, 2.0
      %v2885 = vmul.f32 %v2735, 2.0
      %v2886 = vmul.f32 %v2737, 2.0
      %v2887 = vmul.f32 %v2741, 2.0
      %v2888 = vmul.f32 %v2743, 2.0
      %v2889 = vmul.f32 %v2747, 2.0
      %v2890 = vmul.f32 %v2749, 2.0
      %v2891 = vmul.f32 %v2753, 2.0
      %v2892 = vmul.f32 %v2755, 2.0
      %v2893 = vmul.f32 %v2759, 2.0
      %v2894 = vmul.f32 %v2761, 2.0
      %v2895 = vmul.f32 %v2765, 2.0
      %v2896 = vmul.f32 %v2767, 2.0
      %v2897 = vsub.f32 %v1992, %v2769
      %v2898 = vsub.f32 %v1993, %v2770
      %v2899 = vsub.f32 %v1994, %v2771
      %v2900 = vsub.f32 %v1995, %v2772
      %v2901 = vsub.f32 %v1996, %v2773
      %v2902 = vsub.f32 %v1997, %v2774
      %v2903 = vsub.f32 %v1998, %v2775
      %v2904 = vsub.f32 %v1999, %v2776
      %v2905 = vsub.f32 %v2000, %v2777
      %v2906 = vsub.f32 %v2001, %v2778
      %v2907 = vsub.f32 %v2002, %v2779
      %v2908 = vsub.f32 %v2003, %v2780
      %v2909 = vsub.f32 %v2004, %v2781
      %v2910 = vsub.f32 %v2005, %v2782
      %v2911 = vsub.f32 %v2006, %v2783
      %v2912 = vsub.f32 %v2007, %v2784
      %v2913 = vsub.f32 %v2008, %v2785
      %v2914 = vsub.f32 %v2009, %v2786
      %v2915 = vsub.f32 %v2010, %v2787
      %v2916 = vsub.f32 %v2011, %v2788
      %v2917 = vsub.f32 %v2012, %v2789
      %v2918 = vsub.f32 %v2013, %v2790
      %v2919 = vsub.f32 %v2014, %v2791
      %v2920 = vsub.f32 %v2015, %v2792
      %v2921 = vsub.f32 %v2016, %v2793
      %v2922 = vsub.f32 %v2017, %v2794
      %v2923 = vsub.f32 %v2018, %v2795
      %v2924 = vsub.f32 %v2019, %v2796
      %v2925 = vsub.f32 %v2020, %v2797
      %v2926 = vsub.f32 %v2021, %v2798
      %v2927 = vsub.f32 %v2022, %v2799
      %v2928 = vsub.f32 %v2023, %v2800
      %v2929 = vsub.f32 %v2024, %v2801
      %v2930 = vsub.f32 %v2025, %v2802
      %v2931 = vsub.f32 %v2026, %v2803
      %v2932 = vsub.f32 %v2027, %v2804
      %v2933 = vsub.f32 %v2028, %v2805
      %v2934 = vsub.f32 %v2029, %v2806
      %v2935 = vsub.f32 %v2030, %v2807
      %v2936 = vsub.f32 %v2031, %v2808
      %v2937 = vsub.f32 %v2032, %v2809
      %v2938 = vsub.f32 %v2033, %v2810
      %v2939 = vsub.f32 %v2034, %v2811
      %v2940 = vsub.f32 %v2035, %v2812
      %v2941 = vsub.f32 %v2036, %v2813
      %v2942 = vsub.f32 %v2037, %v2814
      %v2943 = vsub.f32 %v2038, %v2815
      %v2944 = vsub.f32 %v2039, %v2816
      %v2945 = vsub.f32 %v2040, %v2817
      %v2946 = vsub.f32 %v2041, %v2818
      %v2947 = vsub.f32 %v2042, %v2819
      %v2948 = vsub.f32 %v2043, %v2820
      %v2949 = vsub.f32 %v2044, %v2821
      %v2950 = vsub.f32 %v2045, %v2822
      %v2951 = vsub.f32 %v2046, %v2823
      %v2952 = vsub.f32 %v2047, %v2824
      %v2953 = vsub.f32 %v2048, %v2825
      %v2954 = vsub.f32 %v2049, %v2826
      %v2955 = vsub.f32 %v2050, %v2827
      %v2956 = vsub.f32 %v2051, %v2828
      %v2957 = vsub.f32 %v2052, %v2829
      %v2958 = vsub.f32 %v2053, %v2830
      %v2959 = vsub.f32 %v2054, %v2831
      %v2960 = vsub.f32 %v2055, %v2832
      %v2961 = vsub.f32 %v2056, %v2833
      %v2962 = vsub.f32 %v2057, %v2834
      %v2963 = vsub.f32 %v2058, %v2835
      %v2964 = vsub.f32 %v2059, %v2836
      %v2965 = vsub.f32 %v2060, %v2837
      %v2966 = vsub.f32 %v2061, %v2838
      %v2967 = vsub.f32 %v2062, %v2839
      %v2968 = vsub.f32 %v2063, %v2840
      %v2969 = vsub.f32 %v2064, %v2841
      %v2970 = vsub.f32 %v2065, %v2842
      %v2971 = vsub.f32 %v2066, %v2843
      %v2972 = vsub.f32 %v2067, %v2844
      %v2973 = vsub.f32 %v2068, %v2845
      %v2974 = vsub.f32 %v2069, %v2846
      %v2975 = vsub.f32 %v2070, %v2847
      %v2976 = vsub.f32 %v2071, %v2848
      %v2977 = vsub.f32 %v2072, %v2849
      %v2978 = vsub.f32 %v2073, %v2850
      %v2979 = vsub.f32 %v2074, %v2851
      %v2980 = vsub.f32 %v2075, %v2852
      %v2981 = vsub.f32 %v2076, %v2853
      %v2982 = vsub.f32 %v2077, %v2854
      %v2983 = vsub.f32 %v2078, %v2855
      %v2984 = vsub.f32 %v2079, %v2856
      %v2985 = vsub.f32 %v2080, %v2857
      %v2986 = vsub.f32 %v2081, %v2858
      %v2987 = vsub.f32 %v2082, %v2859
      %v2988 = vsub.f32 %v2083, %v2860
      %v2989 = vsub.f32 %v2084, %v2861
      %v2990 = vsub.f32 %v2085, %v2862
      %v2991 = vsub.f32 %v2086, %v2863
      %v2992 = vsub.f32 %v2087, %v2864
      %v2993 = vsub.f32 %v2088, %v2865
      %v2994 = vsub.f32 %v2089, %v2866
      %v2995 = vsub.f32 %v2090, %v2867
      %v2996 = vsub.f32 %v2091, %v2868
      %v2997 = vsub.f32 %v2092, %v2869
      %v2998 = vsub.f32 %v2093, %v2870
      %v2999 = vsub.f32 %v2094, %v2871
      %v3000 = vsub.f32 %v2095, %v2872
      %v3001 = vsub.f32 %v2096, %v2873
      %v3002 = vsub.f32 %v2097, %v2874
      %v3003 = vsub.f32 %v2098, %v2875
      %v3004 = vsub.f32 %v2099, %v2876
      %v3005 = vsub.f32 %v2100, %v2877
      %v3006 = vsub.f32 %v2101, %v2878
      %v3007 = vsub.f32 %v2102, %v2879
      %v3008 = vsub.f32 %v2103, %v2880
      %v3009 = vsub.f32 %v2104, %v2881
      %v3010 = vsub.f32 %v2105, %v2882
      %v3011 = vsub.f32 %v2106, %v2883
      %v3012 = vsub.f32 %v2107, %v2884
      %v3013 = vsub.f32 %v2108, %v2885
      %v3014 = vsub.f32 %v2109, %v2886
      %v3015 = vsub.f32 %v2110, %v2887
      %v3016 = vsub.f32 %v2111, %v2888
      %v3017 = vsub.f32 %v2112, %v2889
      %v3018 = vsub.f32 %v2113, %v2890
      %v3019 = vsub.f32 %v2114, %v2891
      %v3020 = vsub.f32 %v2115, %v2892
      %v3021 = vsub.f32 %v2116, %v2893
      %v3022 = vsub.f32 %v2117, %v2894
      %v3023 = vsub.f32 %v2118, %v2895
      %v3024 = vsub.f32 %v2119, %v2896
      %v3025 = vmin.f32 %v2897, %v2898
      %3026 = vmin.xlane.f32.xlu0 %v3025
      %v3027 = vpop.xlane.xlu0 %3026
      %v3028 = vmin.f32 %v2899, %v2900
      %3029 = vmin.xlane.f32.xlu0 %v3028
      %v3030 = vpop.xlane.xlu0 %3029
      %v3031 = vmin.f32 %v2901, %v2902
      %3032 = vmin.xlane.f32.xlu0 %v3031
      %v3033 = vpop.xlane.xlu0 %3032
      %v3034 = vmin.f32 %v2903, %v2904
      %3035 = vmin.xlane.f32.xlu0 %v3034
      %v3036 = vpop.xlane.xlu0 %3035
      %v3037 = vmin.f32 %v2905, %v2906
      %3038 = vmin.xlane.f32.xlu0 %v3037
      %v3039 = vpop.xlane.xlu0 %3038
      %v3040 = vmin.f32 %v2907, %v2908
      %3041 = vmin.xlane.f32.xlu0 %v3040
      %v3042 = vpop.xlane.xlu0 %3041
      %v3043 = vmin.f32 %v2909, %v2910
      %3044 = vmin.xlane.f32.xlu0 %v3043
      %v3045 = vpop.xlane.xlu0 %3044
      %v3046 = vmin.f32 %v2911, %v2912
      %3047 = vmin.xlane.f32.xlu0 %v3046
      %v3048 = vpop.xlane.xlu0 %3047
      %v3049 = vmin.f32 %v2913, %v2914
      %3050 = vmin.xlane.f32.xlu0 %v3049
      %v3051 = vpop.xlane.xlu0 %3050
      %v3052 = vmin.f32 %v2915, %v2916
      %3053 = vmin.xlane.f32.xlu0 %v3052
      %v3054 = vpop.xlane.xlu0 %3053
      %v3055 = vmin.f32 %v2917, %v2918
      %3056 = vmin.xlane.f32.xlu0 %v3055
      %v3057 = vpop.xlane.xlu0 %3056
      %v3058 = vmin.f32 %v2919, %v2920
      %3059 = vmin.xlane.f32.xlu0 %v3058
      %v3060 = vpop.xlane.xlu0 %3059
      %v3061 = vmin.f32 %v2921, %v2922
      %3062 = vmin.xlane.f32.xlu0 %v3061
      %v3063 = vpop.xlane.xlu0 %3062
      %v3064 = vmin.f32 %v2923, %v2924
      %3065 = vmin.xlane.f32.xlu0 %v3064
      %v3066 = vpop.xlane.xlu0 %3065
      %v3067 = vmin.f32 %v2925, %v2926
      %3068 = vmin.xlane.f32.xlu0 %v3067
      %v3069 = vpop.xlane.xlu0 %3068
      %v3070 = vmin.f32 %v2927, %v2928
      %3071 = vmin.xlane.f32.xlu0 %v3070
      %v3072 = vpop.xlane.xlu0 %3071
      %v3073 = vmin.f32 %v2929, %v2930
      %3074 = vmin.xlane.f32.xlu0 %v3073
      %v3075 = vpop.xlane.xlu0 %3074
      %v3076 = vmin.f32 %v2931, %v2932
      %3077 = vmin.xlane.f32.xlu0 %v3076
      %v3078 = vpop.xlane.xlu0 %3077
      %v3079 = vmin.f32 %v2933, %v2934
      %3080 = vmin.xlane.f32.xlu0 %v3079
      %v3081 = vpop.xlane.xlu0 %3080
      %v3082 = vmin.f32 %v2935, %v2936
      %3083 = vmin.xlane.f32.xlu0 %v3082
      %v3084 = vpop.xlane.xlu0 %3083
      %v3085 = vmin.f32 %v2937, %v2938
      %3086 = vmin.xlane.f32.xlu0 %v3085
      %v3087 = vpop.xlane.xlu0 %3086
      %v3088 = vmin.f32 %v2939, %v2940
      %3089 = vmin.xlane.f32.xlu0 %v3088
      %v3090 = vpop.xlane.xlu0 %3089
      %v3091 = vmin.f32 %v2941, %v2942
      %3092 = vmin.xlane.f32.xlu0 %v3091
      %v3093 = vpop.xlane.xlu0 %3092
      %v3094 = vmin.f32 %v2943, %v2944
      %3095 = vmin.xlane.f32.xlu0 %v3094
      %v3096 = vpop.xlane.xlu0 %3095
      %v3097 = vmin.f32 %v2945, %v2946
      %3098 = vmin.xlane.f32.xlu0 %v3097
      %v3099 = vpop.xlane.xlu0 %3098
      %v3100 = vmin.f32 %v2947, %v2948
      %3101 = vmin.xlane.f32.xlu0 %v3100
      %v3102 = vpop.xlane.xlu0 %3101
      %v3103 = vmin.f32 %v2949, %v2950
      %3104 = vmin.xlane.f32.xlu0 %v3103
      %v3105 = vpop.xlane.xlu0 %3104
      %v3106 = vmin.f32 %v2951, %v2952
      %3107 = vmin.xlane.f32.xlu0 %v3106
      %v3108 = vpop.xlane.xlu0 %3107
      %v3109 = vmin.f32 %v2953, %v2954
      %3110 = vmin.xlane.f32.xlu0 %v3109
      %v3111 = vpop.xlane.xlu0 %3110
      %v3112 = vmin.f32 %v2955, %v2956
      %3113 = vmin.xlane.f32.xlu0 %v3112
      %v3114 = vpop.xlane.xlu0 %3113
      %v3115 = vmin.f32 %v2957, %v2958
      %3116 = vmin.xlane.f32.xlu0 %v3115
      %v3117 = vpop.xlane.xlu0 %3116
      %v3118 = vmin.f32 %v2959, %v2960
      %3119 = vmin.xlane.f32.xlu0 %v3118
      %v3120 = vpop.xlane.xlu0 %3119
      %v3121 = vmin.f32 %v2961, %v2962
      %3122 = vmin.xlane.f32.xlu0 %v3121
      %v3123 = vpop.xlane.xlu0 %3122
      %v3124 = vmin.f32 %v2963, %v2964
      %3125 = vmin.xlane.f32.xlu0 %v3124
      %v3126 = vpop.xlane.xlu0 %3125
      %v3127 = vmin.f32 %v2965, %v2966
      %3128 = vmin.xlane.f32.xlu0 %v3127
      %v3129 = vpop.xlane.xlu0 %3128
      %v3130 = vmin.f32 %v2967, %v2968
      %3131 = vmin.xlane.f32.xlu0 %v3130
      %v3132 = vpop.xlane.xlu0 %3131
      %v3133 = vmin.f32 %v2969, %v2970
      %3134 = vmin.xlane.f32.xlu0 %v3133
      %v3135 = vpop.xlane.xlu0 %3134
      %v3136 = vmin.f32 %v2971, %v2972
      %3137 = vmin.xlane.f32.xlu0 %v3136
      %v3138 = vpop.xlane.xlu0 %3137
      %v3139 = vmin.f32 %v2973, %v2974
      %3140 = vmin.xlane.f32.xlu0 %v3139
      %v3141 = vpop.xlane.xlu0 %3140
      %v3142 = vmin.f32 %v2975, %v2976
      %3143 = vmin.xlane.f32.xlu0 %v3142
      %v3144 = vpop.xlane.xlu0 %3143
      %v3145 = vmin.f32 %v2977, %v2978
      %3146 = vmin.xlane.f32.xlu0 %v3145
      %v3147 = vpop.xlane.xlu0 %3146
      %v3148 = vmin.f32 %v2979, %v2980
      %3149 = vmin.xlane.f32.xlu0 %v3148
      %v3150 = vpop.xlane.xlu0 %3149
      %v3151 = vmin.f32 %v2981, %v2982
      %3152 = vmin.xlane.f32.xlu0 %v3151
      %v3153 = vpop.xlane.xlu0 %3152
      %v3154 = vmin.f32 %v2983, %v2984
      %3155 = vmin.xlane.f32.xlu0 %v3154
      %v3156 = vpop.xlane.xlu0 %3155
      %v3157 = vmin.f32 %v2985, %v2986
      %3158 = vmin.xlane.f32.xlu0 %v3157
      %v3159 = vpop.xlane.xlu0 %3158
      %v3160 = vmin.f32 %v2987, %v2988
      %3161 = vmin.xlane.f32.xlu0 %v3160
      %v3162 = vpop.xlane.xlu0 %3161
      %v3163 = vmin.f32 %v2989, %v2990
      %3164 = vmin.xlane.f32.xlu0 %v3163
      %v3165 = vpop.xlane.xlu0 %3164
      %v3166 = vmin.f32 %v2991, %v2992
      %3167 = vmin.xlane.f32.xlu0 %v3166
      %v3168 = vpop.xlane.xlu0 %3167
      %v3169 = vmin.f32 %v2993, %v2994
      %3170 = vmin.xlane.f32.xlu0 %v3169
      %v3171 = vpop.xlane.xlu0 %3170
      %v3172 = vmin.f32 %v2995, %v2996
      %3173 = vmin.xlane.f32.xlu0 %v3172
      %v3174 = vpop.xlane.xlu0 %3173
      %v3175 = vmin.f32 %v2997, %v2998
      %3176 = vmin.xlane.f32.xlu0 %v3175
      %v3177 = vpop.xlane.xlu0 %3176
      %v3178 = vmin.f32 %v2999, %v3000
      %3179 = vmin.xlane.f32.xlu0 %v3178
      %v3180 = vpop.xlane.xlu0 %3179
      %v3181 = vmin.f32 %v3001, %v3002
      %3182 = vmin.xlane.f32.xlu0 %v3181
      %v3183 = vpop.xlane.xlu0 %3182
      %v3184 = vmin.f32 %v3003, %v3004
      %3185 = vmin.xlane.f32.xlu0 %v3184
      %v3186 = vpop.xlane.xlu0 %3185
      %v3187 = vmin.f32 %v3005, %v3006
      %3188 = vmin.xlane.f32.xlu0 %v3187
      %v3189 = vpop.xlane.xlu0 %3188
      %v3190 = vmin.f32 %v3007, %v3008
      %3191 = vmin.xlane.f32.xlu0 %v3190
      %v3192 = vpop.xlane.xlu0 %3191
      %v3193 = vmin.f32 %v3009, %v3010
      %3194 = vmin.xlane.f32.xlu0 %v3193
      %v3195 = vpop.xlane.xlu0 %3194
      %v3196 = vmin.f32 %v3011, %v3012
      %3197 = vmin.xlane.f32.xlu0 %v3196
      %v3198 = vpop.xlane.xlu0 %3197
      %v3199 = vmin.f32 %v3013, %v3014
      %3200 = vmin.xlane.f32.xlu0 %v3199
      %v3201 = vpop.xlane.xlu0 %3200
      %v3202 = vmin.f32 %v3015, %v3016
      %3203 = vmin.xlane.f32.xlu0 %v3202
      %v3204 = vpop.xlane.xlu0 %3203
      %v3205 = vmin.f32 %v3017, %v3018
      %3206 = vmin.xlane.f32.xlu0 %v3205
      %v3207 = vpop.xlane.xlu0 %3206
      %v3208 = vmin.f32 %v3019, %v3020
      %3209 = vmin.xlane.f32.xlu0 %v3208
      %v3210 = vpop.xlane.xlu0 %3209
      %v3211 = vmin.f32 %v3021, %v3022
      %3212 = vmin.xlane.f32.xlu0 %v3211
      %v3213 = vpop.xlane.xlu0 %3212
      %v3214 = vmin.f32 %v3023, %v3024
      %3215 = vmin.xlane.f32.xlu0 %v3214
      %v3216 = vpop.xlane.xlu0 %3215
      %v3217 = vlaneseq
      %v3218 = vand.u32 %v3217, 127
      %v3219 = vadd.s32 %v3218, 128
      %vm3220 = vcmp.le.f32.partialorder %v2897, %v3027
      %vm3221 = vcmp.le.f32.partialorder %v2898, %v3027
      %vm3222 = vcmp.le.f32.partialorder %v2899, %v3030
      %vm3223 = vcmp.le.f32.partialorder %v2900, %v3030
      %vm3224 = vcmp.le.f32.partialorder %v2901, %v3033
      %vm3225 = vcmp.le.f32.partialorder %v2902, %v3033
      %vm3226 = vcmp.le.f32.partialorder %v2903, %v3036
      %vm3227 = vcmp.le.f32.partialorder %v2904, %v3036
      %vm3228 = vcmp.le.f32.partialorder %v2905, %v3039
      %vm3229 = vcmp.le.f32.partialorder %v2906, %v3039
      %vm3230 = vcmp.le.f32.partialorder %v2907, %v3042
      %vm3231 = vcmp.le.f32.partialorder %v2908, %v3042
      %vm3232 = vcmp.le.f32.partialorder %v2909, %v3045
      %vm3233 = vcmp.le.f32.partialorder %v2910, %v3045
      %vm3234 = vcmp.le.f32.partialorder %v2911, %v3048
      %vm3235 = vcmp.le.f32.partialorder %v2912, %v3048
      %vm3236 = vcmp.le.f32.partialorder %v2913, %v3051
      %vm3237 = vcmp.le.f32.partialorder %v2914, %v3051
      %vm3238 = vcmp.le.f32.partialorder %v2915, %v3054
      %vm3239 = vcmp.le.f32.partialorder %v2916, %v3054
      %vm3240 = vcmp.le.f32.partialorder %v2917, %v3057
      %vm3241 = vcmp.le.f32.partialorder %v2918, %v3057
      %vm3242 = vcmp.le.f32.partialorder %v2919, %v3060
      %vm3243 = vcmp.le.f32.partialorder %v2920, %v3060
      %vm3244 = vcmp.le.f32.partialorder %v2921, %v3063
      %vm3245 = vcmp.le.f32.partialorder %v2922, %v3063
      %vm3246 = vcmp.le.f32.partialorder %v2923, %v3066
      %vm3247 = vcmp.le.f32.partialorder %v2924, %v3066
      %vm3248 = vcmp.le.f32.partialorder %v2925, %v3069
      %vm3249 = vcmp.le.f32.partialorder %v2926, %v3069
      %vm3250 = vcmp.le.f32.partialorder %v2927, %v3072
      %vm3251 = vcmp.le.f32.partialorder %v2928, %v3072
      %vm3252 = vcmp.le.f32.partialorder %v2929, %v3075
      %vm3253 = vcmp.le.f32.partialorder %v2930, %v3075
      %vm3254 = vcmp.le.f32.partialorder %v2931, %v3078
      %vm3255 = vcmp.le.f32.partialorder %v2932, %v3078
      %vm3256 = vcmp.le.f32.partialorder %v2933, %v3081
      %vm3257 = vcmp.le.f32.partialorder %v2934, %v3081
      %vm3258 = vcmp.le.f32.partialorder %v2935, %v3084
      %vm3259 = vcmp.le.f32.partialorder %v2936, %v3084
      %vm3260 = vcmp.le.f32.partialorder %v2937, %v3087
      %vm3261 = vcmp.le.f32.partialorder %v2938, %v3087
      %vm3262 = vcmp.le.f32.partialorder %v2939, %v3090
      %vm3263 = vcmp.le.f32.partialorder %v2940, %v3090
      %vm3264 = vcmp.le.f32.partialorder %v2941, %v3093
      %vm3265 = vcmp.le.f32.partialorder %v2942, %v3093
      %vm3266 = vcmp.le.f32.partialorder %v2943, %v3096
      %vm3267 = vcmp.le.f32.partialorder %v2944, %v3096
      %vm3268 = vcmp.le.f32.partialorder %v2945, %v3099
      %vm3269 = vcmp.le.f32.partialorder %v2946, %v3099
      %vm3270 = vcmp.le.f32.partialorder %v2947, %v3102
      %vm3271 = vcmp.le.f32.partialorder %v2948, %v3102
      %vm3272 = vcmp.le.f32.partialorder %v2949, %v3105
      %vm3273 = vcmp.le.f32.partialorder %v2950, %v3105
      %vm3274 = vcmp.le.f32.partialorder %v2951, %v3108
      %vm3275 = vcmp.le.f32.partialorder %v2952, %v3108
      %vm3276 = vcmp.le.f32.partialorder %v2953, %v3111
      %vm3277 = vcmp.le.f32.partialorder %v2954, %v3111
      %vm3278 = vcmp.le.f32.partialorder %v2955, %v3114
      %vm3279 = vcmp.le.f32.partialorder %v2956, %v3114
      %vm3280 = vcmp.le.f32.partialorder %v2957, %v3117
      %vm3281 = vcmp.le.f32.partialorder %v2958, %v3117
      %vm3282 = vcmp.le.f32.partialorder %v2959, %v3120
      %vm3283 = vcmp.le.f32.partialorder %v2960, %v3120
      %vm3284 = vcmp.le.f32.partialorder %v2961, %v3123
      %vm3285 = vcmp.le.f32.partialorder %v2962, %v3123
      %vm3286 = vcmp.le.f32.partialorder %v2963, %v3126
      %vm3287 = vcmp.le.f32.partialorder %v2964, %v3126
      %vm3288 = vcmp.le.f32.partialorder %v2965, %v3129
      %vm3289 = vcmp.le.f32.partialorder %v2966, %v3129
      %vm3290 = vcmp.le.f32.partialorder %v2967, %v3132
      %vm3291 = vcmp.le.f32.partialorder %v2968, %v3132
      %vm3292 = vcmp.le.f32.partialorder %v2969, %v3135
      %vm3293 = vcmp.le.f32.partialorder %v2970, %v3135
      %vm3294 = vcmp.le.f32.partialorder %v2971, %v3138
      %vm3295 = vcmp.le.f32.partialorder %v2972, %v3138
      %vm3296 = vcmp.le.f32.partialorder %v2973, %v3141
      %vm3297 = vcmp.le.f32.partialorder %v2974, %v3141
      %vm3298 = vcmp.le.f32.partialorder %v2975, %v3144
      %vm3299 = vcmp.le.f32.partialorder %v2976, %v3144
      %vm3300 = vcmp.le.f32.partialorder %v2977, %v3147
      %vm3301 = vcmp.le.f32.partialorder %v2978, %v3147
      %vm3302 = vcmp.le.f32.partialorder %v2979, %v3150
      %vm3303 = vcmp.le.f32.partialorder %v2980, %v3150
      %vm3304 = vcmp.le.f32.partialorder %v2981, %v3153
      %vm3305 = vcmp.le.f32.partialorder %v2982, %v3153
      %vm3306 = vcmp.le.f32.partialorder %v2983, %v3156
      %vm3307 = vcmp.le.f32.partialorder %v2984, %v3156
      %vm3308 = vcmp.le.f32.partialorder %v2985, %v3159
      %vm3309 = vcmp.le.f32.partialorder %v2986, %v3159
      %vm3310 = vcmp.le.f32.partialorder %v2987, %v3162
      %vm3311 = vcmp.le.f32.partialorder %v2988, %v3162
      %vm3312 = vcmp.le.f32.partialorder %v2989, %v3165
      %vm3313 = vcmp.le.f32.partialorder %v2990, %v3165
      %vm3314 = vcmp.le.f32.partialorder %v2991, %v3168
      %vm3315 = vcmp.le.f32.partialorder %v2992, %v3168
      %vm3316 = vcmp.le.f32.partialorder %v2993, %v3171
      %vm3317 = vcmp.le.f32.partialorder %v2994, %v3171
      %vm3318 = vcmp.le.f32.partialorder %v2995, %v3174
      %vm3319 = vcmp.le.f32.partialorder %v2996, %v3174
      %vm3320 = vcmp.le.f32.partialorder %v2997, %v3177
      %vm3321 = vcmp.le.f32.partialorder %v2998, %v3177
      %vm3322 = vcmp.le.f32.partialorder %v2999, %v3180
      %vm3323 = vcmp.le.f32.partialorder %v3000, %v3180
      %vm3324 = vcmp.le.f32.partialorder %v3001, %v3183
      %vm3325 = vcmp.le.f32.partialorder %v3002, %v3183
      %vm3326 = vcmp.le.f32.partialorder %v3003, %v3186
      %vm3327 = vcmp.le.f32.partialorder %v3004, %v3186
      %vm3328 = vcmp.le.f32.partialorder %v3005, %v3189
      %vm3329 = vcmp.le.f32.partialorder %v3006, %v3189
      %vm3330 = vcmp.le.f32.partialorder %v3007, %v3192
      %vm3331 = vcmp.le.f32.partialorder %v3008, %v3192
      %vm3332 = vcmp.le.f32.partialorder %v3009, %v3195
      %vm3333 = vcmp.le.f32.partialorder %v3010, %v3195
      %vm3334 = vcmp.le.f32.partialorder %v3011, %v3198
      %vm3335 = vcmp.le.f32.partialorder %v3012, %v3198
      %vm3336 = vcmp.le.f32.partialorder %v3013, %v3201
      %vm3337 = vcmp.le.f32.partialorder %v3014, %v3201
      %vm3338 = vcmp.le.f32.partialorder %v3015, %v3204
      %vm3339 = vcmp.le.f32.partialorder %v3016, %v3204
      %vm3340 = vcmp.le.f32.partialorder %v3017, %v3207
      %vm3341 = vcmp.le.f32.partialorder %v3018, %v3207
      %vm3342 = vcmp.le.f32.partialorder %v3019, %v3210
      %vm3343 = vcmp.le.f32.partialorder %v3020, %v3210
      %vm3344 = vcmp.le.f32.partialorder %v3021, %v3213
      %vm3345 = vcmp.le.f32.partialorder %v3022, %v3213
      %vm3346 = vcmp.le.f32.partialorder %v3023, %v3216
      %vm3347 = vcmp.le.f32.partialorder %v3024, %v3216
      %v3348 = vsel %vm3220, %v3218, 256
      %v3349 = vsel %vm3221, %v3219, 256
      %v3350 = vsel %vm3222, %v3218, 256
      %v3351 = vsel %vm3223, %v3219, 256
      %v3352 = vsel %vm3224, %v3218, 256
      %v3353 = vsel %vm3225, %v3219, 256
      %v3354 = vsel %vm3226, %v3218, 256
      %v3355 = vsel %vm3227, %v3219, 256
      %v3356 = vsel %vm3228, %v3218, 256
      %v3357 = vsel %vm3229, %v3219, 256
      %v3358 = vsel %vm3230, %v3218, 256
      %v3359 = vsel %vm3231, %v3219, 256
      %v3360 = vsel %vm3232, %v3218, 256
      %v3361 = vsel %vm3233, %v3219, 256
      %v3362 = vsel %vm3234, %v3218, 256
      %v3363 = vsel %vm3235, %v3219, 256
      %v3364 = vsel %vm3236, %v3218, 256
      %v3365 = vsel %vm3237, %v3219, 256
      %v3366 = vsel %vm3238, %v3218, 256
      %v3367 = vsel %vm3239, %v3219, 256
      %v3368 = vsel %vm3240, %v3218, 256
      %v3369 = vsel %vm3241, %v3219, 256
      %v3370 = vsel %vm3242, %v3218, 256
      %v3371 = vsel %vm3243, %v3219, 256
      %v3372 = vsel %vm3244, %v3218, 256
      %v3373 = vsel %vm3245, %v3219, 256
      %v3374 = vsel %vm3246, %v3218, 256
      %v3375 = vsel %vm3247, %v3219, 256
      %v3376 = vsel %vm3248, %v3218, 256
      %v3377 = vsel %vm3249, %v3219, 256
      %v3378 = vsel %vm3250, %v3218, 256
      %v3379 = vsel %vm3251, %v3219, 256
      %v3380 = vsel %vm3252, %v3218, 256
      %v3381 = vsel %vm3253, %v3219, 256
      %v3382 = vsel %vm3254, %v3218, 256
      %v3383 = vsel %vm3255, %v3219, 256
      %v3384 = vsel %vm3256, %v3218, 256
      %v3385 = vsel %vm3257, %v3219, 256
      %v3386 = vsel %vm3258, %v3218, 256
      %v3387 = vsel %vm3259, %v3219, 256
      %v3388 = vsel %vm3260, %v3218, 256
      %v3389 = vsel %vm3261, %v3219, 256
      %v3390 = vsel %vm3262, %v3218, 256
      %v3391 = vsel %vm3263, %v3219, 256
      %v3392 = vsel %vm3264, %v3218, 256
      %v3393 = vsel %vm3265, %v3219, 256
      %v3394 = vsel %vm3266, %v3218, 256
      %v3395 = vsel %vm3267, %v3219, 256
      %v3396 = vsel %vm3268, %v3218, 256
      %v3397 = vsel %vm3269, %v3219, 256
      %v3398 = vsel %vm3270, %v3218, 256
      %v3399 = vsel %vm3271, %v3219, 256
      %v3400 = vsel %vm3272, %v3218, 256
      %v3401 = vsel %vm3273, %v3219, 256
      %v3402 = vsel %vm3274, %v3218, 256
      %v3403 = vsel %vm3275, %v3219, 256
      %v3404 = vsel %vm3276, %v3218, 256
      %v3405 = vsel %vm3277, %v3219, 256
      %v3406 = vsel %vm3278, %v3218, 256
      %v3407 = vsel %vm3279, %v3219, 256
      %v3408 = vsel %vm3280, %v3218, 256
      %v3409 = vsel %vm3281, %v3219, 256
      %v3410 = vsel %vm3282, %v3218, 256
      %v3411 = vsel %vm3283, %v3219, 256
      %v3412 = vsel %vm3284, %v3218, 256
      %v3413 = vsel %vm3285, %v3219, 256
      %v3414 = vsel %vm3286, %v3218, 256
      %v3415 = vsel %vm3287, %v3219, 256
      %v3416 = vsel %vm3288, %v3218, 256
      %v3417 = vsel %vm3289, %v3219, 256
      %v3418 = vsel %vm3290, %v3218, 256
      %v3419 = vsel %vm3291, %v3219, 256
      %v3420 = vsel %vm3292, %v3218, 256
      %v3421 = vsel %vm3293, %v3219, 256
      %v3422 = vsel %vm3294, %v3218, 256
      %v3423 = vsel %vm3295, %v3219, 256
      %v3424 = vsel %vm3296, %v3218, 256
      %v3425 = vsel %vm3297, %v3219, 256
      %v3426 = vsel %vm3298, %v3218, 256
      %v3427 = vsel %vm3299, %v3219, 256
      %v3428 = vsel %vm3300, %v3218, 256
      %v3429 = vsel %vm3301, %v3219, 256
      %v3430 = vsel %vm3302, %v3218, 256
      %v3431 = vsel %vm3303, %v3219, 256
      %v3432 = vsel %vm3304, %v3218, 256
      %v3433 = vsel %vm3305, %v3219, 256
      %v3434 = vsel %vm3306, %v3218, 256
      %v3435 = vsel %vm3307, %v3219, 256
      %v3436 = vsel %vm3308, %v3218, 256
      %v3437 = vsel %vm3309, %v3219, 256
      %v3438 = vsel %vm3310, %v3218, 256
      %v3439 = vsel %vm3311, %v3219, 256
      %v3440 = vsel %vm3312, %v3218, 256
      %v3441 = vsel %vm3313, %v3219, 256
      %v3442 = vsel %vm3314, %v3218, 256
      %v3443 = vsel %vm3315, %v3219, 256
      %v3444 = vsel %vm3316, %v3218, 256
      %v3445 = vsel %vm3317, %v3219, 256
      %v3446 = vsel %vm3318, %v3218, 256
      %v3447 = vsel %vm3319, %v3219, 256
      %v3448 = vsel %vm3320, %v3218, 256
      %v3449 = vsel %vm3321, %v3219, 256
      %v3450 = vsel %vm3322, %v3218, 256
      %v3451 = vsel %vm3323, %v3219, 256
      %v3452 = vsel %vm3324, %v3218, 256
      %v3453 = vsel %vm3325, %v3219, 256
      %v3454 = vsel %vm3326, %v3218, 256
      %v3455 = vsel %vm3327, %v3219, 256
      %v3456 = vsel %vm3328, %v3218, 256
      %v3457 = vsel %vm3329, %v3219, 256
      %v3458 = vsel %vm3330, %v3218, 256
      %v3459 = vsel %vm3331, %v3219, 256
      %v3460 = vsel %vm3332, %v3218, 256
      %v3461 = vsel %vm3333, %v3219, 256
      %v3462 = vsel %vm3334, %v3218, 256
      %v3463 = vsel %vm3335, %v3219, 256
      %v3464 = vsel %vm3336, %v3218, 256
      %v3465 = vsel %vm3337, %v3219, 256
      %v3466 = vsel %vm3338, %v3218, 256
      %v3467 = vsel %vm3339, %v3219, 256
      %v3468 = vsel %vm3340, %v3218, 256
      %v3469 = vsel %vm3341, %v3219, 256
      %v3470 = vsel %vm3342, %v3218, 256
      %v3471 = vsel %vm3343, %v3219, 256
      %v3472 = vsel %vm3344, %v3218, 256
      %v3473 = vsel %vm3345, %v3219, 256
      %v3474 = vsel %vm3346, %v3218, 256
      %v3475 = vsel %vm3347, %v3219, 256
      %vm3476 = vcmp.lt.s32.totalorder %v3348, %v3349
      %v3477 = vsel %vm3476, %v3348, %v3349
      %v3478 = vand.u32 %v3477, 65535
      %v3479 = vshra.s32 %v3477, 16
      %v3480 = vcvt.s32.f32 %v3478
      %v3481 = vcvt.s32.f32 %v3479
      %3482 = vmin.xlane.f32.xlu0 %v3481
      %v3483 = vpop.xlane.xlu0 %3482
      %vm3484 = vcmp.eq.f32.partialorder %v3481, %v3483
      %v3485 = vsel %vm3484, %v3480, inf
      %3486 = vmin.xlane.f32.xlu0 %v3485
      %v3487 = vpop.xlane.xlu0 %3486
      %v3488 = vcvt.f32.s32 %v3487
      %v3489 = vcvt.f32.s32 %v3483
      %v3490 = vshll.u32 %v3489, 16
      %v3491 = vadd.s32 %v3490, %v3488
      %vm3492 = vcmp.lt.s32.totalorder %v3350, %v3351
      %v3493 = vsel %vm3492, %v3350, %v3351
      %v3494 = vand.u32 %v3493, 65535
      %v3495 = vshra.s32 %v3493, 16
      %v3496 = vcvt.s32.f32 %v3494
      %v3497 = vcvt.s32.f32 %v3495
      %3498 = vmin.xlane.f32.xlu0 %v3497
      %v3499 = vpop.xlane.xlu0 %3498
      %vm3500 = vcmp.eq.f32.partialorder %v3497, %v3499
      %v3501 = vsel %vm3500, %v3496, inf
      %3502 = vmin.xlane.f32.xlu0 %v3501
      %v3503 = vpop.xlane.xlu0 %3502
      %v3504 = vcvt.f32.s32 %v3503
      %v3505 = vcvt.f32.s32 %v3499
      %v3506 = vshll.u32 %v3505, 16
      %v3507 = vadd.s32 %v3506, %v3504
      %vm3508 = vcmp.lt.s32.totalorder %v3352, %v3353
      %v3509 = vsel %vm3508, %v3352, %v3353
      %v3510 = vand.u32 %v3509, 65535
      %v3511 = vshra.s32 %v3509, 16
      %v3512 = vcvt.s32.f32 %v3510
      %v3513 = vcvt.s32.f32 %v3511
      %3514 = vmin.xlane.f32.xlu0 %v3513
      %v3515 = vpop.xlane.xlu0 %3514
      %vm3516 = vcmp.eq.f32.partialorder %v3513, %v3515
      %v3517 = vsel %vm3516, %v3512, inf
      %3518 = vmin.xlane.f32.xlu0 %v3517
      %v3519 = vpop.xlane.xlu0 %3518
      %v3520 = vcvt.f32.s32 %v3519
      %v3521 = vcvt.f32.s32 %v3515
      %v3522 = vshll.u32 %v3521, 16
      %v3523 = vadd.s32 %v3522, %v3520
      %vm3524 = vcmp.lt.s32.totalorder %v3354, %v3355
      %v3525 = vsel %vm3524, %v3354, %v3355
      %v3526 = vand.u32 %v3525, 65535
      %v3527 = vshra.s32 %v3525, 16
      %v3528 = vcvt.s32.f32 %v3526
      %v3529 = vcvt.s32.f32 %v3527
      %3530 = vmin.xlane.f32.xlu0 %v3529
      %v3531 = vpop.xlane.xlu0 %3530
      %vm3532 = vcmp.eq.f32.partialorder %v3529, %v3531
      %v3533 = vsel %vm3532, %v3528, inf
      %3534 = vmin.xlane.f32.xlu0 %v3533
      %v3535 = vpop.xlane.xlu0 %3534
      %v3536 = vcvt.f32.s32 %v3535
      %v3537 = vcvt.f32.s32 %v3531
      %v3538 = vshll.u32 %v3537, 16
      %v3539 = vadd.s32 %v3538, %v3536
      %vm3540 = vcmp.lt.s32.totalorder %v3356, %v3357
      %v3541 = vsel %vm3540, %v3356, %v3357
      %v3542 = vand.u32 %v3541, 65535
      %v3543 = vshra.s32 %v3541, 16
      %v3544 = vcvt.s32.f32 %v3542
      %v3545 = vcvt.s32.f32 %v3543
      %3546 = vmin.xlane.f32.xlu0 %v3545
      %v3547 = vpop.xlane.xlu0 %3546
      %vm3548 = vcmp.eq.f32.partialorder %v3545, %v3547
      %v3549 = vsel %vm3548, %v3544, inf
      %3550 = vmin.xlane.f32.xlu0 %v3549
      %v3551 = vpop.xlane.xlu0 %3550
      %v3552 = vcvt.f32.s32 %v3551
      %v3553 = vcvt.f32.s32 %v3547
      %v3554 = vshll.u32 %v3553, 16
      %v3555 = vadd.s32 %v3554, %v3552
      %vm3556 = vcmp.lt.s32.totalorder %v3358, %v3359
      %v3557 = vsel %vm3556, %v3358, %v3359
      %v3558 = vand.u32 %v3557, 65535
      %v3559 = vshra.s32 %v3557, 16
      %v3560 = vcvt.s32.f32 %v3558
      %v3561 = vcvt.s32.f32 %v3559
      %3562 = vmin.xlane.f32.xlu0 %v3561
      %v3563 = vpop.xlane.xlu0 %3562
      %vm3564 = vcmp.eq.f32.partialorder %v3561, %v3563
      %v3565 = vsel %vm3564, %v3560, inf
      %3566 = vmin.xlane.f32.xlu0 %v3565
      %v3567 = vpop.xlane.xlu0 %3566
      %v3568 = vcvt.f32.s32 %v3567
      %v3569 = vcvt.f32.s32 %v3563
      %v3570 = vshll.u32 %v3569, 16
      %v3571 = vadd.s32 %v3570, %v3568
      %vm3572 = vcmp.lt.s32.totalorder %v3360, %v3361
      %v3573 = vsel %vm3572, %v3360, %v3361
      %v3574 = vand.u32 %v3573, 65535
      %v3575 = vshra.s32 %v3573, 16
      %v3576 = vcvt.s32.f32 %v3574
      %v3577 = vcvt.s32.f32 %v3575
      %3578 = vmin.xlane.f32.xlu0 %v3577
      %v3579 = vpop.xlane.xlu0 %3578
      %vm3580 = vcmp.eq.f32.partialorder %v3577, %v3579
      %v3581 = vsel %vm3580, %v3576, inf
      %3582 = vmin.xlane.f32.xlu0 %v3581
      %v3583 = vpop.xlane.xlu0 %3582
      %v3584 = vcvt.f32.s32 %v3583
      %v3585 = vcvt.f32.s32 %v3579
      %v3586 = vshll.u32 %v3585, 16
      %v3587 = vadd.s32 %v3586, %v3584
      %vm3588 = vcmp.lt.s32.totalorder %v3362, %v3363
      %v3589 = vsel %vm3588, %v3362, %v3363
      %v3590 = vand.u32 %v3589, 65535
      %v3591 = vshra.s32 %v3589, 16
      %v3592 = vcvt.s32.f32 %v3590
      %v3593 = vcvt.s32.f32 %v3591
      %3594 = vmin.xlane.f32.xlu0 %v3593
      %v3595 = vpop.xlane.xlu0 %3594
      %vm3596 = vcmp.eq.f32.partialorder %v3593, %v3595
      %v3597 = vsel %vm3596, %v3592, inf
      %3598 = vmin.xlane.f32.xlu0 %v3597
      %v3599 = vpop.xlane.xlu0 %3598
      %v3600 = vcvt.f32.s32 %v3599
      %v3601 = vcvt.f32.s32 %v3595
      %v3602 = vshll.u32 %v3601, 16
      %v3603 = vadd.s32 %v3602, %v3600
      %vm3604 = vcmp.lt.s32.totalorder %v3364, %v3365
      %v3605 = vsel %vm3604, %v3364, %v3365
      %v3606 = vand.u32 %v3605, 65535
      %v3607 = vshra.s32 %v3605, 16
      %v3608 = vcvt.s32.f32 %v3606
      %v3609 = vcvt.s32.f32 %v3607
      %3610 = vmin.xlane.f32.xlu0 %v3609
      %v3611 = vpop.xlane.xlu0 %3610
      %vm3612 = vcmp.eq.f32.partialorder %v3609, %v3611
      %v3613 = vsel %vm3612, %v3608, inf
      %3614 = vmin.xlane.f32.xlu0 %v3613
      %v3615 = vpop.xlane.xlu0 %3614
      %v3616 = vcvt.f32.s32 %v3615
      %v3617 = vcvt.f32.s32 %v3611
      %v3618 = vshll.u32 %v3617, 16
      %v3619 = vadd.s32 %v3618, %v3616
      %vm3620 = vcmp.lt.s32.totalorder %v3366, %v3367
      %v3621 = vsel %vm3620, %v3366, %v3367
      %v3622 = vand.u32 %v3621, 65535
      %v3623 = vshra.s32 %v3621, 16
      %v3624 = vcvt.s32.f32 %v3622
      %v3625 = vcvt.s32.f32 %v3623
      %3626 = vmin.xlane.f32.xlu0 %v3625
      %v3627 = vpop.xlane.xlu0 %3626
      %vm3628 = vcmp.eq.f32.partialorder %v3625, %v3627
      %v3629 = vsel %vm3628, %v3624, inf
      %3630 = vmin.xlane.f32.xlu0 %v3629
      %v3631 = vpop.xlane.xlu0 %3630
      %v3632 = vcvt.f32.s32 %v3631
      %v3633 = vcvt.f32.s32 %v3627
      %v3634 = vshll.u32 %v3633, 16
      %v3635 = vadd.s32 %v3634, %v3632
      %vm3636 = vcmp.lt.s32.totalorder %v3368, %v3369
      %v3637 = vsel %vm3636, %v3368, %v3369
      %v3638 = vand.u32 %v3637, 65535
      %v3639 = vshra.s32 %v3637, 16
      %v3640 = vcvt.s32.f32 %v3638
      %v3641 = vcvt.s32.f32 %v3639
      %3642 = vmin.xlane.f32.xlu0 %v3641
      %v3643 = vpop.xlane.xlu0 %3642
      %vm3644 = vcmp.eq.f32.partialorder %v3641, %v3643
      %v3645 = vsel %vm3644, %v3640, inf
      %3646 = vmin.xlane.f32.xlu0 %v3645
      %v3647 = vpop.xlane.xlu0 %3646
      %v3648 = vcvt.f32.s32 %v3647
      %v3649 = vcvt.f32.s32 %v3643
      %v3650 = vshll.u32 %v3649, 16
      %v3651 = vadd.s32 %v3650, %v3648
      %vm3652 = vcmp.lt.s32.totalorder %v3370, %v3371
      %v3653 = vsel %vm3652, %v3370, %v3371
      %v3654 = vand.u32 %v3653, 65535
      %v3655 = vshra.s32 %v3653, 16
      %v3656 = vcvt.s32.f32 %v3654
      %v3657 = vcvt.s32.f32 %v3655
      %3658 = vmin.xlane.f32.xlu0 %v3657
      %v3659 = vpop.xlane.xlu0 %3658
      %vm3660 = vcmp.eq.f32.partialorder %v3657, %v3659
      %v3661 = vsel %vm3660, %v3656, inf
      %3662 = vmin.xlane.f32.xlu0 %v3661
      %v3663 = vpop.xlane.xlu0 %3662
      %v3664 = vcvt.f32.s32 %v3663
      %v3665 = vcvt.f32.s32 %v3659
      %v3666 = vshll.u32 %v3665, 16
      %v3667 = vadd.s32 %v3666, %v3664
      %vm3668 = vcmp.lt.s32.totalorder %v3372, %v3373
      %v3669 = vsel %vm3668, %v3372, %v3373
      %v3670 = vand.u32 %v3669, 65535
      %v3671 = vshra.s32 %v3669, 16
      %v3672 = vcvt.s32.f32 %v3670
      %v3673 = vcvt.s32.f32 %v3671
      %3674 = vmin.xlane.f32.xlu0 %v3673
      %v3675 = vpop.xlane.xlu0 %3674
      %vm3676 = vcmp.eq.f32.partialorder %v3673, %v3675
      %v3677 = vsel %vm3676, %v3672, inf
      %3678 = vmin.xlane.f32.xlu0 %v3677
      %v3679 = vpop.xlane.xlu0 %3678
      %v3680 = vcvt.f32.s32 %v3679
      %v3681 = vcvt.f32.s32 %v3675
      %v3682 = vshll.u32 %v3681, 16
      %v3683 = vadd.s32 %v3682, %v3680
      %vm3684 = vcmp.lt.s32.totalorder %v3374, %v3375
      %v3685 = vsel %vm3684, %v3374, %v3375
      %v3686 = vand.u32 %v3685, 65535
      %v3687 = vshra.s32 %v3685, 16
      %v3688 = vcvt.s32.f32 %v3686
      %v3689 = vcvt.s32.f32 %v3687
      %3690 = vmin.xlane.f32.xlu0 %v3689
      %v3691 = vpop.xlane.xlu0 %3690
      %vm3692 = vcmp.eq.f32.partialorder %v3689, %v3691
      %v3693 = vsel %vm3692, %v3688, inf
      %3694 = vmin.xlane.f32.xlu0 %v3693
      %v3695 = vpop.xlane.xlu0 %3694
      %v3696 = vcvt.f32.s32 %v3695
      %v3697 = vcvt.f32.s32 %v3691
      %v3698 = vshll.u32 %v3697, 16
      %v3699 = vadd.s32 %v3698, %v3696
      %vm3700 = vcmp.lt.s32.totalorder %v3376, %v3377
      %v3701 = vsel %vm3700, %v3376, %v3377
      %v3702 = vand.u32 %v3701, 65535
      %v3703 = vshra.s32 %v3701, 16
      %v3704 = vcvt.s32.f32 %v3702
      %v3705 = vcvt.s32.f32 %v3703
      %3706 = vmin.xlane.f32.xlu0 %v3705
      %v3707 = vpop.xlane.xlu0 %3706
      %vm3708 = vcmp.eq.f32.partialorder %v3705, %v3707
      %v3709 = vsel %vm3708, %v3704, inf
      %3710 = vmin.xlane.f32.xlu0 %v3709
      %v3711 = vpop.xlane.xlu0 %3710
      %v3712 = vcvt.f32.s32 %v3711
      %v3713 = vcvt.f32.s32 %v3707
      %v3714 = vshll.u32 %v3713, 16
      %v3715 = vadd.s32 %v3714, %v3712
      %vm3716 = vcmp.lt.s32.totalorder %v3378, %v3379
      %v3717 = vsel %vm3716, %v3378, %v3379
      %v3718 = vand.u32 %v3717, 65535
      %v3719 = vshra.s32 %v3717, 16
      %v3720 = vcvt.s32.f32 %v3718
      %v3721 = vcvt.s32.f32 %v3719
      %3722 = vmin.xlane.f32.xlu0 %v3721
      %v3723 = vpop.xlane.xlu0 %3722
      %vm3724 = vcmp.eq.f32.partialorder %v3721, %v3723
      %v3725 = vsel %vm3724, %v3720, inf
      %3726 = vmin.xlane.f32.xlu0 %v3725
      %v3727 = vpop.xlane.xlu0 %3726
      %v3728 = vcvt.f32.s32 %v3727
      %v3729 = vcvt.f32.s32 %v3723
      %v3730 = vshll.u32 %v3729, 16
      %v3731 = vadd.s32 %v3730, %v3728
      %vm3732 = vcmp.lt.s32.totalorder %v3380, %v3381
      %v3733 = vsel %vm3732, %v3380, %v3381
      %v3734 = vand.u32 %v3733, 65535
      %v3735 = vshra.s32 %v3733, 16
      %v3736 = vcvt.s32.f32 %v3734
      %v3737 = vcvt.s32.f32 %v3735
      %3738 = vmin.xlane.f32.xlu0 %v3737
      %v3739 = vpop.xlane.xlu0 %3738
      %vm3740 = vcmp.eq.f32.partialorder %v3737, %v3739
      %v3741 = vsel %vm3740, %v3736, inf
      %3742 = vmin.xlane.f32.xlu0 %v3741
      %v3743 = vpop.xlane.xlu0 %3742
      %v3744 = vcvt.f32.s32 %v3743
      %v3745 = vcvt.f32.s32 %v3739
      %v3746 = vshll.u32 %v3745, 16
      %v3747 = vadd.s32 %v3746, %v3744
      %vm3748 = vcmp.lt.s32.totalorder %v3382, %v3383
      %v3749 = vsel %vm3748, %v3382, %v3383
      %v3750 = vand.u32 %v3749, 65535
      %v3751 = vshra.s32 %v3749, 16
      %v3752 = vcvt.s32.f32 %v3750
      %v3753 = vcvt.s32.f32 %v3751
      %3754 = vmin.xlane.f32.xlu0 %v3753
      %v3755 = vpop.xlane.xlu0 %3754
      %vm3756 = vcmp.eq.f32.partialorder %v3753, %v3755
      %v3757 = vsel %vm3756, %v3752, inf
      %3758 = vmin.xlane.f32.xlu0 %v3757
      %v3759 = vpop.xlane.xlu0 %3758
      %v3760 = vcvt.f32.s32 %v3759
      %v3761 = vcvt.f32.s32 %v3755
      %v3762 = vshll.u32 %v3761, 16
      %v3763 = vadd.s32 %v3762, %v3760
      %vm3764 = vcmp.lt.s32.totalorder %v3384, %v3385
      %v3765 = vsel %vm3764, %v3384, %v3385
      %v3766 = vand.u32 %v3765, 65535
      %v3767 = vshra.s32 %v3765, 16
      %v3768 = vcvt.s32.f32 %v3766
      %v3769 = vcvt.s32.f32 %v3767
      %3770 = vmin.xlane.f32.xlu0 %v3769
      %v3771 = vpop.xlane.xlu0 %3770
      %vm3772 = vcmp.eq.f32.partialorder %v3769, %v3771
      %v3773 = vsel %vm3772, %v3768, inf
      %3774 = vmin.xlane.f32.xlu0 %v3773
      %v3775 = vpop.xlane.xlu0 %3774
      %v3776 = vcvt.f32.s32 %v3775
      %v3777 = vcvt.f32.s32 %v3771
      %v3778 = vshll.u32 %v3777, 16
      %v3779 = vadd.s32 %v3778, %v3776
      %vm3780 = vcmp.lt.s32.totalorder %v3386, %v3387
      %v3781 = vsel %vm3780, %v3386, %v3387
      %v3782 = vand.u32 %v3781, 65535
      %v3783 = vshra.s32 %v3781, 16
      %v3784 = vcvt.s32.f32 %v3782
      %v3785 = vcvt.s32.f32 %v3783
      %3786 = vmin.xlane.f32.xlu0 %v3785
      %v3787 = vpop.xlane.xlu0 %3786
      %vm3788 = vcmp.eq.f32.partialorder %v3785, %v3787
      %v3789 = vsel %vm3788, %v3784, inf
      %3790 = vmin.xlane.f32.xlu0 %v3789
      %v3791 = vpop.xlane.xlu0 %3790
      %v3792 = vcvt.f32.s32 %v3791
      %v3793 = vcvt.f32.s32 %v3787
      %v3794 = vshll.u32 %v3793, 16
      %v3795 = vadd.s32 %v3794, %v3792
      %vm3796 = vcmp.lt.s32.totalorder %v3388, %v3389
      %v3797 = vsel %vm3796, %v3388, %v3389
      %v3798 = vand.u32 %v3797, 65535
      %v3799 = vshra.s32 %v3797, 16
      %v3800 = vcvt.s32.f32 %v3798
      %v3801 = vcvt.s32.f32 %v3799
      %3802 = vmin.xlane.f32.xlu0 %v3801
      %v3803 = vpop.xlane.xlu0 %3802
      %vm3804 = vcmp.eq.f32.partialorder %v3801, %v3803
      %v3805 = vsel %vm3804, %v3800, inf
      %3806 = vmin.xlane.f32.xlu0 %v3805
      %v3807 = vpop.xlane.xlu0 %3806
      %v3808 = vcvt.f32.s32 %v3807
      %v3809 = vcvt.f32.s32 %v3803
      %v3810 = vshll.u32 %v3809, 16
      %v3811 = vadd.s32 %v3810, %v3808
      %vm3812 = vcmp.lt.s32.totalorder %v3390, %v3391
      %v3813 = vsel %vm3812, %v3390, %v3391
      %v3814 = vand.u32 %v3813, 65535
      %v3815 = vshra.s32 %v3813, 16
      %v3816 = vcvt.s32.f32 %v3814
      %v3817 = vcvt.s32.f32 %v3815
      %3818 = vmin.xlane.f32.xlu0 %v3817
      %v3819 = vpop.xlane.xlu0 %3818
      %vm3820 = vcmp.eq.f32.partialorder %v3817, %v3819
      %v3821 = vsel %vm3820, %v3816, inf
      %3822 = vmin.xlane.f32.xlu0 %v3821
      %v3823 = vpop.xlane.xlu0 %3822
      %v3824 = vcvt.f32.s32 %v3823
      %v3825 = vcvt.f32.s32 %v3819
      %v3826 = vshll.u32 %v3825, 16
      %v3827 = vadd.s32 %v3826, %v3824
      %vm3828 = vcmp.lt.s32.totalorder %v3392, %v3393
      %v3829 = vsel %vm3828, %v3392, %v3393
      %v3830 = vand.u32 %v3829, 65535
      %v3831 = vshra.s32 %v3829, 16
      %v3832 = vcvt.s32.f32 %v3830
      %v3833 = vcvt.s32.f32 %v3831
      %3834 = vmin.xlane.f32.xlu0 %v3833
      %v3835 = vpop.xlane.xlu0 %3834
      %vm3836 = vcmp.eq.f32.partialorder %v3833, %v3835
      %v3837 = vsel %vm3836, %v3832, inf
      %3838 = vmin.xlane.f32.xlu0 %v3837
      %v3839 = vpop.xlane.xlu0 %3838
      %v3840 = vcvt.f32.s32 %v3839
      %v3841 = vcvt.f32.s32 %v3835
      %v3842 = vshll.u32 %v3841, 16
      %v3843 = vadd.s32 %v3842, %v3840
      %vm3844 = vcmp.lt.s32.totalorder %v3394, %v3395
      %v3845 = vsel %vm3844, %v3394, %v3395
      %v3846 = vand.u32 %v3845, 65535
      %v3847 = vshra.s32 %v3845, 16
      %v3848 = vcvt.s32.f32 %v3846
      %v3849 = vcvt.s32.f32 %v3847
      %3850 = vmin.xlane.f32.xlu0 %v3849
      %v3851 = vpop.xlane.xlu0 %3850
      %vm3852 = vcmp.eq.f32.partialorder %v3849, %v3851
      %v3853 = vsel %vm3852, %v3848, inf
      %3854 = vmin.xlane.f32.xlu0 %v3853
      %v3855 = vpop.xlane.xlu0 %3854
      %v3856 = vcvt.f32.s32 %v3855
      %v3857 = vcvt.f32.s32 %v3851
      %v3858 = vshll.u32 %v3857, 16
      %v3859 = vadd.s32 %v3858, %v3856
      %vm3860 = vcmp.lt.s32.totalorder %v3396, %v3397
      %v3861 = vsel %vm3860, %v3396, %v3397
      %v3862 = vand.u32 %v3861, 65535
      %v3863 = vshra.s32 %v3861, 16
      %v3864 = vcvt.s32.f32 %v3862
      %v3865 = vcvt.s32.f32 %v3863
      %3866 = vmin.xlane.f32.xlu0 %v3865
      %v3867 = vpop.xlane.xlu0 %3866
      %vm3868 = vcmp.eq.f32.partialorder %v3865, %v3867
      %v3869 = vsel %vm3868, %v3864, inf
      %3870 = vmin.xlane.f32.xlu0 %v3869
      %v3871 = vpop.xlane.xlu0 %3870
      %v3872 = vcvt.f32.s32 %v3871
      %v3873 = vcvt.f32.s32 %v3867
      %v3874 = vshll.u32 %v3873, 16
      %v3875 = vadd.s32 %v3874, %v3872
      %vm3876 = vcmp.lt.s32.totalorder %v3398, %v3399
      %v3877 = vsel %vm3876, %v3398, %v3399
      %v3878 = vand.u32 %v3877, 65535
      %v3879 = vshra.s32 %v3877, 16
      %v3880 = vcvt.s32.f32 %v3878
      %v3881 = vcvt.s32.f32 %v3879
      %3882 = vmin.xlane.f32.xlu0 %v3881
      %v3883 = vpop.xlane.xlu0 %3882
      %vm3884 = vcmp.eq.f32.partialorder %v3881, %v3883
      %v3885 = vsel %vm3884, %v3880, inf
      %3886 = vmin.xlane.f32.xlu0 %v3885
      %v3887 = vpop.xlane.xlu0 %3886
      %v3888 = vcvt.f32.s32 %v3887
      %v3889 = vcvt.f32.s32 %v3883
      %v3890 = vshll.u32 %v3889, 16
      %v3891 = vadd.s32 %v3890, %v3888
      %vm3892 = vcmp.lt.s32.totalorder %v3400, %v3401
      %v3893 = vsel %vm3892, %v3400, %v3401
      %v3894 = vand.u32 %v3893, 65535
      %v3895 = vshra.s32 %v3893, 16
      %v3896 = vcvt.s32.f32 %v3894
      %v3897 = vcvt.s32.f32 %v3895
      %3898 = vmin.xlane.f32.xlu0 %v3897
      %v3899 = vpop.xlane.xlu0 %3898
      %vm3900 = vcmp.eq.f32.partialorder %v3897, %v3899
      %v3901 = vsel %vm3900, %v3896, inf
      %3902 = vmin.xlane.f32.xlu0 %v3901
      %v3903 = vpop.xlane.xlu0 %3902
      %v3904 = vcvt.f32.s32 %v3903
      %v3905 = vcvt.f32.s32 %v3899
      %v3906 = vshll.u32 %v3905, 16
      %v3907 = vadd.s32 %v3906, %v3904
      %vm3908 = vcmp.lt.s32.totalorder %v3402, %v3403
      %v3909 = vsel %vm3908, %v3402, %v3403
      %v3910 = vand.u32 %v3909, 65535
      %v3911 = vshra.s32 %v3909, 16
      %v3912 = vcvt.s32.f32 %v3910
      %v3913 = vcvt.s32.f32 %v3911
      %3914 = vmin.xlane.f32.xlu0 %v3913
      %v3915 = vpop.xlane.xlu0 %3914
      %vm3916 = vcmp.eq.f32.partialorder %v3913, %v3915
      %v3917 = vsel %vm3916, %v3912, inf
      %3918 = vmin.xlane.f32.xlu0 %v3917
      %v3919 = vpop.xlane.xlu0 %3918
      %v3920 = vcvt.f32.s32 %v3919
      %v3921 = vcvt.f32.s32 %v3915
      %v3922 = vshll.u32 %v3921, 16
      %v3923 = vadd.s32 %v3922, %v3920
      %vm3924 = vcmp.lt.s32.totalorder %v3404, %v3405
      %v3925 = vsel %vm3924, %v3404, %v3405
      %v3926 = vand.u32 %v3925, 65535
      %v3927 = vshra.s32 %v3925, 16
      %v3928 = vcvt.s32.f32 %v3926
      %v3929 = vcvt.s32.f32 %v3927
      %3930 = vmin.xlane.f32.xlu0 %v3929
      %v3931 = vpop.xlane.xlu0 %3930
      %vm3932 = vcmp.eq.f32.partialorder %v3929, %v3931
      %v3933 = vsel %vm3932, %v3928, inf
      %3934 = vmin.xlane.f32.xlu0 %v3933
      %v3935 = vpop.xlane.xlu0 %3934
      %v3936 = vcvt.f32.s32 %v3935
      %v3937 = vcvt.f32.s32 %v3931
      %v3938 = vshll.u32 %v3937, 16
      %v3939 = vadd.s32 %v3938, %v3936
      %vm3940 = vcmp.lt.s32.totalorder %v3406, %v3407
      %v3941 = vsel %vm3940, %v3406, %v3407
      %v3942 = vand.u32 %v3941, 65535
      %v3943 = vshra.s32 %v3941, 16
      %v3944 = vcvt.s32.f32 %v3942
      %v3945 = vcvt.s32.f32 %v3943
      %3946 = vmin.xlane.f32.xlu0 %v3945
      %v3947 = vpop.xlane.xlu0 %3946
      %vm3948 = vcmp.eq.f32.partialorder %v3945, %v3947
      %v3949 = vsel %vm3948, %v3944, inf
      %3950 = vmin.xlane.f32.xlu0 %v3949
      %v3951 = vpop.xlane.xlu0 %3950
      %v3952 = vcvt.f32.s32 %v3951
      %v3953 = vcvt.f32.s32 %v3947
      %v3954 = vshll.u32 %v3953, 16
      %v3955 = vadd.s32 %v3954, %v3952
      %vm3956 = vcmp.lt.s32.totalorder %v3408, %v3409
      %v3957 = vsel %vm3956, %v3408, %v3409
      %v3958 = vand.u32 %v3957, 65535
      %v3959 = vshra.s32 %v3957, 16
      %v3960 = vcvt.s32.f32 %v3958
      %v3961 = vcvt.s32.f32 %v3959
      %3962 = vmin.xlane.f32.xlu0 %v3961
      %v3963 = vpop.xlane.xlu0 %3962
      %vm3964 = vcmp.eq.f32.partialorder %v3961, %v3963
      %v3965 = vsel %vm3964, %v3960, inf
      %3966 = vmin.xlane.f32.xlu0 %v3965
      %v3967 = vpop.xlane.xlu0 %3966
      %v3968 = vcvt.f32.s32 %v3967
      %v3969 = vcvt.f32.s32 %v3963
      %v3970 = vshll.u32 %v3969, 16
      %v3971 = vadd.s32 %v3970, %v3968
      %vm3972 = vcmp.lt.s32.totalorder %v3410, %v3411
      %v3973 = vsel %vm3972, %v3410, %v3411
      %v3974 = vand.u32 %v3973, 65535
      %v3975 = vshra.s32 %v3973, 16
      %v3976 = vcvt.s32.f32 %v3974
      %v3977 = vcvt.s32.f32 %v3975
      %3978 = vmin.xlane.f32.xlu0 %v3977
      %v3979 = vpop.xlane.xlu0 %3978
      %vm3980 = vcmp.eq.f32.partialorder %v3977, %v3979
      %v3981 = vsel %vm3980, %v3976, inf
      %3982 = vmin.xlane.f32.xlu0 %v3981
      %v3983 = vpop.xlane.xlu0 %3982
      %v3984 = vcvt.f32.s32 %v3983
      %v3985 = vcvt.f32.s32 %v3979
      %v3986 = vshll.u32 %v3985, 16
      %v3987 = vadd.s32 %v3986, %v3984
      %vm3988 = vcmp.lt.s32.totalorder %v3412, %v3413
      %v3989 = vsel %vm3988, %v3412, %v3413
      %v3990 = vand.u32 %v3989, 65535
      %v3991 = vshra.s32 %v3989, 16
      %v3992 = vcvt.s32.f32 %v3990
      %v3993 = vcvt.s32.f32 %v3991
      %3994 = vmin.xlane.f32.xlu0 %v3993
      %v3995 = vpop.xlane.xlu0 %3994
      %vm3996 = vcmp.eq.f32.partialorder %v3993, %v3995
      %v3997 = vsel %vm3996, %v3992, inf
      %3998 = vmin.xlane.f32.xlu0 %v3997
      %v3999 = vpop.xlane.xlu0 %3998
      %v4000 = vcvt.f32.s32 %v3999
      %v4001 = vcvt.f32.s32 %v3995
      %v4002 = vshll.u32 %v4001, 16
      %v4003 = vadd.s32 %v4002, %v4000
      %vm4004 = vcmp.lt.s32.totalorder %v3414, %v3415
      %v4005 = vsel %vm4004, %v3414, %v3415
      %v4006 = vand.u32 %v4005, 65535
      %v4007 = vshra.s32 %v4005, 16
      %v4008 = vcvt.s32.f32 %v4006
      %v4009 = vcvt.s32.f32 %v4007
      %4010 = vmin.xlane.f32.xlu0 %v4009
      %v4011 = vpop.xlane.xlu0 %4010
      %vm4012 = vcmp.eq.f32.partialorder %v4009, %v4011
      %v4013 = vsel %vm4012, %v4008, inf
      %4014 = vmin.xlane.f32.xlu0 %v4013
      %v4015 = vpop.xlane.xlu0 %4014
      %v4016 = vcvt.f32.s32 %v4015
      %v4017 = vcvt.f32.s32 %v4011
      %v4018 = vshll.u32 %v4017, 16
      %v4019 = vadd.s32 %v4018, %v4016
      %vm4020 = vcmp.lt.s32.totalorder %v3416, %v3417
      %v4021 = vsel %vm4020, %v3416, %v3417
      %v4022 = vand.u32 %v4021, 65535
      %v4023 = vshra.s32 %v4021, 16
      %v4024 = vcvt.s32.f32 %v4022
      %v4025 = vcvt.s32.f32 %v4023
      %4026 = vmin.xlane.f32.xlu0 %v4025
      %v4027 = vpop.xlane.xlu0 %4026
      %vm4028 = vcmp.eq.f32.partialorder %v4025, %v4027
      %v4029 = vsel %vm4028, %v4024, inf
      %4030 = vmin.xlane.f32.xlu0 %v4029
      %v4031 = vpop.xlane.xlu0 %4030
      %v4032 = vcvt.f32.s32 %v4031
      %v4033 = vcvt.f32.s32 %v4027
      %v4034 = vshll.u32 %v4033, 16
      %v4035 = vadd.s32 %v4034, %v4032
      %vm4036 = vcmp.lt.s32.totalorder %v3418, %v3419
      %v4037 = vsel %vm4036, %v3418, %v3419
      %v4038 = vand.u32 %v4037, 65535
      %v4039 = vshra.s32 %v4037, 16
      %v4040 = vcvt.s32.f32 %v4038
      %v4041 = vcvt.s32.f32 %v4039
      %4042 = vmin.xlane.f32.xlu0 %v4041
      %v4043 = vpop.xlane.xlu0 %4042
      %vm4044 = vcmp.eq.f32.partialorder %v4041, %v4043
      %v4045 = vsel %vm4044, %v4040, inf
      %4046 = vmin.xlane.f32.xlu0 %v4045
      %v4047 = vpop.xlane.xlu0 %4046
      %v4048 = vcvt.f32.s32 %v4047
      %v4049 = vcvt.f32.s32 %v4043
      %v4050 = vshll.u32 %v4049, 16
      %v4051 = vadd.s32 %v4050, %v4048
      %vm4052 = vcmp.lt.s32.totalorder %v3420, %v3421
      %v4053 = vsel %vm4052, %v3420, %v3421
      %v4054 = vand.u32 %v4053, 65535
      %v4055 = vshra.s32 %v4053, 16
      %v4056 = vcvt.s32.f32 %v4054
      %v4057 = vcvt.s32.f32 %v4055
      %4058 = vmin.xlane.f32.xlu0 %v4057
      %v4059 = vpop.xlane.xlu0 %4058
      %vm4060 = vcmp.eq.f32.partialorder %v4057, %v4059
      %v4061 = vsel %vm4060, %v4056, inf
      %4062 = vmin.xlane.f32.xlu0 %v4061
      %v4063 = vpop.xlane.xlu0 %4062
      %v4064 = vcvt.f32.s32 %v4063
      %v4065 = vcvt.f32.s32 %v4059
      %v4066 = vshll.u32 %v4065, 16
      %v4067 = vadd.s32 %v4066, %v4064
      %vm4068 = vcmp.lt.s32.totalorder %v3422, %v3423
      %v4069 = vsel %vm4068, %v3422, %v3423
      %v4070 = vand.u32 %v4069, 65535
      %v4071 = vshra.s32 %v4069, 16
      %v4072 = vcvt.s32.f32 %v4070
      %v4073 = vcvt.s32.f32 %v4071
      %4074 = vmin.xlane.f32.xlu0 %v4073
      %v4075 = vpop.xlane.xlu0 %4074
      %vm4076 = vcmp.eq.f32.partialorder %v4073, %v4075
      %v4077 = vsel %vm4076, %v4072, inf
      %4078 = vmin.xlane.f32.xlu0 %v4077
      %v4079 = vpop.xlane.xlu0 %4078
      %v4080 = vcvt.f32.s32 %v4079
      %v4081 = vcvt.f32.s32 %v4075
      %v4082 = vshll.u32 %v4081, 16
      %v4083 = vadd.s32 %v4082, %v4080
      %vm4084 = vcmp.lt.s32.totalorder %v3424, %v3425
      %v4085 = vsel %vm4084, %v3424, %v3425
      %v4086 = vand.u32 %v4085, 65535
      %v4087 = vshra.s32 %v4085, 16
      %v4088 = vcvt.s32.f32 %v4086
      %v4089 = vcvt.s32.f32 %v4087
      %4090 = vmin.xlane.f32.xlu0 %v4089
      %v4091 = vpop.xlane.xlu0 %4090
      %vm4092 = vcmp.eq.f32.partialorder %v4089, %v4091
      %v4093 = vsel %vm4092, %v4088, inf
      %4094 = vmin.xlane.f32.xlu0 %v4093
      %v4095 = vpop.xlane.xlu0 %4094
      %v4096 = vcvt.f32.s32 %v4095
      %v4097 = vcvt.f32.s32 %v4091
      %v4098 = vshll.u32 %v4097, 16
      %v4099 = vadd.s32 %v4098, %v4096
      %vm4100 = vcmp.lt.s32.totalorder %v3426, %v3427
      %v4101 = vsel %vm4100, %v3426, %v3427
      %v4102 = vand.u32 %v4101, 65535
      %v4103 = vshra.s32 %v4101, 16
      %v4104 = vcvt.s32.f32 %v4102
      %v4105 = vcvt.s32.f32 %v4103
      %4106 = vmin.xlane.f32.xlu0 %v4105
      %v4107 = vpop.xlane.xlu0 %4106
      %vm4108 = vcmp.eq.f32.partialorder %v4105, %v4107
      %v4109 = vsel %vm4108, %v4104, inf
      %4110 = vmin.xlane.f32.xlu0 %v4109
      %v4111 = vpop.xlane.xlu0 %4110
      %v4112 = vcvt.f32.s32 %v4111
      %v4113 = vcvt.f32.s32 %v4107
      %v4114 = vshll.u32 %v4113, 16
      %v4115 = vadd.s32 %v4114, %v4112
      %vm4116 = vcmp.lt.s32.totalorder %v3428, %v3429
      %v4117 = vsel %vm4116, %v3428, %v3429
      %v4118 = vand.u32 %v4117, 65535
      %v4119 = vshra.s32 %v4117, 16
      %v4120 = vcvt.s32.f32 %v4118
      %v4121 = vcvt.s32.f32 %v4119
      %4122 = vmin.xlane.f32.xlu0 %v4121
      %v4123 = vpop.xlane.xlu0 %4122
      %vm4124 = vcmp.eq.f32.partialorder %v4121, %v4123
      %v4125 = vsel %vm4124, %v4120, inf
      %4126 = vmin.xlane.f32.xlu0 %v4125
      %v4127 = vpop.xlane.xlu0 %4126
      %v4128 = vcvt.f32.s32 %v4127
      %v4129 = vcvt.f32.s32 %v4123
      %v4130 = vshll.u32 %v4129, 16
      %v4131 = vadd.s32 %v4130, %v4128
      %vm4132 = vcmp.lt.s32.totalorder %v3430, %v3431
      %v4133 = vsel %vm4132, %v3430, %v3431
      %v4134 = vand.u32 %v4133, 65535
      %v4135 = vshra.s32 %v4133, 16
      %v4136 = vcvt.s32.f32 %v4134
      %v4137 = vcvt.s32.f32 %v4135
      %4138 = vmin.xlane.f32.xlu0 %v4137
      %v4139 = vpop.xlane.xlu0 %4138
      %vm4140 = vcmp.eq.f32.partialorder %v4137, %v4139
      %v4141 = vsel %vm4140, %v4136, inf
      %4142 = vmin.xlane.f32.xlu0 %v4141
      %v4143 = vpop.xlane.xlu0 %4142
      %v4144 = vcvt.f32.s32 %v4143
      %v4145 = vcvt.f32.s32 %v4139
      %v4146 = vshll.u32 %v4145, 16
      %v4147 = vadd.s32 %v4146, %v4144
      %vm4148 = vcmp.lt.s32.totalorder %v3432, %v3433
      %v4149 = vsel %vm4148, %v3432, %v3433
      %v4150 = vand.u32 %v4149, 65535
      %v4151 = vshra.s32 %v4149, 16
      %v4152 = vcvt.s32.f32 %v4150
      %v4153 = vcvt.s32.f32 %v4151
      %4154 = vmin.xlane.f32.xlu0 %v4153
      %v4155 = vpop.xlane.xlu0 %4154
      %vm4156 = vcmp.eq.f32.partialorder %v4153, %v4155
      %v4157 = vsel %vm4156, %v4152, inf
      %4158 = vmin.xlane.f32.xlu0 %v4157
      %v4159 = vpop.xlane.xlu0 %4158
      %v4160 = vcvt.f32.s32 %v4159
      %v4161 = vcvt.f32.s32 %v4155
      %v4162 = vshll.u32 %v4161, 16
      %v4163 = vadd.s32 %v4162, %v4160
      %vm4164 = vcmp.lt.s32.totalorder %v3434, %v3435
      %v4165 = vsel %vm4164, %v3434, %v3435
      %v4166 = vand.u32 %v4165, 65535
      %v4167 = vshra.s32 %v4165, 16
      %v4168 = vcvt.s32.f32 %v4166
      %v4169 = vcvt.s32.f32 %v4167
      %4170 = vmin.xlane.f32.xlu0 %v4169
      %v4171 = vpop.xlane.xlu0 %4170
      %vm4172 = vcmp.eq.f32.partialorder %v4169, %v4171
      %v4173 = vsel %vm4172, %v4168, inf
      %4174 = vmin.xlane.f32.xlu0 %v4173
      %v4175 = vpop.xlane.xlu0 %4174
      %v4176 = vcvt.f32.s32 %v4175
      %v4177 = vcvt.f32.s32 %v4171
      %v4178 = vshll.u32 %v4177, 16
      %v4179 = vadd.s32 %v4178, %v4176
      %vm4180 = vcmp.lt.s32.totalorder %v3436, %v3437
      %v4181 = vsel %vm4180, %v3436, %v3437
      %v4182 = vand.u32 %v4181, 65535
      %v4183 = vshra.s32 %v4181, 16
      %v4184 = vcvt.s32.f32 %v4182
      %v4185 = vcvt.s32.f32 %v4183
      %4186 = vmin.xlane.f32.xlu0 %v4185
      %v4187 = vpop.xlane.xlu0 %4186
      %vm4188 = vcmp.eq.f32.partialorder %v4185, %v4187
      %v4189 = vsel %vm4188, %v4184, inf
      %4190 = vmin.xlane.f32.xlu0 %v4189
      %v4191 = vpop.xlane.xlu0 %4190
      %v4192 = vcvt.f32.s32 %v4191
      %v4193 = vcvt.f32.s32 %v4187
      %v4194 = vshll.u32 %v4193, 16
      %v4195 = vadd.s32 %v4194, %v4192
      %vm4196 = vcmp.lt.s32.totalorder %v3438, %v3439
      %v4197 = vsel %vm4196, %v3438, %v3439
      %v4198 = vand.u32 %v4197, 65535
      %v4199 = vshra.s32 %v4197, 16
      %v4200 = vcvt.s32.f32 %v4198
      %v4201 = vcvt.s32.f32 %v4199
      %4202 = vmin.xlane.f32.xlu0 %v4201
      %v4203 = vpop.xlane.xlu0 %4202
      %vm4204 = vcmp.eq.f32.partialorder %v4201, %v4203
      %v4205 = vsel %vm4204, %v4200, inf
      %4206 = vmin.xlane.f32.xlu0 %v4205
      %v4207 = vpop.xlane.xlu0 %4206
      %v4208 = vcvt.f32.s32 %v4207
      %v4209 = vcvt.f32.s32 %v4203
      %v4210 = vshll.u32 %v4209, 16
      %v4211 = vadd.s32 %v4210, %v4208
      %vm4212 = vcmp.lt.s32.totalorder %v3440, %v3441
      %v4213 = vsel %vm4212, %v3440, %v3441
      %v4214 = vand.u32 %v4213, 65535
      %v4215 = vshra.s32 %v4213, 16
      %v4216 = vcvt.s32.f32 %v4214
      %v4217 = vcvt.s32.f32 %v4215
      %4218 = vmin.xlane.f32.xlu0 %v4217
      %v4219 = vpop.xlane.xlu0 %4218
      %vm4220 = vcmp.eq.f32.partialorder %v4217, %v4219
      %v4221 = vsel %vm4220, %v4216, inf
      %4222 = vmin.xlane.f32.xlu0 %v4221
      %v4223 = vpop.xlane.xlu0 %4222
      %v4224 = vcvt.f32.s32 %v4223
      %v4225 = vcvt.f32.s32 %v4219
      %v4226 = vshll.u32 %v4225, 16
      %v4227 = vadd.s32 %v4226, %v4224
      %vm4228 = vcmp.lt.s32.totalorder %v3442, %v3443
      %v4229 = vsel %vm4228, %v3442, %v3443
      %v4230 = vand.u32 %v4229, 65535
      %v4231 = vshra.s32 %v4229, 16
      %v4232 = vcvt.s32.f32 %v4230
      %v4233 = vcvt.s32.f32 %v4231
      %4234 = vmin.xlane.f32.xlu0 %v4233
      %v4235 = vpop.xlane.xlu0 %4234
      %vm4236 = vcmp.eq.f32.partialorder %v4233, %v4235
      %v4237 = vsel %vm4236, %v4232, inf
      %4238 = vmin.xlane.f32.xlu0 %v4237
      %v4239 = vpop.xlane.xlu0 %4238
      %v4240 = vcvt.f32.s32 %v4239
      %v4241 = vcvt.f32.s32 %v4235
      %v4242 = vshll.u32 %v4241, 16
      %v4243 = vadd.s32 %v4242, %v4240
      %vm4244 = vcmp.lt.s32.totalorder %v3444, %v3445
      %v4245 = vsel %vm4244, %v3444, %v3445
      %v4246 = vand.u32 %v4245, 65535
      %v4247 = vshra.s32 %v4245, 16
      %v4248 = vcvt.s32.f32 %v4246
      %v4249 = vcvt.s32.f32 %v4247
      %4250 = vmin.xlane.f32.xlu0 %v4249
      %v4251 = vpop.xlane.xlu0 %4250
      %vm4252 = vcmp.eq.f32.partialorder %v4249, %v4251
      %v4253 = vsel %vm4252, %v4248, inf
      %4254 = vmin.xlane.f32.xlu0 %v4253
      %v4255 = vpop.xlane.xlu0 %4254
      %v4256 = vcvt.f32.s32 %v4255
      %v4257 = vcvt.f32.s32 %v4251
      %v4258 = vshll.u32 %v4257, 16
      %v4259 = vadd.s32 %v4258, %v4256
      %vm4260 = vcmp.lt.s32.totalorder %v3446, %v3447
      %v4261 = vsel %vm4260, %v3446, %v3447
      %v4262 = vand.u32 %v4261, 65535
      %v4263 = vshra.s32 %v4261, 16
      %v4264 = vcvt.s32.f32 %v4262
      %v4265 = vcvt.s32.f32 %v4263
      %4266 = vmin.xlane.f32.xlu0 %v4265
      %v4267 = vpop.xlane.xlu0 %4266
      %vm4268 = vcmp.eq.f32.partialorder %v4265, %v4267
      %v4269 = vsel %vm4268, %v4264, inf
      %4270 = vmin.xlane.f32.xlu0 %v4269
      %v4271 = vpop.xlane.xlu0 %4270
      %v4272 = vcvt.f32.s32 %v4271
      %v4273 = vcvt.f32.s32 %v4267
      %v4274 = vshll.u32 %v4273, 16
      %v4275 = vadd.s32 %v4274, %v4272
      %vm4276 = vcmp.lt.s32.totalorder %v3448, %v3449
      %v4277 = vsel %vm4276, %v3448, %v3449
      %v4278 = vand.u32 %v4277, 65535
      %v4279 = vshra.s32 %v4277, 16
      %v4280 = vcvt.s32.f32 %v4278
      %v4281 = vcvt.s32.f32 %v4279
      %4282 = vmin.xlane.f32.xlu0 %v4281
      %v4283 = vpop.xlane.xlu0 %4282
      %vm4284 = vcmp.eq.f32.partialorder %v4281, %v4283
      %v4285 = vsel %vm4284, %v4280, inf
      %4286 = vmin.xlane.f32.xlu0 %v4285
      %v4287 = vpop.xlane.xlu0 %4286
      %v4288 = vcvt.f32.s32 %v4287
      %v4289 = vcvt.f32.s32 %v4283
      %v4290 = vshll.u32 %v4289, 16
      %v4291 = vadd.s32 %v4290, %v4288
      %vm4292 = vcmp.lt.s32.totalorder %v3450, %v3451
      %v4293 = vsel %vm4292, %v3450, %v3451
      %v4294 = vand.u32 %v4293, 65535
      %v4295 = vshra.s32 %v4293, 16
      %v4296 = vcvt.s32.f32 %v4294
      %v4297 = vcvt.s32.f32 %v4295
      %4298 = vmin.xlane.f32.xlu0 %v4297
      %v4299 = vpop.xlane.xlu0 %4298
      %vm4300 = vcmp.eq.f32.partialorder %v4297, %v4299
      %v4301 = vsel %vm4300, %v4296, inf
      %4302 = vmin.xlane.f32.xlu0 %v4301
      %v4303 = vpop.xlane.xlu0 %4302
      %v4304 = vcvt.f32.s32 %v4303
      %v4305 = vcvt.f32.s32 %v4299
      %v4306 = vshll.u32 %v4305, 16
      %v4307 = vadd.s32 %v4306, %v4304
      %vm4308 = vcmp.lt.s32.totalorder %v3452, %v3453
      %v4309 = vsel %vm4308, %v3452, %v3453
      %v4310 = vand.u32 %v4309, 65535
      %v4311 = vshra.s32 %v4309, 16
      %v4312 = vcvt.s32.f32 %v4310
      %v4313 = vcvt.s32.f32 %v4311
      %4314 = vmin.xlane.f32.xlu0 %v4313
      %v4315 = vpop.xlane.xlu0 %4314
      %vm4316 = vcmp.eq.f32.partialorder %v4313, %v4315
      %v4317 = vsel %vm4316, %v4312, inf
      %4318 = vmin.xlane.f32.xlu0 %v4317
      %v4319 = vpop.xlane.xlu0 %4318
      %v4320 = vcvt.f32.s32 %v4319
      %v4321 = vcvt.f32.s32 %v4315
      %v4322 = vshll.u32 %v4321, 16
      %v4323 = vadd.s32 %v4322, %v4320
      %vm4324 = vcmp.lt.s32.totalorder %v3454, %v3455
      %v4325 = vsel %vm4324, %v3454, %v3455
      %v4326 = vand.u32 %v4325, 65535
      %v4327 = vshra.s32 %v4325, 16
      %v4328 = vcvt.s32.f32 %v4326
      %v4329 = vcvt.s32.f32 %v4327
      %4330 = vmin.xlane.f32.xlu0 %v4329
      %v4331 = vpop.xlane.xlu0 %4330
      %vm4332 = vcmp.eq.f32.partialorder %v4329, %v4331
      %v4333 = vsel %vm4332, %v4328, inf
      %4334 = vmin.xlane.f32.xlu0 %v4333
      %v4335 = vpop.xlane.xlu0 %4334
      %v4336 = vcvt.f32.s32 %v4335
      %v4337 = vcvt.f32.s32 %v4331
      %v4338 = vshll.u32 %v4337, 16
      %v4339 = vadd.s32 %v4338, %v4336
      %vm4340 = vcmp.lt.s32.totalorder %v3456, %v3457
      %v4341 = vsel %vm4340, %v3456, %v3457
      %v4342 = vand.u32 %v4341, 65535
      %v4343 = vshra.s32 %v4341, 16
      %v4344 = vcvt.s32.f32 %v4342
      %v4345 = vcvt.s32.f32 %v4343
      %4346 = vmin.xlane.f32.xlu0 %v4345
      %v4347 = vpop.xlane.xlu0 %4346
      %vm4348 = vcmp.eq.f32.partialorder %v4345, %v4347
      %v4349 = vsel %vm4348, %v4344, inf
      %4350 = vmin.xlane.f32.xlu0 %v4349
      %v4351 = vpop.xlane.xlu0 %4350
      %v4352 = vcvt.f32.s32 %v4351
      %v4353 = vcvt.f32.s32 %v4347
      %v4354 = vshll.u32 %v4353, 16
      %v4355 = vadd.s32 %v4354, %v4352
      %vm4356 = vcmp.lt.s32.totalorder %v3458, %v3459
      %v4357 = vsel %vm4356, %v3458, %v3459
      %v4358 = vand.u32 %v4357, 65535
      %v4359 = vshra.s32 %v4357, 16
      %v4360 = vcvt.s32.f32 %v4358
      %v4361 = vcvt.s32.f32 %v4359
      %4362 = vmin.xlane.f32.xlu0 %v4361
      %v4363 = vpop.xlane.xlu0 %4362
      %vm4364 = vcmp.eq.f32.partialorder %v4361, %v4363
      %v4365 = vsel %vm4364, %v4360, inf
      %4366 = vmin.xlane.f32.xlu0 %v4365
      %v4367 = vpop.xlane.xlu0 %4366
      %v4368 = vcvt.f32.s32 %v4367
      %v4369 = vcvt.f32.s32 %v4363
      %v4370 = vshll.u32 %v4369, 16
      %v4371 = vadd.s32 %v4370, %v4368
      %vm4372 = vcmp.lt.s32.totalorder %v3460, %v3461
      %v4373 = vsel %vm4372, %v3460, %v3461
      %v4374 = vand.u32 %v4373, 65535
      %v4375 = vshra.s32 %v4373, 16
      %v4376 = vcvt.s32.f32 %v4374
      %v4377 = vcvt.s32.f32 %v4375
      %4378 = vmin.xlane.f32.xlu0 %v4377
      %v4379 = vpop.xlane.xlu0 %4378
      %vm4380 = vcmp.eq.f32.partialorder %v4377, %v4379
      %v4381 = vsel %vm4380, %v4376, inf
      %4382 = vmin.xlane.f32.xlu0 %v4381
      %v4383 = vpop.xlane.xlu0 %4382
      %v4384 = vcvt.f32.s32 %v4383
      %v4385 = vcvt.f32.s32 %v4379
      %v4386 = vshll.u32 %v4385, 16
      %v4387 = vadd.s32 %v4386, %v4384
      %vm4388 = vcmp.lt.s32.totalorder %v3462, %v3463
      %v4389 = vsel %vm4388, %v3462, %v3463
      %v4390 = vand.u32 %v4389, 65535
      %v4391 = vshra.s32 %v4389, 16
      %v4392 = vcvt.s32.f32 %v4390
      %v4393 = vcvt.s32.f32 %v4391
      %4394 = vmin.xlane.f32.xlu0 %v4393
      %v4395 = vpop.xlane.xlu0 %4394
      %vm4396 = vcmp.eq.f32.partialorder %v4393, %v4395
      %v4397 = vsel %vm4396, %v4392, inf
      %4398 = vmin.xlane.f32.xlu0 %v4397
      %v4399 = vpop.xlane.xlu0 %4398
      %v4400 = vcvt.f32.s32 %v4399
      %v4401 = vcvt.f32.s32 %v4395
      %v4402 = vshll.u32 %v4401, 16
      %v4403 = vadd.s32 %v4402, %v4400
      %vm4404 = vcmp.lt.s32.totalorder %v3464, %v3465
      %v4405 = vsel %vm4404, %v3464, %v3465
      %v4406 = vand.u32 %v4405, 65535
      %v4407 = vshra.s32 %v4405, 16
      %v4408 = vcvt.s32.f32 %v4406
      %v4409 = vcvt.s32.f32 %v4407
      %4410 = vmin.xlane.f32.xlu0 %v4409
      %v4411 = vpop.xlane.xlu0 %4410
      %vm4412 = vcmp.eq.f32.partialorder %v4409, %v4411
      %v4413 = vsel %vm4412, %v4408, inf
      %4414 = vmin.xlane.f32.xlu0 %v4413
      %v4415 = vpop.xlane.xlu0 %4414
      %v4416 = vcvt.f32.s32 %v4415
      %v4417 = vcvt.f32.s32 %v4411
      %v4418 = vshll.u32 %v4417, 16
      %v4419 = vadd.s32 %v4418, %v4416
      %vm4420 = vcmp.lt.s32.totalorder %v3466, %v3467
      %v4421 = vsel %vm4420, %v3466, %v3467
      %v4422 = vand.u32 %v4421, 65535
      %v4423 = vshra.s32 %v4421, 16
      %v4424 = vcvt.s32.f32 %v4422
      %v4425 = vcvt.s32.f32 %v4423
      %4426 = vmin.xlane.f32.xlu0 %v4425
      %v4427 = vpop.xlane.xlu0 %4426
      %vm4428 = vcmp.eq.f32.partialorder %v4425, %v4427
      %v4429 = vsel %vm4428, %v4424, inf
      %4430 = vmin.xlane.f32.xlu0 %v4429
      %v4431 = vpop.xlane.xlu0 %4430
      %v4432 = vcvt.f32.s32 %v4431
      %v4433 = vcvt.f32.s32 %v4427
      %v4434 = vshll.u32 %v4433, 16
      %v4435 = vadd.s32 %v4434, %v4432
      %vm4436 = vcmp.lt.s32.totalorder %v3468, %v3469
      %v4437 = vsel %vm4436, %v3468, %v3469
      %v4438 = vand.u32 %v4437, 65535
      %v4439 = vshra.s32 %v4437, 16
      %v4440 = vcvt.s32.f32 %v4438
      %v4441 = vcvt.s32.f32 %v4439
      %4442 = vmin.xlane.f32.xlu0 %v4441
      %v4443 = vpop.xlane.xlu0 %4442
      %vm4444 = vcmp.eq.f32.partialorder %v4441, %v4443
      %v4445 = vsel %vm4444, %v4440, inf
      %4446 = vmin.xlane.f32.xlu0 %v4445
      %v4447 = vpop.xlane.xlu0 %4446
      %v4448 = vcvt.f32.s32 %v4447
      %v4449 = vcvt.f32.s32 %v4443
      %v4450 = vshll.u32 %v4449, 16
      %v4451 = vadd.s32 %v4450, %v4448
      %vm4452 = vcmp.lt.s32.totalorder %v3470, %v3471
      %v4453 = vsel %vm4452, %v3470, %v3471
      %v4454 = vand.u32 %v4453, 65535
      %v4455 = vshra.s32 %v4453, 16
      %v4456 = vcvt.s32.f32 %v4454
      %v4457 = vcvt.s32.f32 %v4455
      %4458 = vmin.xlane.f32.xlu0 %v4457
      %v4459 = vpop.xlane.xlu0 %4458
      %vm4460 = vcmp.eq.f32.partialorder %v4457, %v4459
      %v4461 = vsel %vm4460, %v4456, inf
      %4462 = vmin.xlane.f32.xlu0 %v4461
      %v4463 = vpop.xlane.xlu0 %4462
      %v4464 = vcvt.f32.s32 %v4463
      %v4465 = vcvt.f32.s32 %v4459
      %v4466 = vshll.u32 %v4465, 16
      %v4467 = vadd.s32 %v4466, %v4464
      %vm4468 = vcmp.lt.s32.totalorder %v3472, %v3473
      %v4469 = vsel %vm4468, %v3472, %v3473
      %v4470 = vand.u32 %v4469, 65535
      %v4471 = vshra.s32 %v4469, 16
      %v4472 = vcvt.s32.f32 %v4470
      %v4473 = vcvt.s32.f32 %v4471
      %4474 = vmin.xlane.f32.xlu0 %v4473
      %v4475 = vpop.xlane.xlu0 %4474
      %vm4476 = vcmp.eq.f32.partialorder %v4473, %v4475
      %v4477 = vsel %vm4476, %v4472, inf
      %4478 = vmin.xlane.f32.xlu0 %v4477
      %v4479 = vpop.xlane.xlu0 %4478
      %v4480 = vcvt.f32.s32 %v4479
      %v4481 = vcvt.f32.s32 %v4475
      %v4482 = vshll.u32 %v4481, 16
      %v4483 = vadd.s32 %v4482, %v4480
      %vm4484 = vcmp.lt.s32.totalorder %v3474, %v3475
      %v4485 = vsel %vm4484, %v3474, %v3475
      %v4486 = vand.u32 %v4485, 65535
      %v4487 = vshra.s32 %v4485, 16
      %v4488 = vcvt.s32.f32 %v4486
      %v4489 = vcvt.s32.f32 %v4487
      %4490 = vmin.xlane.f32.xlu0 %v4489
      %v4491 = vpop.xlane.xlu0 %4490
      %vm4492 = vcmp.eq.f32.partialorder %v4489, %v4491
      %v4493 = vsel %vm4492, %v4488, inf
      %4494 = vmin.xlane.f32.xlu0 %v4493
      %v4495 = vpop.xlane.xlu0 %4494
      %v4496 = vcvt.f32.s32 %v4495
      %v4497 = vcvt.f32.s32 %v4491
      %v4498 = vshll.u32 %v4497, 16
      %v4499 = vadd.s32 %v4498, %v4496
      %vm4500 = vcmp.eq.s32.totalorder %v3218, %v3491
      %vm4501 = vcmp.eq.s32.totalorder %v3219, %v3491
      %vm4502 = vcmp.eq.s32.totalorder %v3218, %v3507
      %vm4503 = vcmp.eq.s32.totalorder %v3219, %v3507
      %vm4504 = vcmp.eq.s32.totalorder %v3218, %v3523
      %vm4505 = vcmp.eq.s32.totalorder %v3219, %v3523
      %vm4506 = vcmp.eq.s32.totalorder %v3218, %v3539
      %vm4507 = vcmp.eq.s32.totalorder %v3219, %v3539
      %vm4508 = vcmp.eq.s32.totalorder %v3218, %v3555
      %vm4509 = vcmp.eq.s32.totalorder %v3219, %v3555
      %vm4510 = vcmp.eq.s32.totalorder %v3218, %v3571
      %vm4511 = vcmp.eq.s32.totalorder %v3219, %v3571
      %vm4512 = vcmp.eq.s32.totalorder %v3218, %v3587
      %vm4513 = vcmp.eq.s32.totalorder %v3219, %v3587
      %vm4514 = vcmp.eq.s32.totalorder %v3218, %v3603
      %vm4515 = vcmp.eq.s32.totalorder %v3219, %v3603
      %vm4516 = vcmp.eq.s32.totalorder %v3218, %v3619
      %vm4517 = vcmp.eq.s32.totalorder %v3219, %v3619
      %vm4518 = vcmp.eq.s32.totalorder %v3218, %v3635
      %vm4519 = vcmp.eq.s32.totalorder %v3219, %v3635
      %vm4520 = vcmp.eq.s32.totalorder %v3218, %v3651
      %vm4521 = vcmp.eq.s32.totalorder %v3219, %v3651
      %vm4522 = vcmp.eq.s32.totalorder %v3218, %v3667
      %vm4523 = vcmp.eq.s32.totalorder %v3219, %v3667
      %vm4524 = vcmp.eq.s32.totalorder %v3218, %v3683
      %vm4525 = vcmp.eq.s32.totalorder %v3219, %v3683
      %vm4526 = vcmp.eq.s32.totalorder %v3218, %v3699
      %vm4527 = vcmp.eq.s32.totalorder %v3219, %v3699
      %vm4528 = vcmp.eq.s32.totalorder %v3218, %v3715
      %vm4529 = vcmp.eq.s32.totalorder %v3219, %v3715
      %vm4530 = vcmp.eq.s32.totalorder %v3218, %v3731
      %vm4531 = vcmp.eq.s32.totalorder %v3219, %v3731
      %vm4532 = vcmp.eq.s32.totalorder %v3218, %v3747
      %vm4533 = vcmp.eq.s32.totalorder %v3219, %v3747
      %vm4534 = vcmp.eq.s32.totalorder %v3218, %v3763
      %vm4535 = vcmp.eq.s32.totalorder %v3219, %v3763
      %vm4536 = vcmp.eq.s32.totalorder %v3218, %v3779
      %vm4537 = vcmp.eq.s32.totalorder %v3219, %v3779
      %vm4538 = vcmp.eq.s32.totalorder %v3218, %v3795
      %vm4539 = vcmp.eq.s32.totalorder %v3219, %v3795
      %vm4540 = vcmp.eq.s32.totalorder %v3218, %v3811
      %vm4541 = vcmp.eq.s32.totalorder %v3219, %v3811
      %vm4542 = vcmp.eq.s32.totalorder %v3218, %v3827
      %vm4543 = vcmp.eq.s32.totalorder %v3219, %v3827
      %vm4544 = vcmp.eq.s32.totalorder %v3218, %v3843
      %vm4545 = vcmp.eq.s32.totalorder %v3219, %v3843
      %vm4546 = vcmp.eq.s32.totalorder %v3218, %v3859
      %vm4547 = vcmp.eq.s32.totalorder %v3219, %v3859
      %vm4548 = vcmp.eq.s32.totalorder %v3218, %v3875
      %vm4549 = vcmp.eq.s32.totalorder %v3219, %v3875
      %vm4550 = vcmp.eq.s32.totalorder %v3218, %v3891
      %vm4551 = vcmp.eq.s32.totalorder %v3219, %v3891
      %vm4552 = vcmp.eq.s32.totalorder %v3218, %v3907
      %vm4553 = vcmp.eq.s32.totalorder %v3219, %v3907
      %vm4554 = vcmp.eq.s32.totalorder %v3218, %v3923
      %vm4555 = vcmp.eq.s32.totalorder %v3219, %v3923
      %vm4556 = vcmp.eq.s32.totalorder %v3218, %v3939
      %vm4557 = vcmp.eq.s32.totalorder %v3219, %v3939
      %vm4558 = vcmp.eq.s32.totalorder %v3218, %v3955
      %vm4559 = vcmp.eq.s32.totalorder %v3219, %v3955
      %vm4560 = vcmp.eq.s32.totalorder %v3218, %v3971
      %vm4561 = vcmp.eq.s32.totalorder %v3219, %v3971
      %vm4562 = vcmp.eq.s32.totalorder %v3218, %v3987
      %vm4563 = vcmp.eq.s32.totalorder %v3219, %v3987
      %vm4564 = vcmp.eq.s32.totalorder %v3218, %v4003
      %vm4565 = vcmp.eq.s32.totalorder %v3219, %v4003
      %vm4566 = vcmp.eq.s32.totalorder %v3218, %v4019
      %vm4567 = vcmp.eq.s32.totalorder %v3219, %v4019
      %vm4568 = vcmp.eq.s32.totalorder %v3218, %v4035
      %vm4569 = vcmp.eq.s32.totalorder %v3219, %v4035
      %vm4570 = vcmp.eq.s32.totalorder %v3218, %v4051
      %vm4571 = vcmp.eq.s32.totalorder %v3219, %v4051
      %vm4572 = vcmp.eq.s32.totalorder %v3218, %v4067
      %vm4573 = vcmp.eq.s32.totalorder %v3219, %v4067
      %vm4574 = vcmp.eq.s32.totalorder %v3218, %v4083
      %vm4575 = vcmp.eq.s32.totalorder %v3219, %v4083
      %vm4576 = vcmp.eq.s32.totalorder %v3218, %v4099
      %vm4577 = vcmp.eq.s32.totalorder %v3219, %v4099
      %vm4578 = vcmp.eq.s32.totalorder %v3218, %v4115
      %vm4579 = vcmp.eq.s32.totalorder %v3219, %v4115
      %vm4580 = vcmp.eq.s32.totalorder %v3218, %v4131
      %vm4581 = vcmp.eq.s32.totalorder %v3219, %v4131
      %vm4582 = vcmp.eq.s32.totalorder %v3218, %v4147
      %vm4583 = vcmp.eq.s32.totalorder %v3219, %v4147
      %vm4584 = vcmp.eq.s32.totalorder %v3218, %v4163
      %vm4585 = vcmp.eq.s32.totalorder %v3219, %v4163
      %vm4586 = vcmp.eq.s32.totalorder %v3218, %v4179
      %vm4587 = vcmp.eq.s32.totalorder %v3219, %v4179
      %vm4588 = vcmp.eq.s32.totalorder %v3218, %v4195
      %vm4589 = vcmp.eq.s32.totalorder %v3219, %v4195
      %vm4590 = vcmp.eq.s32.totalorder %v3218, %v4211
      %vm4591 = vcmp.eq.s32.totalorder %v3219, %v4211
      %vm4592 = vcmp.eq.s32.totalorder %v3218, %v4227
      %vm4593 = vcmp.eq.s32.totalorder %v3219, %v4227
      %vm4594 = vcmp.eq.s32.totalorder %v3218, %v4243
      %vm4595 = vcmp.eq.s32.totalorder %v3219, %v4243
      %vm4596 = vcmp.eq.s32.totalorder %v3218, %v4259
      %vm4597 = vcmp.eq.s32.totalorder %v3219, %v4259
      %vm4598 = vcmp.eq.s32.totalorder %v3218, %v4275
      %vm4599 = vcmp.eq.s32.totalorder %v3219, %v4275
      %vm4600 = vcmp.eq.s32.totalorder %v3218, %v4291
      %vm4601 = vcmp.eq.s32.totalorder %v3219, %v4291
      %vm4602 = vcmp.eq.s32.totalorder %v3218, %v4307
      %vm4603 = vcmp.eq.s32.totalorder %v3219, %v4307
      %vm4604 = vcmp.eq.s32.totalorder %v3218, %v4323
      %vm4605 = vcmp.eq.s32.totalorder %v3219, %v4323
      %vm4606 = vcmp.eq.s32.totalorder %v3218, %v4339
      %vm4607 = vcmp.eq.s32.totalorder %v3219, %v4339
      %vm4608 = vcmp.eq.s32.totalorder %v3218, %v4355
      %vm4609 = vcmp.eq.s32.totalorder %v3219, %v4355
      %vm4610 = vcmp.eq.s32.totalorder %v3218, %v4371
      %vm4611 = vcmp.eq.s32.totalorder %v3219, %v4371
      %vm4612 = vcmp.eq.s32.totalorder %v3218, %v4387
      %vm4613 = vcmp.eq.s32.totalorder %v3219, %v4387
      %vm4614 = vcmp.eq.s32.totalorder %v3218, %v4403
      %vm4615 = vcmp.eq.s32.totalorder %v3219, %v4403
      %vm4616 = vcmp.eq.s32.totalorder %v3218, %v4419
      %vm4617 = vcmp.eq.s32.totalorder %v3219, %v4419
      %vm4618 = vcmp.eq.s32.totalorder %v3218, %v4435
      %vm4619 = vcmp.eq.s32.totalorder %v3219, %v4435
      %vm4620 = vcmp.eq.s32.totalorder %v3218, %v4451
      %vm4621 = vcmp.eq.s32.totalorder %v3219, %v4451
      %vm4622 = vcmp.eq.s32.totalorder %v3218, %v4467
      %vm4623 = vcmp.eq.s32.totalorder %v3219, %v4467
      %vm4624 = vcmp.eq.s32.totalorder %v3218, %v4483
      %vm4625 = vcmp.eq.s32.totalorder %v3219, %v4483
      %vm4626 = vcmp.eq.s32.totalorder %v3218, %v4499
      %vm4627 = vcmp.eq.s32.totalorder %v3219, %v4499
      %v4628 = vsel %vm4500, 1, 0
      %v4629 = vsel %vm4501, 1, 0
      %v4630 = vsel %vm4502, 1, 0
      %v4631 = vsel %vm4503, 1, 0
      %v4632 = vsel %vm4504, 1, 0
      %v4633 = vsel %vm4505, 1, 0
      %v4634 = vsel %vm4506, 1, 0
      %v4635 = vsel %vm4507, 1, 0
      %v4636 = vsel %vm4508, 1, 0
      %v4637 = vsel %vm4509, 1, 0
      %v4638 = vsel %vm4510, 1, 0
      %v4639 = vsel %vm4511, 1, 0
      %v4640 = vsel %vm4512, 1, 0
      %v4641 = vsel %vm4513, 1, 0
      %v4642 = vsel %vm4514, 1, 0
      %v4643 = vsel %vm4515, 1, 0
      %v4644 = vsel %vm4516, 1, 0
      %v4645 = vsel %vm4517, 1, 0
      %v4646 = vsel %vm4518, 1, 0
      %v4647 = vsel %vm4519, 1, 0
      %v4648 = vsel %vm4520, 1, 0
      %v4649 = vsel %vm4521, 1, 0
      %v4650 = vsel %vm4522, 1, 0
      %v4651 = vsel %vm4523, 1, 0
      %v4652 = vsel %vm4524, 1, 0
      %v4653 = vsel %vm4525, 1, 0
      %v4654 = vsel %vm4526, 1, 0
      %v4655 = vsel %vm4527, 1, 0
      %v4656 = vsel %vm4528, 1, 0
      %v4657 = vsel %vm4529, 1, 0
      %v4658 = vsel %vm4530, 1, 0
      %v4659 = vsel %vm4531, 1, 0
      %v4660 = vsel %vm4532, 1, 0
      %v4661 = vsel %vm4533, 1, 0
      %v4662 = vsel %vm4534, 1, 0
      %v4663 = vsel %vm4535, 1, 0
      %v4664 = vsel %vm4536, 1, 0
      %v4665 = vsel %vm4537, 1, 0
      %v4666 = vsel %vm4538, 1, 0
      %v4667 = vsel %vm4539, 1, 0
      %v4668 = vsel %vm4540, 1, 0
      %v4669 = vsel %vm4541, 1, 0
      %v4670 = vsel %vm4542, 1, 0
      %v4671 = vsel %vm4543, 1, 0
      %v4672 = vsel %vm4544, 1, 0
      %v4673 = vsel %vm4545, 1, 0
      %v4674 = vsel %vm4546, 1, 0
      %v4675 = vsel %vm4547, 1, 0
      %v4676 = vsel %vm4548, 1, 0
      %v4677 = vsel %vm4549, 1, 0
      %v4678 = vsel %vm4550, 1, 0
      %v4679 = vsel %vm4551, 1, 0
      %v4680 = vsel %vm4552, 1, 0
      %v4681 = vsel %vm4553, 1, 0
      %v4682 = vsel %vm4554, 1, 0
      %v4683 = vsel %vm4555, 1, 0
      %v4684 = vsel %vm4556, 1, 0
      %v4685 = vsel %vm4557, 1, 0
      %v4686 = vsel %vm4558, 1, 0
      %v4687 = vsel %vm4559, 1, 0
      %v4688 = vsel %vm4560, 1, 0
      %v4689 = vsel %vm4561, 1, 0
      %v4690 = vsel %vm4562, 1, 0
      %v4691 = vsel %vm4563, 1, 0
      %v4692 = vsel %vm4564, 1, 0
      %v4693 = vsel %vm4565, 1, 0
      %v4694 = vsel %vm4566, 1, 0
      %v4695 = vsel %vm4567, 1, 0
      %v4696 = vsel %vm4568, 1, 0
      %v4697 = vsel %vm4569, 1, 0
      %v4698 = vsel %vm4570, 1, 0
      %v4699 = vsel %vm4571, 1, 0
      %v4700 = vsel %vm4572, 1, 0
      %v4701 = vsel %vm4573, 1, 0
      %v4702 = vsel %vm4574, 1, 0
      %v4703 = vsel %vm4575, 1, 0
      %v4704 = vsel %vm4576, 1, 0
      %v4705 = vsel %vm4577, 1, 0
      %v4706 = vsel %vm4578, 1, 0
      %v4707 = vsel %vm4579, 1, 0
      %v4708 = vsel %vm4580, 1, 0
      %v4709 = vsel %vm4581, 1, 0
      %v4710 = vsel %vm4582, 1, 0
      %v4711 = vsel %vm4583, 1, 0
      %v4712 = vsel %vm4584, 1, 0
      %v4713 = vsel %vm4585, 1, 0
      %v4714 = vsel %vm4586, 1, 0
      %v4715 = vsel %vm4587, 1, 0
      %v4716 = vsel %vm4588, 1, 0
      %v4717 = vsel %vm4589, 1, 0
      %v4718 = vsel %vm4590, 1, 0
      %v4719 = vsel %vm4591, 1, 0
      %v4720 = vsel %vm4592, 1, 0
      %v4721 = vsel %vm4593, 1, 0
      %v4722 = vsel %vm4594, 1, 0
      %v4723 = vsel %vm4595, 1, 0
      %v4724 = vsel %vm4596, 1, 0
      %v4725 = vsel %vm4597, 1, 0
      %v4726 = vsel %vm4598, 1, 0
      %v4727 = vsel %vm4599, 1, 0
      %v4728 = vsel %vm4600, 1, 0
      %v4729 = vsel %vm4601, 1, 0
      %v4730 = vsel %vm4602, 1, 0
      %v4731 = vsel %vm4603, 1, 0
      %v4732 = vsel %vm4604, 1, 0
      %v4733 = vsel %vm4605, 1, 0
      %v4734 = vsel %vm4606, 1, 0
      %v4735 = vsel %vm4607, 1, 0
      %v4736 = vsel %vm4608, 1, 0
      %v4737 = vsel %vm4609, 1, 0
      %v4738 = vsel %vm4610, 1, 0
      %v4739 = vsel %vm4611, 1, 0
      %v4740 = vsel %vm4612, 1, 0
      %v4741 = vsel %vm4613, 1, 0
      %v4742 = vsel %vm4614, 1, 0
      %v4743 = vsel %vm4615, 1, 0
      %v4744 = vsel %vm4616, 1, 0
      %v4745 = vsel %vm4617, 1, 0
      %v4746 = vsel %vm4618, 1, 0
      %v4747 = vsel %vm4619, 1, 0
      %v4748 = vsel %vm4620, 1, 0
      %v4749 = vsel %vm4621, 1, 0
      %v4750 = vsel %vm4622, 1, 0
      %v4751 = vsel %vm4623, 1, 0
      %v4752 = vsel %vm4624, 1, 0
      %v4753 = vsel %vm4625, 1, 0
      %v4754 = vsel %vm4626, 1, 0
      %v4755 = vsel %vm4627, 1, 0
      %v4756 = vcvt.s32.f32 %v4628
      %v4757 = vcvt.s32.f32 %v4629
      %v4758 = vcvt.s32.f32 %v4630
      %v4759 = vcvt.s32.f32 %v4631
      %v4760 = vcvt.s32.f32 %v4632
      %v4761 = vcvt.s32.f32 %v4633
      %v4762 = vcvt.s32.f32 %v4634
      %v4763 = vcvt.s32.f32 %v4635
      %v4764 = vcvt.s32.f32 %v4636
      %v4765 = vcvt.s32.f32 %v4637
      %v4766 = vcvt.s32.f32 %v4638
      %v4767 = vcvt.s32.f32 %v4639
      %v4768 = vcvt.s32.f32 %v4640
      %v4769 = vcvt.s32.f32 %v4641
      %v4770 = vcvt.s32.f32 %v4642
      %v4771 = vcvt.s32.f32 %v4643
      %v4772 = vcvt.s32.f32 %v4644
      %v4773 = vcvt.s32.f32 %v4645
      %v4774 = vcvt.s32.f32 %v4646
      %v4775 = vcvt.s32.f32 %v4647
      %v4776 = vcvt.s32.f32 %v4648
      %v4777 = vcvt.s32.f32 %v4649
      %v4778 = vcvt.s32.f32 %v4650
      %v4779 = vcvt.s32.f32 %v4651
      %v4780 = vcvt.s32.f32 %v4652
      %v4781 = vcvt.s32.f32 %v4653
      %v4782 = vcvt.s32.f32 %v4654
      %v4783 = vcvt.s32.f32 %v4655
      %v4784 = vcvt.s32.f32 %v4656
      %v4785 = vcvt.s32.f32 %v4657
      %v4786 = vcvt.s32.f32 %v4658
      %v4787 = vcvt.s32.f32 %v4659
      %v4788 = vcvt.s32.f32 %v4660
      %v4789 = vcvt.s32.f32 %v4661
      %v4790 = vcvt.s32.f32 %v4662
      %v4791 = vcvt.s32.f32 %v4663
      %v4792 = vcvt.s32.f32 %v4664
      %v4793 = vcvt.s32.f32 %v4665
      %v4794 = vcvt.s32.f32 %v4666
      %v4795 = vcvt.s32.f32 %v4667
      %v4796 = vcvt.s32.f32 %v4668
      %v4797 = vcvt.s32.f32 %v4669
      %v4798 = vcvt.s32.f32 %v4670
      %v4799 = vcvt.s32.f32 %v4671
      %v4800 = vcvt.s32.f32 %v4672
      %v4801 = vcvt.s32.f32 %v4673
      %v4802 = vcvt.s32.f32 %v4674
      %v4803 = vcvt.s32.f32 %v4675
      %v4804 = vcvt.s32.f32 %v4676
      %v4805 = vcvt.s32.f32 %v4677
      %v4806 = vcvt.s32.f32 %v4678
      %v4807 = vcvt.s32.f32 %v4679
      %v4808 = vcvt.s32.f32 %v4680
      %v4809 = vcvt.s32.f32 %v4681
      %v4810 = vcvt.s32.f32 %v4682
      %v4811 = vcvt.s32.f32 %v4683
      %v4812 = vcvt.s32.f32 %v4684
      %v4813 = vcvt.s32.f32 %v4685
      %v4814 = vcvt.s32.f32 %v4686
      %v4815 = vcvt.s32.f32 %v4687
      %v4816 = vcvt.s32.f32 %v4688
      %v4817 = vcvt.s32.f32 %v4689
      %v4818 = vcvt.s32.f32 %v4690
      %v4819 = vcvt.s32.f32 %v4691
      %v4820 = vcvt.s32.f32 %v4692
      %v4821 = vcvt.s32.f32 %v4693
      %v4822 = vcvt.s32.f32 %v4694
      %v4823 = vcvt.s32.f32 %v4695
      %v4824 = vcvt.s32.f32 %v4696
      %v4825 = vcvt.s32.f32 %v4697
      %v4826 = vcvt.s32.f32 %v4698
      %v4827 = vcvt.s32.f32 %v4699
      %v4828 = vcvt.s32.f32 %v4700
      %v4829 = vcvt.s32.f32 %v4701
      %v4830 = vcvt.s32.f32 %v4702
      %v4831 = vcvt.s32.f32 %v4703
      %v4832 = vcvt.s32.f32 %v4704
      %v4833 = vcvt.s32.f32 %v4705
      %v4834 = vcvt.s32.f32 %v4706
      %v4835 = vcvt.s32.f32 %v4707
      %v4836 = vcvt.s32.f32 %v4708
      %v4837 = vcvt.s32.f32 %v4709
      %v4838 = vcvt.s32.f32 %v4710
      %v4839 = vcvt.s32.f32 %v4711
      %v4840 = vcvt.s32.f32 %v4712
      %v4841 = vcvt.s32.f32 %v4713
      %v4842 = vcvt.s32.f32 %v4714
      %v4843 = vcvt.s32.f32 %v4715
      %v4844 = vcvt.s32.f32 %v4716
      %v4845 = vcvt.s32.f32 %v4717
      %v4846 = vcvt.s32.f32 %v4718
      %v4847 = vcvt.s32.f32 %v4719
      %v4848 = vcvt.s32.f32 %v4720
      %v4849 = vcvt.s32.f32 %v4721
      %v4850 = vcvt.s32.f32 %v4722
      %v4851 = vcvt.s32.f32 %v4723
      %v4852 = vcvt.s32.f32 %v4724
      %v4853 = vcvt.s32.f32 %v4725
      %v4854 = vcvt.s32.f32 %v4726
      %v4855 = vcvt.s32.f32 %v4727
      %v4856 = vcvt.s32.f32 %v4728
      %v4857 = vcvt.s32.f32 %v4729
      %v4858 = vcvt.s32.f32 %v4730
      %v4859 = vcvt.s32.f32 %v4731
      %v4860 = vcvt.s32.f32 %v4732
      %v4861 = vcvt.s32.f32 %v4733
      %v4862 = vcvt.s32.f32 %v4734
      %v4863 = vcvt.s32.f32 %v4735
      %v4864 = vcvt.s32.f32 %v4736
      %v4865 = vcvt.s32.f32 %v4737
      %v4866 = vcvt.s32.f32 %v4738
      %v4867 = vcvt.s32.f32 %v4739
      %v4868 = vcvt.s32.f32 %v4740
      %v4869 = vcvt.s32.f32 %v4741
      %v4870 = vcvt.s32.f32 %v4742
      %v4871 = vcvt.s32.f32 %v4743
      %v4872 = vcvt.s32.f32 %v4744
      %v4873 = vcvt.s32.f32 %v4745
      %v4874 = vcvt.s32.f32 %v4746
      %v4875 = vcvt.s32.f32 %v4747
      %v4876 = vcvt.s32.f32 %v4748
      %v4877 = vcvt.s32.f32 %v4749
      %v4878 = vcvt.s32.f32 %v4750
      %v4879 = vcvt.s32.f32 %v4751
      %v4880 = vcvt.s32.f32 %v4752
      %v4881 = vcvt.s32.f32 %v4753
      %v4882 = vcvt.s32.f32 %v4754
      %v4883 = vcvt.s32.f32 %v4755
      %v4884 = vld [vmem:[%s7] sm:$0xff]
      %v4885 = vld [vmem:[%s7 + $0x8] sm:$0xff]
      %v4886 = vld [vmem:[%s7 + $0x10] sm:$0xff]
      %v4887 = vld [vmem:[%s7 + $0x18] sm:$0xff]
      %v4888 = vld [vmem:[%s7 + $0x20] sm:$0xff]
      %v4889 = vld [vmem:[%s7 + $0x28] sm:$0xff]
      %v4890 = vld [vmem:[%s7 + $0x30] sm:$0xff]
      %v4891 = vld [vmem:[%s7 + $0x38] sm:$0xff]
      %v4892 = vld [vmem:[%s7 + $0x40] sm:$0xff]
      %v4893 = vld [vmem:[%s7 + $0x48] sm:$0xff]
      %v4894 = vld [vmem:[%s7 + $0x50] sm:$0xff]
      %v4895 = vld [vmem:[%s7 + $0x58] sm:$0xff]
      %v4896 = vld [vmem:[%s7 + $0x60] sm:$0xff]
      %v4897 = vld [vmem:[%s7 + $0x68] sm:$0xff]
      %v4898 = vld [vmem:[%s7 + $0x70] sm:$0xff]
      %v4899 = vld [vmem:[%s7 + $0x78] sm:$0xff]
      %v4900 = vld [vmem:[%s7 + $0x80] sm:$0xff]
      %v4901 = vld [vmem:[%s7 + $0x88] sm:$0xff]
      %v4902 = vld [vmem:[%s7 + $0x90] sm:$0xff]
      %v4903 = vld [vmem:[%s7 + $0x98] sm:$0xff]
      %v4904 = vld [vmem:[%s7 + $0xa0] sm:$0xff]
      %v4905 = vld [vmem:[%s7 + $0xa8] sm:$0xff]
      %v4906 = vld [vmem:[%s7 + $0xb0] sm:$0xff]
      %v4907 = vld [vmem:[%s7 + $0xb8] sm:$0xff]
      %v4908 = vld [vmem:[%s7 + $0xc0] sm:$0xff]
      %v4909 = vld [vmem:[%s7 + $0xc8] sm:$0xff]
      %v4910 = vld [vmem:[%s7 + $0xd0] sm:$0xff]
      %v4911 = vld [vmem:[%s7 + $0xd8] sm:$0xff]
      %v4912 = vld [vmem:[%s7 + $0xe0] sm:$0xff]
      %v4913 = vld [vmem:[%s7 + $0xe8] sm:$0xff]
      %v4914 = vld [vmem:[%s7 + $0xf0] sm:$0xff]
      %v4915 = vld [vmem:[%s7 + $0xf8] sm:$0xff]
      %v4916 = vld [vmem:[%s8] sm:$0x1]
      %v4918 = vlaneseq
      %v4919 = vshrl.u32 %v4918, 7
      %v4920 = vsub.s32 0, %v4919
      %v4921 = vrot.slane %v4916, %v4920
      %4923 = vmatprep.subr.mxu0 0.0
      %4924 = vmatpush1.msra.mxu0 %v4884
      %4925 = vmatprep.subr.mxu0 0.0
      %4926 = vmatpush1.msra.mxu0 %v4885
      %4927 = vmatprep.subr.mxu0 0.0
      %4928 = vmatpush1.msra.mxu0 %v4886
      %4929 = vmatprep.subr.mxu0 0.0
      %4930 = vmatpush1.msra.mxu0 %v4887
      %4931 = vmatprep.subr.mxu0 0.0
      %4932 = vmatpush1.msra.mxu0 %v4888
      %4933 = vmatprep.subr.mxu0 0.0
      %4934 = vmatpush1.msra.mxu0 %v4889
      %4935 = vmatprep.subr.mxu0 0.0
      %4936 = vmatpush1.msra.mxu0 %v4890
      %4937 = vmatprep.subr.mxu0 0.0
      %4938 = vmatpush1.msra.mxu0 %v4891
      %4939 = vmatprep.subr.mxu0 0.0
      %4940 = vmatpush1.msra.mxu0 %v4892
      %4941 = vmatprep.subr.mxu0 0.0
      %4942 = vmatpush1.msra.mxu0 %v4893
      %4943 = vmatprep.subr.mxu0 0.0
      %4944 = vmatpush1.msra.mxu0 %v4894
      %4945 = vmatprep.subr.mxu0 0.0
      %4946 = vmatpush1.msra.mxu0 %v4895
      %4947 = vmatprep.subr.mxu0 0.0
      %4948 = vmatpush1.msra.mxu0 %v4896
      %4949 = vmatprep.subr.mxu0 0.0
      %4950 = vmatpush1.msra.mxu0 %v4897
      %4951 = vmatprep.subr.mxu0 0.0
      %4952 = vmatpush1.msra.mxu0 %v4898
      %4953 = vmatprep.subr.mxu0 0.0
      %4954 = vmatpush1.msra.mxu0 %v4899
      %4955 = vmatprep.subr.mxu0 0.0
      %4956 = vmatpush1.msra.mxu0 %v4900
      %4957 = vmatprep.subr.mxu0 0.0
      %4958 = vmatpush1.msra.mxu0 %v4901
      %4959 = vmatprep.subr.mxu0 0.0
      %4960 = vmatpush1.msra.mxu0 %v4902
      %4961 = vmatprep.subr.mxu0 0.0
      %4962 = vmatpush1.msra.mxu0 %v4903
      %4963 = vmatprep.subr.mxu0 0.0
      %4964 = vmatpush1.msra.mxu0 %v4904
      %4965 = vmatprep.subr.mxu0 0.0
      %4966 = vmatpush1.msra.mxu0 %v4905
      %4967 = vmatprep.subr.mxu0 0.0
      %4968 = vmatpush1.msra.mxu0 %v4906
      %4969 = vmatprep.subr.mxu0 0.0
      %4970 = vmatpush1.msra.mxu0 %v4907
      %4971 = vmatprep.subr.mxu0 0.0
      %4972 = vmatpush1.msra.mxu0 %v4908
      %4973 = vmatprep.subr.mxu0 0.0
      %4974 = vmatpush1.msra.mxu0 %v4909
      %4975 = vmatprep.subr.mxu0 0.0
      %4976 = vmatpush1.msra.mxu0 %v4910
      %4977 = vmatprep.subr.mxu0 0.0
      %4978 = vmatpush1.msra.mxu0 %v4911
      %4979 = vmatprep.subr.mxu0 0.0
      %4980 = vmatpush1.msra.mxu0 %v4912
      %4981 = vmatprep.subr.mxu0 0.0
      %4982 = vmatpush1.msra.mxu0 %v4913
      %4983 = vmatprep.subr.mxu0 0.0
      %4984 = vmatpush1.msra.mxu0 %v4914
      %4985 = vmatprep.subr.mxu0 0.0
      %4986 = vmatpush1.msra.mxu0 %v4915
      %4987 = vmatprep.mubr.f32.mxu0 %v4757
      %4988 = vmatmul.mubr.f32.gmra.mrb[0].mxu0 %v4756
      %v4989 = vpop.f32.mrb[0].mxu0
      %v4990 = vadd.f32 %v4921, %v4989
      %v4991 = vpop.f32.mrb[0].mxu0
      %4992 = vmatprep.mubr.f32.mxu0 %v4759
      %4993 = vmatmul.mubr.f32.gmra.mrb[0].mxu0 %v4758
      %v4994 = vpop.f32.mrb[0].mxu0
      %v4995 = vadd.f32 %v4921, %v4994
      %v4996 = vpop.f32.mrb[0].mxu0
      %4997 = vmatprep.mubr.f32.mxu0 %v4761
      %4998 = vmatmul.mubr.f32.gmra.mrb[0].mxu0 %v4760
      %v4999 = vpop.f32.mrb[0].mxu0
      %v5000 = vadd.f32 %v4921, %v4999
      %v5001 = vpop.f32.mrb[0].mxu0
      %5002 = vmatprep.mubr.f32.mxu0 %v4763
      %5003 = vmatmul.mubr.f32.gmra.mrb[0].mxu0 %v4762
      %v5004 = vpop.f32.mrb[0].mxu0
      %v5005 = vadd.f32 %v4921, %v5004
      %v5006 = vpop.f32.mrb[0].mxu0
      %5007 = vmatprep.mubr.f32.mxu0 %v4765
      %5008 = vmatmul.mubr.f32.gmra.mrb[0].mxu0 %v4764
      %v5009 = vpop.f32.mrb[0].mxu0
      %v5010 = vadd.f32 %v4921, %v5009
      %v5011 = vpop.f32.mrb[0].mxu0
      %5012 = vmatprep.mubr.f32.mxu0 %v4767
      %5013 = vmatmul.mubr.f32.gmra.mrb[0].mxu0 %v4766
      %v5014 = vpop.f32.mrb[0].mxu0
      %v5015 = vadd.f32 %v4921, %v5014
      %v5016 = vpop.f32.mrb[0].mxu0
      %5017 = vmatprep.mubr.f32.mxu0 %v4769
      %5018 = vmatmul.mubr.f32.gmra.mrb[0].mxu0 %v4768
      %v5019 = vpop.f32.mrb[0].mxu0
      %v5020 = vadd.f32 %v4921, %v5019
      %v5021 = vpop.f32.mrb[0].mxu0
      %5022 = vmatprep.mubr.f32.mxu0 %v4771
      %5023 = vmatmul.mubr.f32.gmra.mrb[0].mxu0 %v4770
      %v5024 = vpop.f32.mrb[0].mxu0
      %v5025 = vadd.f32 %v4921, %v5024
      %v5026 = vpop.f32.mrb[0].mxu0
      %5027 = vmatprep.mubr.f32.mxu0 %v4773
      %5028 = vmatmul.mubr.f32.gmra.mrb[0].mxu0 %v4772
      %v5029 = vpop.f32.mrb[0].mxu0
      %v5030 = vadd.f32 %v4921, %v5029
      %v5031 = vpop.f32.mrb[0].mxu0
      %5032 = vmatprep.mubr.f32.mxu0 %v4775
      %5033 = vmatmul.mubr.f32.gmra.mrb[0].mxu0 %v4774
      %v5034 = vpop.f32.mrb[0].mxu0
      %v5035 = vadd.f32 %v4921, %v5034
      %v5036 = vpop.f32.mrb[0].mxu0
      %5037 = vmatprep.mubr.f32.mxu0 %v4777
      %5038 = vmatmul.mubr.f32.gmra.mrb[0].mxu0 %v4776
      %v5039 = vpop.f32.mrb[0].mxu0
      %v5040 = vadd.f32 %v4921, %v5039
      %v5041 = vpop.f32.mrb[0].mxu0
      %5042 = vmatprep.mubr.f32.mxu0 %v4779
      %5043 = vmatmul.mubr.f32.gmra.mrb[0].mxu0 %v4778
      %v5044 = vpop.f32.mrb[0].mxu0
      %v5045 = vadd.f32 %v4921, %v5044
      %v5046 = vpop.f32.mrb[0].mxu0
      %5047 = vmatprep.mubr.f32.mxu0 %v4781
      %5048 = vmatmul.mubr.f32.gmra.mrb[0].mxu0 %v4780
      %v5049 = vpop.f32.mrb[0].mxu0
      %v5050 = vadd.f32 %v4921, %v5049
      %v5051 = vpop.f32.mrb[0].mxu0
      %5052 = vmatprep.mubr.f32.mxu0 %v4783
      %5053 = vmatmul.mubr.f32.gmra.mrb[0].mxu0 %v4782
      %v5054 = vpop.f32.mrb[0].mxu0
      %v5055 = vadd.f32 %v4921, %v5054
      %v5056 = vpop.f32.mrb[0].mxu0
      %5057 = vmatprep.mubr.f32.mxu0 %v4785
      %5058 = vmatmul.mubr.f32.gmra.mrb[0].mxu0 %v4784
      %v5059 = vpop.f32.mrb[0].mxu0
      %v5060 = vadd.f32 %v4921, %v5059
      %v5061 = vpop.f32.mrb[0].mxu0
      %5062 = vmatprep.mubr.f32.mxu0 %v4787
      %5063 = vmatmul.mubr.f32.gmra.mrb[0].mxu0 %v4786
      %v5064 = vpop.f32.mrb[0].mxu0
      %v5065 = vadd.f32 %v4921, %v5064
      %v5066 = vpop.f32.mrb[0].mxu0
      %5067 = vmatprep.mubr.f32.mxu0 %v4789
      %5068 = vmatmul.mubr.f32.gmra.mrb[0].mxu0 %v4788
      %v5069 = vpop.f32.mrb[0].mxu0
      %v5070 = vadd.f32 %v4921, %v5069
      %v5071 = vpop.f32.mrb[0].mxu0
      %5072 = vmatprep.mubr.f32.mxu0 %v4791
      %5073 = vmatmul.mubr.f32.gmra.mrb[0].mxu0 %v4790
      %v5074 = vpop.f32.mrb[0].mxu0
      %v5075 = vadd.f32 %v4921, %v5074
      %v5076 = vpop.f32.mrb[0].mxu0
      %5077 = vmatprep.mubr.f32.mxu0 %v4793
      %5078 = vmatmul.mubr.f32.gmra.mrb[0].mxu0 %v4792
      %v5079 = vpop.f32.mrb[0].mxu0
      %v5080 = vadd.f32 %v4921, %v5079
      %v5081 = vpop.f32.mrb[0].mxu0
      %5082 = vmatprep.mubr.f32.mxu0 %v4795
      %5083 = vmatmul.mubr.f32.gmra.mrb[0].mxu0 %v4794
      %v5084 = vpop.f32.mrb[0].mxu0
      %v5085 = vadd.f32 %v4921, %v5084
      %v5086 = vpop.f32.mrb[0].mxu0
      %5087 = vmatprep.mubr.f32.mxu0 %v4797
      %5088 = vmatmul.mubr.f32.gmra.mrb[0].mxu0 %v4796
      %v5089 = vpop.f32.mrb[0].mxu0
      %v5090 = vadd.f32 %v4921, %v5089
      %v5091 = vpop.f32.mrb[0].mxu0
      %5092 = vmatprep.mubr.f32.mxu0 %v4799
      %5093 = vmatmul.mubr.f32.gmra.mrb[0].mxu0 %v4798
      %v5094 = vpop.f32.mrb[0].mxu0
      %v5095 = vadd.f32 %v4921, %v5094
      %v5096 = vpop.f32.mrb[0].mxu0
      %5097 = vmatprep.mubr.f32.mxu0 %v4801
      %5098 = vmatmul.mubr.f32.gmra.mrb[0].mxu0 %v4800
      %v5099 = vpop.f32.mrb[0].mxu0
      %v5100 = vadd.f32 %v4921, %v5099
      %v5101 = vpop.f32.mrb[0].mxu0
      %5102 = vmatprep.mubr.f32.mxu0 %v4803
      %5103 = vmatmul.mubr.f32.gmra.mrb[0].mxu0 %v4802
      %v5104 = vpop.f32.mrb[0].mxu0
      %v5105 = vadd.f32 %v4921, %v5104
      %v5106 = vpop.f32.mrb[0].mxu0
      %5107 = vmatprep.mubr.f32.mxu0 %v4805
      %5108 = vmatmul.mubr.f32.gmra.mrb[0].mxu0 %v4804
      %v5109 = vpop.f32.mrb[0].mxu0
      %v5110 = vadd.f32 %v4921, %v5109
      %v5111 = vpop.f32.mrb[0].mxu0
      %5112 = vmatprep.mubr.f32.mxu0 %v4807
      %5113 = vmatmul.mubr.f32.gmra.mrb[0].mxu0 %v4806
      %v5114 = vpop.f32.mrb[0].mxu0
      %v5115 = vadd.f32 %v4921, %v5114
      %v5116 = vpop.f32.mrb[0].mxu0
      %5117 = vmatprep.mubr.f32.mxu0 %v4809
      %5118 = vmatmul.mubr.f32.gmra.mrb[0].mxu0 %v4808
      %v5119 = vpop.f32.mrb[0].mxu0
      %v5120 = vadd.f32 %v4921, %v5119
      %v5121 = vpop.f32.mrb[0].mxu0
      %5122 = vmatprep.mubr.f32.mxu0 %v4811
      %5123 = vmatmul.mubr.f32.gmra.mrb[0].mxu0 %v4810
      %v5124 = vpop.f32.mrb[0].mxu0
      %v5125 = vadd.f32 %v4921, %v5124
      %v5126 = vpop.f32.mrb[0].mxu0
      %5127 = vmatprep.mubr.f32.mxu0 %v4813
      %5128 = vmatmul.mubr.f32.gmra.mrb[0].mxu0 %v4812
      %v5129 = vpop.f32.mrb[0].mxu0
      %v5130 = vadd.f32 %v4921, %v5129
      %v5131 = vpop.f32.mrb[0].mxu0
      %5132 = vmatprep.mubr.f32.mxu0 %v4815
      %5133 = vmatmul.mubr.f32.gmra.mrb[0].mxu0 %v4814
      %v5134 = vpop.f32.mrb[0].mxu0
      %v5135 = vadd.f32 %v4921, %v5134
      %v5136 = vpop.f32.mrb[0].mxu0
      %5137 = vmatprep.mubr.f32.mxu0 %v4817
      %5138 = vmatmul.mubr.f32.gmra.mrb[0].mxu0 %v4816
      %v5139 = vpop.f32.mrb[0].mxu0
      %v5140 = vadd.f32 %v4921, %v5139
      %v5141 = vpop.f32.mrb[0].mxu0
      %5142 = vmatprep.mubr.f32.mxu0 %v4819
      %5143 = vmatmul.mubr.f32.gmra.mrb[0].mxu0 %v4818
      %v5144 = vpop.f32.mrb[0].mxu0
      %v5145 = vadd.f32 %v4921, %v5144
      %v5146 = vpop.f32.mrb[0].mxu0
      %5147 = vmatprep.mubr.f32.mxu0 %v4821
      %5148 = vmatmul.mubr.f32.gmra.mrb[0].mxu0 %v4820
      %v5149 = vpop.f32.mrb[0].mxu0
      %v5150 = vadd.f32 %v4921, %v5149
      %v5151 = vpop.f32.mrb[0].mxu0
      %5152 = vmatprep.mubr.f32.mxu0 %v4823
      %5153 = vmatmul.mubr.f32.gmra.mrb[0].mxu0 %v4822
      %v5154 = vpop.f32.mrb[0].mxu0
      %v5155 = vadd.f32 %v4921, %v5154
      %v5156 = vpop.f32.mrb[0].mxu0
      %5157 = vmatprep.mubr.f32.mxu0 %v4825
      %5158 = vmatmul.mubr.f32.gmra.mrb[0].mxu0 %v4824
      %v5159 = vpop.f32.mrb[0].mxu0
      %v5160 = vadd.f32 %v4921, %v5159
      %v5161 = vpop.f32.mrb[0].mxu0
      %5162 = vmatprep.mubr.f32.mxu0 %v4827
      %5163 = vmatmul.mubr.f32.gmra.mrb[0].mxu0 %v4826
      %v5164 = vpop.f32.mrb[0].mxu0
      %v5165 = vadd.f32 %v4921, %v5164
      %v5166 = vpop.f32.mrb[0].mxu0
      %5167 = vmatprep.mubr.f32.mxu0 %v4829
      %5168 = vmatmul.mubr.f32.gmra.mrb[0].mxu0 %v4828
      %v5169 = vpop.f32.mrb[0].mxu0
      %v5170 = vadd.f32 %v4921, %v5169
      %v5171 = vpop.f32.mrb[0].mxu0
      %5172 = vmatprep.mubr.f32.mxu0 %v4831
      %5173 = vmatmul.mubr.f32.gmra.mrb[0].mxu0 %v4830
      %v5174 = vpop.f32.mrb[0].mxu0
      %v5175 = vadd.f32 %v4921, %v5174
      %v5176 = vpop.f32.mrb[0].mxu0
      %5177 = vmatprep.mubr.f32.mxu0 %v4833
      %5178 = vmatmul.mubr.f32.gmra.mrb[0].mxu0 %v4832
      %v5179 = vpop.f32.mrb[0].mxu0
      %v5180 = vadd.f32 %v4921, %v5179
      %v5181 = vpop.f32.mrb[0].mxu0
      %5182 = vmatprep.mubr.f32.mxu0 %v4835
      %5183 = vmatmul.mubr.f32.gmra.mrb[0].mxu0 %v4834
      %v5184 = vpop.f32.mrb[0].mxu0
      %v5185 = vadd.f32 %v4921, %v5184
      %v5186 = vpop.f32.mrb[0].mxu0
      %5187 = vmatprep.mubr.f32.mxu0 %v4837
      %5188 = vmatmul.mubr.f32.gmra.mrb[0].mxu0 %v4836
      %v5189 = vpop.f32.mrb[0].mxu0
      %v5190 = vadd.f32 %v4921, %v5189
      %v5191 = vpop.f32.mrb[0].mxu0
      %5192 = vmatprep.mubr.f32.mxu0 %v4839
      %5193 = vmatmul.mubr.f32.gmra.mrb[0].mxu0 %v4838
      %v5194 = vpop.f32.mrb[0].mxu0
      %v5195 = vadd.f32 %v4921, %v5194
      %v5196 = vpop.f32.mrb[0].mxu0
      %5197 = vmatprep.mubr.f32.mxu0 %v4841
      %5198 = vmatmul.mubr.f32.gmra.mrb[0].mxu0 %v4840
      %v5199 = vpop.f32.mrb[0].mxu0
      %v5200 = vadd.f32 %v4921, %v5199
      %v5201 = vpop.f32.mrb[0].mxu0
      %5202 = vmatprep.mubr.f32.mxu0 %v4843
      %5203 = vmatmul.mubr.f32.gmra.mrb[0].mxu0 %v4842
      %v5204 = vpop.f32.mrb[0].mxu0
      %v5205 = vadd.f32 %v4921, %v5204
      %v5206 = vpop.f32.mrb[0].mxu0
      %5207 = vmatprep.mubr.f32.mxu0 %v4845
      %5208 = vmatmul.mubr.f32.gmra.mrb[0].mxu0 %v4844
      %v5209 = vpop.f32.mrb[0].mxu0
      %v5210 = vadd.f32 %v4921, %v5209
      %v5211 = vpop.f32.mrb[0].mxu0
      %5212 = vmatprep.mubr.f32.mxu0 %v4847
      %5213 = vmatmul.mubr.f32.gmra.mrb[0].mxu0 %v4846
      %v5214 = vpop.f32.mrb[0].mxu0
      %v5215 = vadd.f32 %v4921, %v5214
      %v5216 = vpop.f32.mrb[0].mxu0
      %5217 = vmatprep.mubr.f32.mxu0 %v4849
      %5218 = vmatmul.mubr.f32.gmra.mrb[0].mxu0 %v4848
      %v5219 = vpop.f32.mrb[0].mxu0
      %v5220 = vadd.f32 %v4921, %v5219
      %v5221 = vpop.f32.mrb[0].mxu0
      %5222 = vmatprep.mubr.f32.mxu0 %v4851
      %5223 = vmatmul.mubr.f32.gmra.mrb[0].mxu0 %v4850
      %v5224 = vpop.f32.mrb[0].mxu0
      %v5225 = vadd.f32 %v4921, %v5224
      %v5226 = vpop.f32.mrb[0].mxu0
      %5227 = vmatprep.mubr.f32.mxu0 %v4853
      %5228 = vmatmul.mubr.f32.gmra.mrb[0].mxu0 %v4852
      %v5229 = vpop.f32.mrb[0].mxu0
      %v5230 = vadd.f32 %v4921, %v5229
      %v5231 = vpop.f32.mrb[0].mxu0
      %5232 = vmatprep.mubr.f32.mxu0 %v4855
      %5233 = vmatmul.mubr.f32.gmra.mrb[0].mxu0 %v4854
      %v5234 = vpop.f32.mrb[0].mxu0
      %v5235 = vadd.f32 %v4921, %v5234
      %v5236 = vpop.f32.mrb[0].mxu0
      %5237 = vmatprep.mubr.f32.mxu0 %v4857
      %5238 = vmatmul.mubr.f32.gmra.mrb[0].mxu0 %v4856
      %v5239 = vpop.f32.mrb[0].mxu0
      %v5240 = vadd.f32 %v4921, %v5239
      %v5241 = vpop.f32.mrb[0].mxu0
      %5242 = vmatprep.mubr.f32.mxu0 %v4859
      %5243 = vmatmul.mubr.f32.gmra.mrb[0].mxu0 %v4858
      %v5244 = vpop.f32.mrb[0].mxu0
      %v5245 = vadd.f32 %v4921, %v5244
      %v5246 = vpop.f32.mrb[0].mxu0
      %5247 = vmatprep.mubr.f32.mxu0 %v4861
      %5248 = vmatmul.mubr.f32.gmra.mrb[0].mxu0 %v4860
      %v5249 = vpop.f32.mrb[0].mxu0
      %v5250 = vadd.f32 %v4921, %v5249
      %v5251 = vpop.f32.mrb[0].mxu0
      %5252 = vmatprep.mubr.f32.mxu0 %v4863
      %5253 = vmatmul.mubr.f32.gmra.mrb[0].mxu0 %v4862
      %v5254 = vpop.f32.mrb[0].mxu0
      %v5255 = vadd.f32 %v4921, %v5254
      %v5256 = vpop.f32.mrb[0].mxu0
      %5257 = vmatprep.mubr.f32.mxu0 %v4865
      %5258 = vmatmul.mubr.f32.gmra.mrb[0].mxu0 %v4864
      %v5259 = vpop.f32.mrb[0].mxu0
      %v5260 = vadd.f32 %v4921, %v5259
      %v5261 = vpop.f32.mrb[0].mxu0
      %5262 = vmatprep.mubr.f32.mxu0 %v4867
      %5263 = vmatmul.mubr.f32.gmra.mrb[0].mxu0 %v4866
      %v5264 = vpop.f32.mrb[0].mxu0
      %v5265 = vadd.f32 %v4921, %v5264
      %v5266 = vpop.f32.mrb[0].mxu0
      %5267 = vmatprep.mubr.f32.mxu0 %v4869
      %5268 = vmatmul.mubr.f32.gmra.mrb[0].mxu0 %v4868
      %v5269 = vpop.f32.mrb[0].mxu0
      %v5270 = vadd.f32 %v4921, %v5269
      %v5271 = vpop.f32.mrb[0].mxu0
      %5272 = vmatprep.mubr.f32.mxu0 %v4871
      %5273 = vmatmul.mubr.f32.gmra.mrb[0].mxu0 %v4870
      %v5274 = vpop.f32.mrb[0].mxu0
      %v5275 = vadd.f32 %v4921, %v5274
      %v5276 = vpop.f32.mrb[0].mxu0
      %5277 = vmatprep.mubr.f32.mxu0 %v4873
      %5278 = vmatmul.mubr.f32.gmra.mrb[0].mxu0 %v4872
      %v5279 = vpop.f32.mrb[0].mxu0
      %v5280 = vadd.f32 %v4921, %v5279
      %v5281 = vpop.f32.mrb[0].mxu0
      %5282 = vmatprep.mubr.f32.mxu0 %v4875
      %5283 = vmatmul.mubr.f32.gmra.mrb[0].mxu0 %v4874
      %v5284 = vpop.f32.mrb[0].mxu0
      %v5285 = vadd.f32 %v4921, %v5284
      %v5286 = vpop.f32.mrb[0].mxu0
      %5287 = vmatprep.mubr.f32.mxu0 %v4877
      %5288 = vmatmul.mubr.f32.gmra.mrb[0].mxu0 %v4876
      %v5289 = vpop.f32.mrb[0].mxu0
      %v5290 = vadd.f32 %v4921, %v5289
      %v5291 = vpop.f32.mrb[0].mxu0
      %5292 = vmatprep.mubr.f32.mxu0 %v4879
      %5293 = vmatmul.mubr.f32.gmra.mrb[0].mxu0 %v4878
      %v5294 = vpop.f32.mrb[0].mxu0
      %v5295 = vadd.f32 %v4921, %v5294
      %v5296 = vpop.f32.mrb[0].mxu0
      %5297 = vmatprep.mubr.f32.mxu0 %v4881
      %5298 = vmatmul.mubr.f32.gmra.mrb[0].mxu0 %v4880
      %v5299 = vpop.f32.mrb[0].mxu0
      %v5300 = vadd.f32 %v4921, %v5299
      %v5301 = vpop.f32.mrb[0].mxu0
      %5302 = vmatprep.mubr.f32.mxu0 %v4883
      %5303 = vmatmul.mubr.f32.gmra.mrb[0].mxu0 %v4882
      %v5304 = vpop.f32.mrb[0].mxu0
      %v5305 = vadd.f32 %v4921, %v5304
      %v5306 = vpop.f32.mrb[0].mxu0
      %5307 = vdwg.mxu0
      %5308 = vst.msk [vmem:[%s403] sm:$0xff] %vm489, %v4990
      %5309 = vst.msk [vmem:[%s403 + $0x8] sm:$0xff] %vm489, %v4995
      %5310 = vst.msk [vmem:[%s403 + $0x10] sm:$0xff] %vm489, %v5000
      %5311 = vst.msk [vmem:[%s403 + $0x18] sm:$0xff] %vm489, %v5005
      %5312 = vst.msk [vmem:[%s403 + $0x20] sm:$0xff] %vm489, %v5010
      %5313 = vst.msk [vmem:[%s403 + $0x28] sm:$0xff] %vm489, %v5015
      %5314 = vst.msk [vmem:[%s403 + $0x30] sm:$0xff] %vm489, %v5020
      %5315 = vst.msk [vmem:[%s403 + $0x38] sm:$0xff] %vm489, %v5025
      %5316 = vst.msk [vmem:[%s403 + $0x40] sm:$0xff] %vm489, %v5030
      %5317 = vst.msk [vmem:[%s403 + $0x48] sm:$0xff] %vm489, %v5035
      %5318 = vst.msk [vmem:[%s403 + $0x50] sm:$0xff] %vm489, %v5040
      %5319 = vst.msk [vmem:[%s403 + $0x58] sm:$0xff] %vm489, %v5045
      %5320 = vst.msk [vmem:[%s403 + $0x60] sm:$0xff] %vm489, %v5050
      %5321 = vst.msk [vmem:[%s403 + $0x68] sm:$0xff] %vm489, %v5055
      %5322 = vst.msk [vmem:[%s403 + $0x70] sm:$0xff] %vm489, %v5060
      %5323 = vst.msk [vmem:[%s403 + $0x78] sm:$0xff] %vm489, %v5065
      %5324 = vst.msk [vmem:[%s403 + $0x80] sm:$0xff] %vm489, %v5070
      %5325 = vst.msk [vmem:[%s403 + $0x88] sm:$0xff] %vm489, %v5075
      %5326 = vst.msk [vmem:[%s403 + $0x90] sm:$0xff] %vm489, %v5080
      %5327 = vst.msk [vmem:[%s403 + $0x98] sm:$0xff] %vm489, %v5085
      %5328 = vst.msk [vmem:[%s403 + $0xa0] sm:$0xff] %vm489, %v5090
      %5329 = vst.msk [vmem:[%s403 + $0xa8] sm:$0xff] %vm489, %v5095
      %5330 = vst.msk [vmem:[%s403 + $0xb0] sm:$0xff] %vm489, %v5100
      %5331 = vst.msk [vmem:[%s403 + $0xb8] sm:$0xff] %vm489, %v5105
      %5332 = vst.msk [vmem:[%s403 + $0xc0] sm:$0xff] %vm489, %v5110
      %5333 = vst.msk [vmem:[%s403 + $0xc8] sm:$0xff] %vm489, %v5115
      %5334 = vst.msk [vmem:[%s403 + $0xd0] sm:$0xff] %vm489, %v5120
      %5335 = vst.msk [vmem:[%s403 + $0xd8] sm:$0xff] %vm489, %v5125
      %5336 = vst.msk [vmem:[%s403 + $0xe0] sm:$0xff] %vm489, %v5130
      %5337 = vst.msk [vmem:[%s403 + $0xe8] sm:$0xff] %vm489, %v5135
      %5338 = vst.msk [vmem:[%s403 + $0xf0] sm:$0xff] %vm489, %v5140
      %5339 = vst.msk [vmem:[%s403 + $0xf8] sm:$0xff] %vm489, %v5145
      %5340 = vst.msk [vmem:[%s403 + $0x100] sm:$0xff] %vm489, %v5150
      %5341 = vst.msk [vmem:[%s403 + $0x108] sm:$0xff] %vm489, %v5155
      %5342 = vst.msk [vmem:[%s403 + $0x110] sm:$0xff] %vm489, %v5160
      %5343 = vst.msk [vmem:[%s403 + $0x118] sm:$0xff] %vm489, %v5165
      %5344 = vst.msk [vmem:[%s403 + $0x120] sm:$0xff] %vm489, %v5170
      %5345 = vst.msk [vmem:[%s403 + $0x128] sm:$0xff] %vm489, %v5175
      %5346 = vst.msk [vmem:[%s403 + $0x130] sm:$0xff] %vm489, %v5180
      %5347 = vst.msk [vmem:[%s403 + $0x138] sm:$0xff] %vm489, %v5185
      %5348 = vst.msk [vmem:[%s403 + $0x140] sm:$0xff] %vm489, %v5190
      %5349 = vst.msk [vmem:[%s403 + $0x148] sm:$0xff] %vm489, %v5195
      %5350 = vst.msk [vmem:[%s403 + $0x150] sm:$0xff] %vm489, %v5200
      %5351 = vst.msk [vmem:[%s403 + $0x158] sm:$0xff] %vm489, %v5205
      %5352 = vst.msk [vmem:[%s403 + $0x160] sm:$0xff] %vm489, %v5210
      %5353 = vst.msk [vmem:[%s403 + $0x168] sm:$0xff] %vm489, %v5215
      %5354 = vst.msk [vmem:[%s403 + $0x170] sm:$0xff] %vm489, %v5220
      %5355 = vst.msk [vmem:[%s403 + $0x178] sm:$0xff] %vm489, %v5225
      %5356 = vst.msk [vmem:[%s403 + $0x180] sm:$0xff] %vm489, %v5230
      %5357 = vst.msk [vmem:[%s403 + $0x188] sm:$0xff] %vm489, %v5235
      %5358 = vst.msk [vmem:[%s403 + $0x190] sm:$0xff] %vm489, %v5240
      %5359 = vst.msk [vmem:[%s403 + $0x198] sm:$0xff] %vm489, %v5245
      %5360 = vst.msk [vmem:[%s403 + $0x1a0] sm:$0xff] %vm489, %v5250
      %5361 = vst.msk [vmem:[%s403 + $0x1a8] sm:$0xff] %vm489, %v5255
      %5362 = vst.msk [vmem:[%s403 + $0x1b0] sm:$0xff] %vm489, %v5260
      %5363 = vst.msk [vmem:[%s403 + $0x1b8] sm:$0xff] %vm489, %v5265
      %5364 = vst.msk [vmem:[%s403 + $0x1c0] sm:$0xff] %vm489, %v5270
      %5365 = vst.msk [vmem:[%s403 + $0x1c8] sm:$0xff] %vm489, %v5275
      %5366 = vst.msk [vmem:[%s403 + $0x1d0] sm:$0xff] %vm489, %v5280
      %5367 = vst.msk [vmem:[%s403 + $0x1d8] sm:$0xff] %vm489, %v5285
      %5368 = vst.msk [vmem:[%s403 + $0x1e0] sm:$0xff] %vm489, %v5290
      %5369 = vst.msk [vmem:[%s403 + $0x1e8] sm:$0xff] %vm489, %v5295
      %5370 = vst.msk [vmem:[%s403 + $0x1f0] sm:$0xff] %vm489, %v5300
      %5371 = vst.msk [vmem:[%s403 + $0x1f8] sm:$0xff] %vm489, %v5305
      %vm5372 = vcmask 7168
      %5373 = vst.msk [vmem:[%s409] sm:$0xff] %vm5372, %v3491
      %5374 = vst.msk [vmem:[%s409 + $0x8] sm:$0xff] %vm5372, %v3507
      %5375 = vst.msk [vmem:[%s409 + $0x10] sm:$0xff] %vm5372, %v3523
      %5376 = vst.msk [vmem:[%s409 + $0x18] sm:$0xff] %vm5372, %v3539
      %5377 = vst.msk [vmem:[%s409 + $0x20] sm:$0xff] %vm5372, %v3555
      %5378 = vst.msk [vmem:[%s409 + $0x28] sm:$0xff] %vm5372, %v3571
      %5379 = vst.msk [vmem:[%s409 + $0x30] sm:$0xff] %vm5372, %v3587
      %5380 = vst.msk [vmem:[%s409 + $0x38] sm:$0xff] %vm5372, %v3603
      %5381 = vst.msk [vmem:[%s409 + $0x40] sm:$0xff] %vm5372, %v3619
      %5382 = vst.msk [vmem:[%s409 + $0x48] sm:$0xff] %vm5372, %v3635
      %5383 = vst.msk [vmem:[%s409 + $0x50] sm:$0xff] %vm5372, %v3651
      %5384 = vst.msk [vmem:[%s409 + $0x58] sm:$0xff] %vm5372, %v3667
      %5385 = vst.msk [vmem:[%s409 + $0x60] sm:$0xff] %vm5372, %v3683
      %5386 = vst.msk [vmem:[%s409 + $0x68] sm:$0xff] %vm5372, %v3699
      %5387 = vst.msk [vmem:[%s409 + $0x70] sm:$0xff] %vm5372, %v3715
      %5388 = vst.msk [vmem:[%s409 + $0x78] sm:$0xff] %vm5372, %v3731
      %5389 = vst.msk [vmem:[%s409 + $0x80] sm:$0xff] %vm5372, %v3747
      %5390 = vst.msk [vmem:[%s409 + $0x88] sm:$0xff] %vm5372, %v3763
      %5391 = vst.msk [vmem:[%s409 + $0x90] sm:$0xff] %vm5372, %v3779
      %5392 = vst.msk [vmem:[%s409 + $0x98] sm:$0xff] %vm5372, %v3795
      %5393 = vst.msk [vmem:[%s409 + $0xa0] sm:$0xff] %vm5372, %v3811
      %5394 = vst.msk [vmem:[%s409 + $0xa8] sm:$0xff] %vm5372, %v3827
      %5395 = vst.msk [vmem:[%s409 + $0xb0] sm:$0xff] %vm5372, %v3843
      %5396 = vst.msk [vmem:[%s409 + $0xb8] sm:$0xff] %vm5372, %v3859
      %5397 = vst.msk [vmem:[%s409 + $0xc0] sm:$0xff] %vm5372, %v3875
      %5398 = vst.msk [vmem:[%s409 + $0xc8] sm:$0xff] %vm5372, %v3891
      %5399 = vst.msk [vmem:[%s409 + $0xd0] sm:$0xff] %vm5372, %v3907
      %5400 = vst.msk [vmem:[%s409 + $0xd8] sm:$0xff] %vm5372, %v3923
      %5401 = vst.msk [vmem:[%s409 + $0xe0] sm:$0xff] %vm5372, %v3939
      %5402 = vst.msk [vmem:[%s409 + $0xe8] sm:$0xff] %vm5372, %v3955
      %5403 = vst.msk [vmem:[%s409 + $0xf0] sm:$0xff] %vm5372, %v3971
      %5404 = vst.msk [vmem:[%s409 + $0xf8] sm:$0xff] %vm5372, %v3987
      %5405 = vst.msk [vmem:[%s409 + $0x100] sm:$0xff] %vm5372, %v4003
      %5406 = vst.msk [vmem:[%s409 + $0x108] sm:$0xff] %vm5372, %v4019
      %5407 = vst.msk [vmem:[%s409 + $0x110] sm:$0xff] %vm5372, %v4035
      %5408 = vst.msk [vmem:[%s409 + $0x118] sm:$0xff] %vm5372, %v4051
      %5409 = vst.msk [vmem:[%s409 + $0x120] sm:$0xff] %vm5372, %v4067
      %5410 = vst.msk [vmem:[%s409 + $0x128] sm:$0xff] %vm5372, %v4083
      %5411 = vst.msk [vmem:[%s409 + $0x130] sm:$0xff] %vm5372, %v4099
      %5412 = vst.msk [vmem:[%s409 + $0x138] sm:$0xff] %vm5372, %v4115
      %5413 = vst.msk [vmem:[%s409 + $0x140] sm:$0xff] %vm5372, %v4131
      %5414 = vst.msk [vmem:[%s409 + $0x148] sm:$0xff] %vm5372, %v4147
      %5415 = vst.msk [vmem:[%s409 + $0x150] sm:$0xff] %vm5372, %v4163
      %5416 = vst.msk [vmem:[%s409 + $0x158] sm:$0xff] %vm5372, %v4179
      %5417 = vst.msk [vmem:[%s409 + $0x160] sm:$0xff] %vm5372, %v4195
      %5418 = vst.msk [vmem:[%s409 + $0x168] sm:$0xff] %vm5372, %v4211
      %5419 = vst.msk [vmem:[%s409 + $0x170] sm:$0xff] %vm5372, %v4227
      %5420 = vst.msk [vmem:[%s409 + $0x178] sm:$0xff] %vm5372, %v4243
      %5421 = vst.msk [vmem:[%s409 + $0x180] sm:$0xff] %vm5372, %v4259
      %5422 = vst.msk [vmem:[%s409 + $0x188] sm:$0xff] %vm5372, %v4275
      %5423 = vst.msk [vmem:[%s409 + $0x190] sm:$0xff] %vm5372, %v4291
      %5424 = vst.msk [vmem:[%s409 + $0x198] sm:$0xff] %vm5372, %v4307
      %5425 = vst.msk [vmem:[%s409 + $0x1a0] sm:$0xff] %vm5372, %v4323
      %5426 = vst.msk [vmem:[%s409 + $0x1a8] sm:$0xff] %vm5372, %v4339
      %5427 = vst.msk [vmem:[%s409 + $0x1b0] sm:$0xff] %vm5372, %v4355
      %5428 = vst.msk [vmem:[%s409 + $0x1b8] sm:$0xff] %vm5372, %v4371
      %5429 = vst.msk [vmem:[%s409 + $0x1c0] sm:$0xff] %vm5372, %v4387
      %5430 = vst.msk [vmem:[%s409 + $0x1c8] sm:$0xff] %vm5372, %v4403
      %5431 = vst.msk [vmem:[%s409 + $0x1d0] sm:$0xff] %vm5372, %v4419
      %5432 = vst.msk [vmem:[%s409 + $0x1d8] sm:$0xff] %vm5372, %v4435
      %5433 = vst.msk [vmem:[%s409 + $0x1e0] sm:$0xff] %vm5372, %v4451
      %5434 = vst.msk [vmem:[%s409 + $0x1e8] sm:$0xff] %vm5372, %v4467
      %5435 = vst.msk [vmem:[%s409 + $0x1f0] sm:$0xff] %vm5372, %v4483
      %5436 = vst.msk [vmem:[%s409 + $0x1f8] sm:$0xff] %vm5372, %v4499
      %v5437 = vmax.f32 %v3027, 0.0
      %v5438 = vmax.f32 %v3030, 0.0
      %v5439 = vmax.f32 %v3033, 0.0
      %v5440 = vmax.f32 %v3036, 0.0
      %v5441 = vmax.f32 %v3039, 0.0
      %v5442 = vmax.f32 %v3042, 0.0
      %v5443 = vmax.f32 %v3045, 0.0
      %v5444 = vmax.f32 %v3048, 0.0
      %v5445 = vmax.f32 %v3051, 0.0
      %v5446 = vmax.f32 %v3054, 0.0
      %v5447 = vmax.f32 %v3057, 0.0
      %v5448 = vmax.f32 %v3060, 0.0
      %v5449 = vmax.f32 %v3063, 0.0
      %v5450 = vmax.f32 %v3066, 0.0
      %v5451 = vmax.f32 %v3069, 0.0
      %v5452 = vmax.f32 %v3072, 0.0
      %v5453 = vmax.f32 %v3075, 0.0
      %v5454 = vmax.f32 %v3078, 0.0
      %v5455 = vmax.f32 %v3081, 0.0
      %v5456 = vmax.f32 %v3084, 0.0
      %v5457 = vmax.f32 %v3087, 0.0
      %v5458 = vmax.f32 %v3090, 0.0
      %v5459 = vmax.f32 %v3093, 0.0
      %v5460 = vmax.f32 %v3096, 0.0
      %v5461 = vmax.f32 %v3099, 0.0
      %v5462 = vmax.f32 %v3102, 0.0
      %v5463 = vmax.f32 %v3105, 0.0
      %v5464 = vmax.f32 %v3108, 0.0
      %v5465 = vmax.f32 %v3111, 0.0
      %v5466 = vmax.f32 %v3114, 0.0
      %v5467 = vmax.f32 %v3117, 0.0
      %v5468 = vmax.f32 %v3120, 0.0
      %v5469 = vmax.f32 %v3123, 0.0
      %v5470 = vmax.f32 %v3126, 0.0
      %v5471 = vmax.f32 %v3129, 0.0
      %v5472 = vmax.f32 %v3132, 0.0
      %v5473 = vmax.f32 %v3135, 0.0
      %v5474 = vmax.f32 %v3138, 0.0
      %v5475 = vmax.f32 %v3141, 0.0
      %v5476 = vmax.f32 %v3144, 0.0
      %v5477 = vmax.f32 %v3147, 0.0
      %v5478 = vmax.f32 %v3150, 0.0
      %v5479 = vmax.f32 %v3153, 0.0
      %v5480 = vmax.f32 %v3156, 0.0
      %v5481 = vmax.f32 %v3159, 0.0
      %v5482 = vmax.f32 %v3162, 0.0
      %v5483 = vmax.f32 %v3165, 0.0
      %v5484 = vmax.f32 %v3168, 0.0
      %v5485 = vmax.f32 %v3171, 0.0
      %v5486 = vmax.f32 %v3174, 0.0
      %v5487 = vmax.f32 %v3177, 0.0
      %v5488 = vmax.f32 %v3180, 0.0
      %v5489 = vmax.f32 %v3183, 0.0
      %v5490 = vmax.f32 %v3186, 0.0
      %v5491 = vmax.f32 %v3189, 0.0
      %v5492 = vmax.f32 %v3192, 0.0
      %v5493 = vmax.f32 %v3195, 0.0
      %v5494 = vmax.f32 %v3198, 0.0
      %v5495 = vmax.f32 %v3201, 0.0
      %v5496 = vmax.f32 %v3204, 0.0
      %v5497 = vmax.f32 %v3207, 0.0
      %v5498 = vmax.f32 %v3210, 0.0
      %v5499 = vmax.f32 %v3213, 0.0
      %v5500 = vmax.f32 %v3216, 0.0
      %5501 = vst.msk [vmem:[%s415] sm:$0xff] %vm5372, %v5437
      %5502 = vst.msk [vmem:[%s415 + $0x8] sm:$0xff] %vm5372, %v5438
      %5503 = vst.msk [vmem:[%s415 + $0x10] sm:$0xff] %vm5372, %v5439
      %5504 = vst.msk [vmem:[%s415 + $0x18] sm:$0xff] %vm5372, %v5440
      %5505 = vst.msk [vmem:[%s415 + $0x20] sm:$0xff] %vm5372, %v5441
      %5506 = vst.msk [vmem:[%s415 + $0x28] sm:$0xff] %vm5372, %v5442
      %5507 = vst.msk [vmem:[%s415 + $0x30] sm:$0xff] %vm5372, %v5443
      %5508 = vst.msk [vmem:[%s415 + $0x38] sm:$0xff] %vm5372, %v5444
      %5509 = vst.msk [vmem:[%s415 + $0x40] sm:$0xff] %vm5372, %v5445
      %5510 = vst.msk [vmem:[%s415 + $0x48] sm:$0xff] %vm5372, %v5446
      %5511 = vst.msk [vmem:[%s415 + $0x50] sm:$0xff] %vm5372, %v5447
      %5512 = vst.msk [vmem:[%s415 + $0x58] sm:$0xff] %vm5372, %v5448
      %5513 = vst.msk [vmem:[%s415 + $0x60] sm:$0xff] %vm5372, %v5449
      %5514 = vst.msk [vmem:[%s415 + $0x68] sm:$0xff] %vm5372, %v5450
      %5515 = vst.msk [vmem:[%s415 + $0x70] sm:$0xff] %vm5372, %v5451
      %5516 = vst.msk [vmem:[%s415 + $0x78] sm:$0xff] %vm5372, %v5452
      %5517 = vst.msk [vmem:[%s415 + $0x80] sm:$0xff] %vm5372, %v5453
      %5518 = vst.msk [vmem:[%s415 + $0x88] sm:$0xff] %vm5372, %v5454
      %5519 = vst.msk [vmem:[%s415 + $0x90] sm:$0xff] %vm5372, %v5455
      %5520 = vst.msk [vmem:[%s415 + $0x98] sm:$0xff] %vm5372, %v5456
      %5521 = vst.msk [vmem:[%s415 + $0xa0] sm:$0xff] %vm5372, %v5457
      %5522 = vst.msk [vmem:[%s415 + $0xa8] sm:$0xff] %vm5372, %v5458
      %5523 = vst.msk [vmem:[%s415 + $0xb0] sm:$0xff] %vm5372, %v5459
      %5524 = vst.msk [vmem:[%s415 + $0xb8] sm:$0xff] %vm5372, %v5460
      %5525 = vst.msk [vmem:[%s415 + $0xc0] sm:$0xff] %vm5372, %v5461
      %5526 = vst.msk [vmem:[%s415 + $0xc8] sm:$0xff] %vm5372, %v5462
      %5527 = vst.msk [vmem:[%s415 + $0xd0] sm:$0xff] %vm5372, %v5463
      %5528 = vst.msk [vmem:[%s415 + $0xd8] sm:$0xff] %vm5372, %v5464
      %5529 = vst.msk [vmem:[%s415 + $0xe0] sm:$0xff] %vm5372, %v5465
      %5530 = vst.msk [vmem:[%s415 + $0xe8] sm:$0xff] %vm5372, %v5466
      %5531 = vst.msk [vmem:[%s415 + $0xf0] sm:$0xff] %vm5372, %v5467
      %5532 = vst.msk [vmem:[%s415 + $0xf8] sm:$0xff] %vm5372, %v5468
      %5533 = vst.msk [vmem:[%s415 + $0x100] sm:$0xff] %vm5372, %v5469
      %5534 = vst.msk [vmem:[%s415 + $0x108] sm:$0xff] %vm5372, %v5470
      %5535 = vst.msk [vmem:[%s415 + $0x110] sm:$0xff] %vm5372, %v5471
      %5536 = vst.msk [vmem:[%s415 + $0x118] sm:$0xff] %vm5372, %v5472
      %5537 = vst.msk [vmem:[%s415 + $0x120] sm:$0xff] %vm5372, %v5473
      %5538 = vst.msk [vmem:[%s415 + $0x128] sm:$0xff] %vm5372, %v5474
      %5539 = vst.msk [vmem:[%s415 + $0x130] sm:$0xff] %vm5372, %v5475
      %5540 = vst.msk [vmem:[%s415 + $0x138] sm:$0xff] %vm5372, %v5476
      %5541 = vst.msk [vmem:[%s415 + $0x140] sm:$0xff] %vm5372, %v5477
      %5542 = vst.msk [vmem:[%s415 + $0x148] sm:$0xff] %vm5372, %v5478
      %5543 = vst.msk [vmem:[%s415 + $0x150] sm:$0xff] %vm5372, %v5479
      %5544 = vst.msk [vmem:[%s415 + $0x158] sm:$0xff] %vm5372, %v5480
      %5545 = vst.msk [vmem:[%s415 + $0x160] sm:$0xff] %vm5372, %v5481
      %5546 = vst.msk [vmem:[%s415 + $0x168] sm:$0xff] %vm5372, %v5482
      %5547 = vst.msk [vmem:[%s415 + $0x170] sm:$0xff] %vm5372, %v5483
      %5548 = vst.msk [vmem:[%s415 + $0x178] sm:$0xff] %vm5372, %v5484
      %5549 = vst.msk [vmem:[%s415 + $0x180] sm:$0xff] %vm5372, %v5485
      %5550 = vst.msk [vmem:[%s415 + $0x188] sm:$0xff] %vm5372, %v5486
      %5551 = vst.msk [vmem:[%s415 + $0x190] sm:$0xff] %vm5372, %v5487
      %5552 = vst.msk [vmem:[%s415 + $0x198] sm:$0xff] %vm5372, %v5488
      %5553 = vst.msk [vmem:[%s415 + $0x1a0] sm:$0xff] %vm5372, %v5489
      %5554 = vst.msk [vmem:[%s415 + $0x1a8] sm:$0xff] %vm5372, %v5490
      %5555 = vst.msk [vmem:[%s415 + $0x1b0] sm:$0xff] %vm5372, %v5491
      %5556 = vst.msk [vmem:[%s415 + $0x1b8] sm:$0xff] %vm5372, %v5492
      %5557 = vst.msk [vmem:[%s415 + $0x1c0] sm:$0xff] %vm5372, %v5493
      %5558 = vst.msk [vmem:[%s415 + $0x1c8] sm:$0xff] %vm5372, %v5494
      %5559 = vst.msk [vmem:[%s415 + $0x1d0] sm:$0xff] %vm5372, %v5495
      %5560 = vst.msk [vmem:[%s415 + $0x1d8] sm:$0xff] %vm5372, %v5496
      %5561 = vst.msk [vmem:[%s415 + $0x1e0] sm:$0xff] %vm5372, %v5497
      %5562 = vst.msk [vmem:[%s415 + $0x1e8] sm:$0xff] %vm5372, %v5498
      %5563 = vst.msk [vmem:[%s415 + $0x1f0] sm:$0xff] %vm5372, %v5499
      %5564 = vst.msk [vmem:[%s415 + $0x1f8] sm:$0xff] %vm5372, %v5500
      %s5565 = smul.u32 64, %s23
      %p5566 = scmp.lt.s32.totalorder %s5565, 127
      %s5567 = scalar_select %p5566, %s5565, 127
      %s5568 = smul.addr %s5567, 8
      %s5569 = scalar_lea.vmem %s9, %s5568
      %s5570 = smul.u32 64, %s23
      %p5571 = scmp.lt.s32.totalorder %s5570, 127
      %s5572 = scalar_select %p5571, %s5570, 127
      %s5573 = smul.addr %s5572, 8
      %s5574 = scalar_lea.vmem %s10, %s5573
      %s5575 = smul.u32 64, %s23
      %p5576 = scmp.lt.s32.totalorder %s5575, 127
      %s5577 = scalar_select %p5576, %s5575, 127
      %s5578 = smul.addr %s5577, 8
      %s5579 = scalar_lea.vmem %s11, %s5578
      // Predicated region
      $region57: #{vqgan_forward.1} parent=55 // pred_check
        %p5580 = pneg %p235
      $region58: #{vqgan_forward.1} parent=55 // pred_check_branch
        %5582 = sbr.rel (%p5580) target = $region60
      $region59: #{vqgan_forward.1} parent=55 // pred_region
        %s5583 = smul.u32 64, %s23
      $region60: #{vqgan_forward.1} parent=55 // pred_fallthru
        _
      // Predicated region
      $region61: #{vqgan_forward.1} parent=55 // pred_check
        %p5584 = pneg %p261
      $region62: #{vqgan_forward.1} parent=55 // pred_check_branch
        %5586 = sbr.rel (%p5584) target = $region64
      $region63: #{vqgan_forward.1} parent=55 // pred_region
        %s5587 = smul.u32 64, %s23
      $region64: #{vqgan_forward.1} parent=55 // pred_fallthru
        _
      // Predicated region
      $region65: #{vqgan_forward.1} parent=55 // pred_check
        %p5588 = pneg %p287
      $region66: #{vqgan_forward.1} parent=55 // pred_check_branch
        %5590 = sbr.rel (%p5588) target = $region68
      $region67: #{vqgan_forward.1} parent=55 // pred_region
        %s5591 = smul.u32 64, %s23
      $region68: #{vqgan_forward.1} parent=55 // pred_fallthru
        _
    $region56: #{vqgan_forward.1} parent=5 // pred_fallthru
      _
    %p5592 = scmp.le.s32.totalorder 2, %s18
    // Predicated region
    $region69: #{vqgan_forward.1} parent=5 // pred_check
      %p5593 = pneg %p5592
    $region70: #{vqgan_forward.1} parent=5 // pred_check_branch
      %5595 = sbr.rel (%p5593) target = $region72
    $region71: #{vqgan_forward.1} parent=5 // pred_region
      %s5596 = ssub.s32 %s18, 2
      // Predicated region
      $region73: #{vqgan_forward.1} parent=71 // pred_check
        %p5597 = pneg %p241
      $region74: #{vqgan_forward.1} parent=71 // pred_check_branch
        %5599 = sbr.rel (%p5597) target = $region76
      $region75: #{vqgan_forward.1} parent=71 // pred_region
        %s5600 = smul.u32 64, %s24
        %p5601 = scmp.lt.s32.totalorder %s5600, 127
        %s5602 = scalar_select %p5601, %s5600, 127
        %s5603 = smul.addr %s5602, 8
        %s5604 = scalar_lea.vmem %s9, %s5603
      $region76: #{vqgan_forward.1} parent=71 // pred_fallthru
        _
      // Predicated region
      $region77: #{vqgan_forward.1} parent=71 // pred_check
        %p5605 = pneg %p267
      $region78: #{vqgan_forward.1} parent=71 // pred_check_branch
        %5607 = sbr.rel (%p5605) target = $region80
      $region79: #{vqgan_forward.1} parent=71 // pred_region
        %s5608 = smul.u32 64, %s24
        %p5609 = scmp.lt.s32.totalorder %s5608, 127
        %s5610 = scalar_select %p5609, %s5608, 127
        %s5611 = smul.addr %s5610, 8
        %s5612 = scalar_lea.vmem %s10, %s5611
      $region80: #{vqgan_forward.1} parent=71 // pred_fallthru
        _
      // Predicated region
      $region81: #{vqgan_forward.1} parent=71 // pred_check
        %p5613 = pneg %p293
      $region82: #{vqgan_forward.1} parent=71 // pred_check_branch
        %5615 = sbr.rel (%p5613) target = $region84
      $region83: #{vqgan_forward.1} parent=71 // pred_region
        %s5616 = smul.u32 64, %s24
        %p5617 = scmp.lt.s32.totalorder %s5616, 127
        %s5618 = scalar_select %p5617, %s5616, 127
        %s5619 = smul.addr %s5618, 8
        %s5620 = scalar_lea.vmem %s11, %s5619
      $region84: #{vqgan_forward.1} parent=71 // pred_fallthru
        _
    $region72: #{vqgan_forward.1} parent=5 // pred_fallthru
      _
  $region6: #{vqgan_forward.1} parent=0 // loop_footer
    %s22 = sadd.s32 1, %s18
  $region7: #{vqgan_forward.1} parent=0 // loop_footer_branch
    %17 = sbr.rel target = $region3
  $region8: #{vqgan_forward.1} parent=0 // loop_exit
    _

</llo_original>
